<compile_context>
chip_gen: v6e
topology: v6e:2x2x1
jax: 0.10.0
libtpu: 0.0.40
codegen_flags: <defaults>
</compile_context>

<pallas_src>
import functools

import jax
import jax.numpy as jnp
from jax.experimental import pallas as pl
from jax.experimental.pallas import tpu as pltpu

EPS = 1e-5
_VMEM_LIMIT_BYTES = 32 * 1024 * 1024  # safe on all generations (<= v7x scoped default)


def _bn_add_fused_kernel(x_ref, r_ref, g_ref, b_ref, o_ref, *, inv_m):
    # x_ref, r_ref, o_ref: (N, TC, HW) blocks; g_ref, b_ref: (1, TC, 1) blocks.
    x = x_ref[...].astype(jnp.float32)                               # (N, TC, HW)
    mean = jnp.sum(x, axis=(0, 2), keepdims=True) * inv_m            # (1, TC, 1)
    xc = x - mean
    var = jnp.sum(xc * xc, axis=(0, 2), keepdims=True) * inv_m       # biased var
    a = g_ref[...] * jax.lax.rsqrt(var + EPS)                        # (1, TC, 1)
    r = r_ref[...].astype(jnp.float32)
    o_ref[...] = (xc * a + (b_ref[...] + r)).astype(o_ref.dtype)


@functools.partial(jax.jit, static_argnames=("tc",))
def batchnorm_add(x139, x132, gamma, beta, *, tc=256):
    """x139, x132: NCHW float32. gamma, beta: (C,). Returns NCHW float32."""
    n, c, h, w = x139.shape
    hw = h * w
    tc = min(tc, c)
    assert c % tc == 0 and tc % 8 == 0, "channel tile must divide C and be a multiple of 8"
    inv_m = 1.0 / float(n * hw)  # reduction size per channel

    # Native layout, no transposes: (N, C, H, W) -> (N, C, HW) is a free reshape.
    x3 = x139.reshape(n, c, hw)
    r3 = x132.reshape(n, c, hw)
    g3 = gamma.reshape(1, c, 1).astype(jnp.float32)
    b3 = beta.reshape(1, c, 1).astype(jnp.float32)

    kernel = functools.partial(_bn_add_fused_kernel, inv_m=inv_m)

    out3 = pl.pallas_call(
        kernel,
        out_shape=jax.ShapeDtypeStruct((n, c, hw), x139.dtype),
        grid_spec=pltpu.PrefetchScalarGridSpec(
            num_scalar_prefetch=0,
            grid=(c // tc,),  # pure parallel over channel tiles (megacore splits on v7x)
            in_specs=[
                pl.BlockSpec((n, tc, hw), lambda j: (0, j, 0)),
                pl.BlockSpec((n, tc, hw), lambda j: (0, j, 0)),
                pl.BlockSpec((1, tc, 1), lambda j: (0, j, 0)),
                pl.BlockSpec((1, tc, 1), lambda j: (0, j, 0)),
            ],
            out_specs=pl.BlockSpec((n, tc, hw), lambda j: (0, j, 0)),
        ),
        compiler_params=pltpu.CompilerParams(
            dimension_semantics=("parallel",),
            vmem_limit_bytes=_VMEM_LIMIT_BYTES,
        ),
    )(x3, r3, g3, b3)

    return out3.reshape(n, c, h, w)


def _reference(x139, x132, gamma, beta):
    mean = jnp.mean(x139, axis=(0, 2, 3), keepdims=True)
    var = jnp.var(x139, axis=(0, 2, 3), keepdims=True)  # biased, like torch BN training mode
    y = (x139 - mean) * jax.lax.rsqrt(var + EPS)
    y = y * gamma.reshape(1, -1, 1, 1) + beta.reshape(1, -1, 1, 1)
    return y + x132


if __name__ == "__main__":
    # The module's actual shapes are already small: (1, 1024, 28, 28).
    N, C, H, W = 1, 1024, 28, 28

    key = jax.random.PRNGKey(0)
    k1, k2, k3, k4 = jax.random.split(key, 4)
    x139 = jax.random.normal(k1, (N, C, H, W), dtype=jnp.float32)
    x132 = jax.random.normal(k2, (N, C, H, W), dtype=jnp.float32)
    # Non-trivial affine params so the gamma/beta path is exercised.
    gamma = 1.0 + 0.1 * jax.random.normal(k3, (C,), dtype=jnp.float32)
    beta = 0.1 * jax.random.normal(k4, (C,), dtype=jnp.float32)

    out = jax.block_until_ready(batchnorm_add(x139, x132, gamma, beta))

    ref = _reference(x139, x132, gamma, beta)
    assert out.shape == (N, C, H, W)
    err = float(jnp.max(jnp.abs(out - ref)))
    assert err < 2e-4, f"max abs error {err}"

    print("KERNEL_OK")
</pallas_src>

<mosaic_0001>
module attributes {stable_mosaic.version = 11 : i64} {
  func.func @_bn_add_fused_kernel(%arg0: i32, %arg1: memref<1x256x784xf32, #tpu.memory_space<vmem>>, %arg2: memref<1x256x784xf32, #tpu.memory_space<vmem>>, %arg3: memref<1x256x1xf32, #tpu.memory_space<vmem>>, %arg4: memref<1x256x1xf32, #tpu.memory_space<vmem>>, %arg5: memref<1x256x784xf32, #tpu.memory_space<vmem>>) attributes {dimension_semantics = [#tpu.dimension_semantics<parallel>], iteration_bounds = array<i64: 4>, scalar_prefetch = 0 : i64, scratch_operands = 0 : i64, tpu.core_type = #tpu.core_type<tc>, window_params = [{transform_indices = @transform_0, window_bounds = array<i64: 1, 256, 784>}, {transform_indices = @transform_1, window_bounds = array<i64: 1, 256, 784>}, {transform_indices = @transform_2, window_bounds = array<i64: 1, 256, 1>}, {transform_indices = @transform_3, window_bounds = array<i64: 1, 256, 1>}, {transform_indices = @transform_4, window_bounds = array<i64: 1, 256, 784>}]} {
    %c0 = arith.constant 0 : index
    %c0_0 = arith.constant 0 : index
    %c0_1 = arith.constant 0 : index
    %0 = vector.load %arg1[%c0, %c0_0, %c0_1] : memref<1x256x784xf32, #tpu.memory_space<vmem>>, vector<1x256x784xf32>
    %cst = arith.constant dense<0.000000e+00> : vector<256xf32>
    %1 = vector.multi_reduction <add>, %0, %cst [0, 2] : vector<1x256x784xf32> to vector<256xf32>
    %2 = vector.shape_cast %1 : vector<256xf32> to vector<1x256x1xf32>
    %cst_2 = arith.constant 0.00127551018 : f32
    %3 = vector.broadcast %cst_2 : f32 to vector<1x256x1xf32>
    %4 = arith.mulf %2, %3 : vector<1x256x1xf32>
    %5 = vector.broadcast %4 : vector<1x256x1xf32> to vector<1x256x784xf32>
    %6 = arith.subf %0, %5 : vector<1x256x784xf32>
    %7 = arith.mulf %6, %6 : vector<1x256x784xf32>
    %cst_3 = arith.constant dense<0.000000e+00> : vector<256xf32>
    %8 = vector.multi_reduction <add>, %7, %cst_3 [0, 2] : vector<1x256x784xf32> to vector<256xf32>
    %9 = vector.shape_cast %8 : vector<256xf32> to vector<1x256x1xf32>
    %cst_4 = arith.constant 0.00127551018 : f32
    %10 = vector.broadcast %cst_4 : f32 to vector<1x256x1xf32>
    %11 = arith.mulf %9, %10 : vector<1x256x1xf32>
    %c0_5 = arith.constant 0 : index
    %c0_6 = arith.constant 0 : index
    %c0_7 = arith.constant 0 : index
    %12 = vector.load %arg3[%c0_5, %c0_6, %c0_7] : memref<1x256x1xf32, #tpu.memory_space<vmem>>, vector<1x256x1xf32>
    %cst_8 = arith.constant 9.99999974E-6 : f32
    %13 = vector.broadcast %cst_8 : f32 to vector<1x256x1xf32>
    %14 = arith.addf %11, %13 : vector<1x256x1xf32>
    %15 = math.rsqrt %14 : vector<1x256x1xf32>
    %16 = arith.mulf %12, %15 : vector<1x256x1xf32>
    %c0_9 = arith.constant 0 : index
    %c0_10 = arith.constant 0 : index
    %c0_11 = arith.constant 0 : index
    %17 = vector.load %arg2[%c0_9, %c0_10, %c0_11] : memref<1x256x784xf32, #tpu.memory_space<vmem>>, vector<1x256x784xf32>
    %18 = vector.broadcast %16 : vector<1x256x1xf32> to vector<1x256x784xf32>
    %19 = arith.mulf %6, %18 : vector<1x256x784xf32>
    %c0_12 = arith.constant 0 : index
    %c0_13 = arith.constant 0 : index
    %c0_14 = arith.constant 0 : index
    %20 = vector.load %arg4[%c0_12, %c0_13, %c0_14] : memref<1x256x1xf32, #tpu.memory_space<vmem>>, vector<1x256x1xf32>
    %21 = vector.broadcast %20 : vector<1x256x1xf32> to vector<1x256x784xf32>
    %22 = arith.addf %21, %17 : vector<1x256x784xf32>
    %23 = arith.addf %19, %22 : vector<1x256x784xf32>
    %c0_15 = arith.constant 0 : index
    %c0_16 = arith.constant 0 : index
    %c0_17 = arith.constant 0 : index
    %24 = vector.load %arg5[%c0_15, %c0_16, %c0_17] : memref<1x256x784xf32, #tpu.memory_space<vmem>>, vector<1x256x784xf32>
    tpu.vector_store %arg5[%c0_15, %c0_16, %c0_17], %23 {strides = array<i32>} : memref<1x256x784xf32, #tpu.memory_space<vmem>>, vector<1x256x784xf32>,
    return
  }
  func.func @transform_0(%arg0: i32) -> (i32, i32, i32) {
    %c0_i32 = arith.constant 0 : i32
    %c0_i32_0 = arith.constant 0 : i32
    %c0_i32_1 = arith.constant 0 : i32
    return %c0_i32, %arg0, %c0_i32_0 : i32, i32, i32
  }
  func.func @transform_1(%arg0: i32) -> (i32, i32, i32) {
    %c0_i32 = arith.constant 0 : i32
    %c0_i32_0 = arith.constant 0 : i32
    %c0_i32_1 = arith.constant 0 : i32
    return %c0_i32, %arg0, %c0_i32_0 : i32, i32, i32
  }
  func.func @transform_2(%arg0: i32) -> (i32, i32, i32) {
    %c0_i32 = arith.constant 0 : i32
    %c0_i32_0 = arith.constant 0 : i32
    %c0_i32_1 = arith.constant 0 : i32
    return %c0_i32, %arg0, %c0_i32_0 : i32, i32, i32
  }
  func.func @transform_3(%arg0: i32) -> (i32, i32, i32) {
    %c0_i32 = arith.constant 0 : i32
    %c0_i32_0 = arith.constant 0 : i32
    %c0_i32_1 = arith.constant 0 : i32
    return %c0_i32, %arg0, %c0_i32_0 : i32, i32, i32
  }
  func.func @transform_4(%arg0: i32) -> (i32, i32, i32) {
    %c0_i32 = arith.constant 0 : i32
    %c0_i32_0 = arith.constant 0 : i32
    %c0_i32_1 = arith.constant 0 : i32
    return %c0_i32, %arg0, %c0_i32_0 : i32, i32, i32
  }
}

</mosaic_0001>

<llo_original>
// kernel: batchnorm_add.1
$region0: #{batchnorm_add.1}
  #allocation0 [shape = 'u32[]', space=smem, size = 0x4, offset = 0x4, fixed_abs, tag = 'smem constant byte address 0x4 - core index']
  #allocation1 [shape = 'u32[144,128]{1,0:T(1,128)}', space=vmem, size = 0x12000, scoped, tag = 'internal scratch']
  %s0 = inlined_call_operand.vmem [shape: f32[1,1024,784], index: 0, kind: input, shape index: {}]
  %s1 = inlined_call_operand.vmem [shape: f32[1,1024,784], index: 1, kind: input, shape index: {}]
  %s2 = inlined_call_operand.vmem [shape: f32[1,1024,1], index: 2, kind: input, shape index: {}]
  %s3 = inlined_call_operand.vmem [shape: f32[1,1024,1], index: 3, kind: input, shape index: {}]
  %s4 = inlined_call_operand.vmem [shape: f32[1,1024,784], index: 4, kind: output, shape index: {}]
  %s5 = sld [smem:[#allocation0]]
  $region49: #{batchnorm_add.1} parent=0
    _
  %s7 = ssub.s32 1, %s5
  %s8 = scalar_select 0, %s7, %s5
  loop: start=0, step=1, limit=6
  $region2: #{batchnorm_add.1} parent=0 // loop_pre_header
    _
  $region3: #{batchnorm_add.1} parent=0 // loop_header
    %s10 = sphi 0, %s14
    %p11 = scmp.ge.s32.totalorder %s10, 6
    %s20 = sphi 0, %s22
    %s23 = sphi 0, %s20
    %s24 = sphi 0, %s23
    %s40 = sphi 0, %s24
    %s46 = sphi 0, %s48
    %s49 = sphi 0, %s46
    %s50 = sphi 0, %s49
    %s66 = sphi 0, %s50
    %s72 = sphi 0, %s74
    %s75 = sphi 0, %s72
    %s76 = sphi 0, %s75
    %s92 = sphi 0, %s76
    %s98 = sphi 0, %s100
    %s101 = sphi 0, %s98
    %s102 = sphi 0, %s101
    %s118 = sphi 0, %s102
    %s124 = sphi 0, %s126
    %s127 = sphi 0, %s124
    %s128 = sphi 0, %s127
    %s144 = sphi 0, %s128
  $region4: #{batchnorm_add.1} parent=0 // loop_header_branch
    %13 = sbr.rel (%p11) target = $region8
  $region5: #{batchnorm_add.1} parent=0 // loop_body
    %s15 = ssub.s32 %s10, 1
    %s16 = ssub.s32 %s10, 2
    %s17 = sadd.s32 %s10, 1
    %s18 = ssub.s32 %s10, %s17
    %p19 = scmp.eq.s32.totalorder %s18, 0
    %s21 = sadd.s32 %s20, 1
    %s22 = scalar_select %p19, %s20, %s21
    %p25 = pneg %p19
    %p26 = scmp.eq.s32.totalorder %s10, 3
    %p27 = por %p25, %p26
    %p28 = scmp.ne.s32.totalorder %s20, %s23
    %p29 = scmp.eq.s32.totalorder %s10, 0
    %p30 = por %p28, %p29
    %p31 = scmp.ne.s32.totalorder %s20, %s23
    %p32 = scmp.eq.s32.totalorder %s15, 3
    %p33 = por %p31, %p32
    %p34 = scmp.ne.s32.totalorder %s23, %s24
    %p35 = scmp.eq.s32.totalorder %s15, 0
    %p36 = por %p34, %p35
    %p37 = scmp.ne.s32.totalorder %s23, %s24
    %p38 = scmp.eq.s32.totalorder %s16, 3
    %p39 = por %p37, %p38
    %p41 = scmp.ne.s32.totalorder %s24, %s40
    %p42 = scmp.eq.s32.totalorder %s16, 0
    %p43 = por %p41, %p42
    %s44 = ssub.s32 %s10, %s17
    %p45 = scmp.eq.s32.totalorder %s44, 0
    %s47 = sadd.s32 %s46, 1
    %s48 = scalar_select %p45, %s46, %s47
    %p51 = pneg %p45
    %p52 = scmp.eq.s32.totalorder %s10, 3
    %p53 = por %p51, %p52
    %p54 = scmp.ne.s32.totalorder %s46, %s49
    %p55 = scmp.eq.s32.totalorder %s10, 0
    %p56 = por %p54, %p55
    %p57 = scmp.ne.s32.totalorder %s46, %s49
    %p58 = scmp.eq.s32.totalorder %s15, 3
    %p59 = por %p57, %p58
    %p60 = scmp.ne.s32.totalorder %s49, %s50
    %p61 = scmp.eq.s32.totalorder %s15, 0
    %p62 = por %p60, %p61
    %p63 = scmp.ne.s32.totalorder %s49, %s50
    %p64 = scmp.eq.s32.totalorder %s16, 3
    %p65 = por %p63, %p64
    %p67 = scmp.ne.s32.totalorder %s50, %s66
    %p68 = scmp.eq.s32.totalorder %s16, 0
    %p69 = por %p67, %p68
    %s70 = ssub.s32 %s10, %s17
    %p71 = scmp.eq.s32.totalorder %s70, 0
    %s73 = sadd.s32 %s72, 1
    %s74 = scalar_select %p71, %s72, %s73
    %p77 = pneg %p71
    %p78 = scmp.eq.s32.totalorder %s10, 3
    %p79 = por %p77, %p78
    %p80 = scmp.ne.s32.totalorder %s72, %s75
    %p81 = scmp.eq.s32.totalorder %s10, 0
    %p82 = por %p80, %p81
    %p83 = scmp.ne.s32.totalorder %s72, %s75
    %p84 = scmp.eq.s32.totalorder %s15, 3
    %p85 = por %p83, %p84
    %p86 = scmp.ne.s32.totalorder %s75, %s76
    %p87 = scmp.eq.s32.totalorder %s15, 0
    %p88 = por %p86, %p87
    %p89 = scmp.ne.s32.totalorder %s75, %s76
    %p90 = scmp.eq.s32.totalorder %s16, 3
    %p91 = por %p89, %p90
    %p93 = scmp.ne.s32.totalorder %s76, %s92
    %p94 = scmp.eq.s32.totalorder %s16, 0
    %p95 = por %p93, %p94
    %s96 = ssub.s32 %s10, %s17
    %p97 = scmp.eq.s32.totalorder %s96, 0
    %s99 = sadd.s32 %s98, 1
    %s100 = scalar_select %p97, %s98, %s99
    %p103 = pneg %p97
    %p104 = scmp.eq.s32.totalorder %s10, 3
    %p105 = por %p103, %p104
    %p106 = scmp.ne.s32.totalorder %s98, %s101
    %p107 = scmp.eq.s32.totalorder %s10, 0
    %p108 = por %p106, %p107
    %p109 = scmp.ne.s32.totalorder %s98, %s101
    %p110 = scmp.eq.s32.totalorder %s15, 3
    %p111 = por %p109, %p110
    %p112 = scmp.ne.s32.totalorder %s101, %s102
    %p113 = scmp.eq.s32.totalorder %s15, 0
    %p114 = por %p112, %p113
    %p115 = scmp.ne.s32.totalorder %s101, %s102
    %p116 = scmp.eq.s32.totalorder %s16, 3
    %p117 = por %p115, %p116
    %p119 = scmp.ne.s32.totalorder %s102, %s118
    %p120 = scmp.eq.s32.totalorder %s16, 0
    %p121 = por %p119, %p120
    %s122 = ssub.s32 %s10, %s17
    %p123 = scmp.eq.s32.totalorder %s122, 0
    %s125 = sadd.s32 %s124, 1
    %s126 = scalar_select %p123, %s124, %s125
    %p129 = pneg %p123
    %p130 = scmp.eq.s32.totalorder %s10, 3
    %p131 = por %p129, %p130
    %p132 = scmp.ne.s32.totalorder %s124, %s127
    %p133 = scmp.eq.s32.totalorder %s10, 0
    %p134 = por %p132, %p133
    %p135 = scmp.ne.s32.totalorder %s124, %s127
    %p136 = scmp.eq.s32.totalorder %s15, 3
    %p137 = por %p135, %p136
    %p138 = scmp.ne.s32.totalorder %s127, %s128
    %p139 = scmp.eq.s32.totalorder %s15, 0
    %p140 = por %p138, %p139
    %p141 = scmp.ne.s32.totalorder %s127, %s128
    %p142 = scmp.eq.s32.totalorder %s16, 3
    %p143 = por %p141, %p142
    %p145 = scmp.ne.s32.totalorder %s128, %s144
    %p146 = scmp.eq.s32.totalorder %s16, 0
    %p147 = por %p145, %p146
    %p148 = scmp.le.s32.totalorder 1, %s10
    %p149 = scmp.lt.s32.totalorder %s10, 5
    %p150 = pnand %p148, %p149
    %p151 = pneg %p150
    // Predicated region
    $region9: #{batchnorm_add.1} parent=5 // pred_check
      _
    $region10: #{batchnorm_add.1} parent=5 // pred_check_branch
      %153 = sbr.rel (%p150) target = $region12
    $region11: #{batchnorm_add.1} parent=5 // pred_region
      %s154 = ssub.s32 %s10, 1
    $region12: #{batchnorm_add.1} parent=5 // pred_fallthru
      _
    %p155 = scmp.lt.s32.totalorder %s10, 4
    // Predicated region
    $region13: #{batchnorm_add.1} parent=5 // pred_check
      %p156 = pneg %p155
    $region14: #{batchnorm_add.1} parent=5 // pred_check_branch
      %158 = sbr.rel (%p156) target = $region16
    $region15: #{batchnorm_add.1} parent=5 // pred_region
      // Predicated region
      $region17: #{batchnorm_add.1} parent=15 // pred_check
        %p159 = pneg %p30
      $region18: #{batchnorm_add.1} parent=15 // pred_check_branch
        %161 = sbr.rel (%p159) target = $region20
      $region19: #{batchnorm_add.1} parent=15 // pred_region
        %s162 = smul.u32 32, %s10
        %p163 = scmp.lt.s32.totalorder %s162, 127
        %s164 = scalar_select %p163, %s162, 127
        %s165 = smul.addr %s164, 7
        %s166 = smul.addr %s165, 8
        %s167 = scalar_lea.vmem %s0, %s166
        %s168 = smul.u32 32, %s10
      $region20: #{batchnorm_add.1} parent=15 // pred_fallthru
        _
      // Predicated region
      $region21: #{batchnorm_add.1} parent=15 // pred_check
        %p169 = pneg %p56
      $region22: #{batchnorm_add.1} parent=15 // pred_check_branch
        %171 = sbr.rel (%p169) target = $region24
      $region23: #{batchnorm_add.1} parent=15 // pred_region
        %s172 = smul.u32 32, %s10
        %p173 = scmp.lt.s32.totalorder %s172, 127
        %s174 = scalar_select %p173, %s172, 127
        %s175 = smul.addr %s174, 7
        %s176 = smul.addr %s175, 8
        %s177 = scalar_lea.vmem %s1, %s176
        %s178 = smul.u32 32, %s10
      $region24: #{batchnorm_add.1} parent=15 // pred_fallthru
        _
      // Predicated region
      $region25: #{batchnorm_add.1} parent=15 // pred_check
        %p179 = pneg %p82
      $region26: #{batchnorm_add.1} parent=15 // pred_check_branch
        %181 = sbr.rel (%p179) target = $region28
      $region27: #{batchnorm_add.1} parent=15 // pred_region
        %s182 = smul.u32 32, %s10
        %p183 = scmp.lt.s32.totalorder %s182, 127
        %s184 = scalar_select %p183, %s182, 127
        %s185 = smul.addr %s184, 8
        %s186 = scalar_lea.vmem %s2, %s185
        %s187 = smul.u32 32, %s10
      $region28: #{batchnorm_add.1} parent=15 // pred_fallthru
        _
      // Predicated region
      $region29: #{batchnorm_add.1} parent=15 // pred_check
        %p188 = pneg %p108
      $region30: #{batchnorm_add.1} parent=15 // pred_check_branch
        %190 = sbr.rel (%p188) target = $region32
      $region31: #{batchnorm_add.1} parent=15 // pred_region
        %s191 = smul.u32 32, %s10
        %p192 = scmp.lt.s32.totalorder %s191, 127
        %s193 = scalar_select %p192, %s191, 127
        %s194 = smul.addr %s193, 8
        %s195 = scalar_lea.vmem %s3, %s194
        %s196 = smul.u32 32, %s10
      $region32: #{batchnorm_add.1} parent=15 // pred_fallthru
        _
    $region16: #{batchnorm_add.1} parent=5 // pred_fallthru
      _
    %p197 = scmp.le.s32.totalorder 1, %s10
    %p198 = scmp.lt.s32.totalorder %s10, 5
    %p199 = pnand %p197, %p198
    %p200 = pneg %p199
    // Predicated region
    $region33: #{batchnorm_add.1} parent=5 // pred_check
      _
    $region34: #{batchnorm_add.1} parent=5 // pred_check_branch
      %202 = sbr.rel (%p199) target = $region36
    $region35: #{batchnorm_add.1} parent=5 // pred_region
      %s203 = ssub.s32 %s10, 1
      %s204 = smul.u32 32, %s15
      %p205 = scmp.lt.s32.totalorder %s204, 127
      %s206 = scalar_select %p205, %s204, 127
      %s207 = smul.addr %s206, 7
      %s208 = smul.addr %s207, 8
      %s209 = scalar_lea.vmem %s0, %s208
      %p210 = pneg %p36
      %p211 = pneg %p33
      %s212 = smul.u32 32, %s15
      %p213 = scmp.lt.s32.totalorder %s212, 127
      %s214 = scalar_select %p213, %s212, 127
      %s215 = smul.addr %s214, 7
      %s216 = smul.addr %s215, 8
      %s217 = scalar_lea.vmem %s1, %s216
      %p218 = pneg %p62
      %p219 = pneg %p59
      %s220 = smul.u32 32, %s15
      %p221 = scmp.lt.s32.totalorder %s220, 127
      %s222 = scalar_select %p221, %s220, 127
      %s223 = smul.addr %s222, 8
      %s224 = scalar_lea.vmem %s2, %s223
      %p225 = pneg %p88
      %p226 = pneg %p85
      %s227 = smul.u32 32, %s15
      %p228 = scmp.lt.s32.totalorder %s227, 127
      %s229 = scalar_select %p228, %s227, 127
      %s230 = smul.addr %s229, 8
      %s231 = scalar_lea.vmem %s3, %s230
      %p232 = pneg %p114
      %p233 = pneg %p111
      %p234 = pneg %p140
      %p235 = pneg %p137
      %s236 = smul.u32 32, %s15
      %p237 = scmp.lt.s32.totalorder %s236, 127
      %s238 = scalar_select %p237, %s236, 127
      %s239 = smul.addr %s238, 7
      %s240 = smul.addr %s239, 8
      %s241 = scalar_lea.vmem %s4, %s240
      %s242 = smul.u32 32, %s15
      %p243 = scmp.lt.s32.totalorder %s242, 127
      %s244 = scalar_select %p243, %s242, 127
      %s245 = smul.addr %s244, 7
      %s246 = smul.addr %s245, 8
      %s247 = scalar_lea.vmem %s0, %s246
      %s248 = smul.u32 32, %s15
      %s249 = smul.u32 32, %s15
      %p250 = scmp.lt.s32.totalorder %s249, 127
      %s251 = scalar_select %p250, %s249, 127
      %s252 = smul.addr %s251, 7
      %s253 = smul.addr %s252, 8
      %s254 = scalar_lea.vmem %s1, %s253
      %s255 = smul.u32 32, %s15
      %s256 = smul.u32 32, %s15
      %p257 = scmp.lt.s32.totalorder %s256, 127
      %s258 = scalar_select %p257, %s256, 127
      %s259 = smul.addr %s258, 8
      %s260 = scalar_lea.vmem %s2, %s259
      %s261 = smul.u32 32, %s15
      %s262 = smul.u32 32, %s15
      %p263 = scmp.lt.s32.totalorder %s262, 127
      %s264 = scalar_select %p263, %s262, 127
      %s265 = smul.addr %s264, 8
      %s266 = scalar_lea.vmem %s3, %s265
      %s267 = smul.u32 32, %s15
      %s268 = smul.u32 32, %s15
      %p269 = scmp.lt.s32.totalorder %s268, 127
      %s270 = scalar_select %p269, %s268, 127
      %s271 = smul.addr %s270, 7
      %s272 = smul.addr %s271, 8
      %s273 = scalar_lea.vmem %s4, %s272
      %s274 = smul.u32 32, %s15
      %v275 = vld [vmem:[%s247] sm:$0xff]
      %v276 = vld [vmem:[%s247 + $0x8] sm:$0xff]
      %v277 = vld [vmem:[%s247 + $0x10] sm:$0xff]
      %v278 = vld [vmem:[%s247 + $0x18] sm:$0xff]
      %v279 = vld [vmem:[%s247 + $0x20] sm:$0xff]
      %v280 = vld [vmem:[%s247 + $0x28] sm:$0xff]
      %v281 = vld [vmem:[%s247 + $0x30] sm:$0xff]
      %v282 = vld [vmem:[%s247 + $0x38] sm:$0xff]
      %v283 = vld [vmem:[%s247 + $0x40] sm:$0xff]
      %v284 = vld [vmem:[%s247 + $0x48] sm:$0xff]
      %v285 = vld [vmem:[%s247 + $0x50] sm:$0xff]
      %v286 = vld [vmem:[%s247 + $0x58] sm:$0xff]
      %v287 = vld [vmem:[%s247 + $0x60] sm:$0xff]
      %v288 = vld [vmem:[%s247 + $0x68] sm:$0xff]
      %v289 = vld [vmem:[%s247 + $0x70] sm:$0xff]
      %v290 = vld [vmem:[%s247 + $0x78] sm:$0xff]
      %v291 = vld [vmem:[%s247 + $0x80] sm:$0xff]
      %v292 = vld [vmem:[%s247 + $0x88] sm:$0xff]
      %v293 = vld [vmem:[%s247 + $0x90] sm:$0xff]
      %v294 = vld [vmem:[%s247 + $0x98] sm:$0xff]
      %v295 = vld [vmem:[%s247 + $0xa0] sm:$0xff]
      %v296 = vld [vmem:[%s247 + $0xa8] sm:$0xff]
      %v297 = vld [vmem:[%s247 + $0xb0] sm:$0xff]
      %v298 = vld [vmem:[%s247 + $0xb8] sm:$0xff]
      %v299 = vld [vmem:[%s247 + $0xc0] sm:$0xff]
      %v300 = vld [vmem:[%s247 + $0xc8] sm:$0xff]
      %v301 = vld [vmem:[%s247 + $0xd0] sm:$0xff]
      %v302 = vld [vmem:[%s247 + $0xd8] sm:$0xff]
      %v303 = vld [vmem:[%s247 + $0xe0] sm:$0xff]
      %v304 = vld [vmem:[%s247 + $0xe8] sm:$0xff]
      %v305 = vld [vmem:[%s247 + $0xf0] sm:$0xff]
      %v306 = vld [vmem:[%s247 + $0xf8] sm:$0xff]
      %v307 = vld [vmem:[%s247 + $0x100] sm:$0xff]
      %v308 = vld [vmem:[%s247 + $0x108] sm:$0xff]
      %v309 = vld [vmem:[%s247 + $0x110] sm:$0xff]
      %v310 = vld [vmem:[%s247 + $0x118] sm:$0xff]
      %v311 = vld [vmem:[%s247 + $0x120] sm:$0xff]
      %v312 = vld [vmem:[%s247 + $0x128] sm:$0xff]
      %v313 = vld [vmem:[%s247 + $0x130] sm:$0xff]
      %v314 = vld [vmem:[%s247 + $0x138] sm:$0xff]
      %v315 = vld [vmem:[%s247 + $0x140] sm:$0xff]
      %v316 = vld [vmem:[%s247 + $0x148] sm:$0xff]
      %v317 = vld [vmem:[%s247 + $0x150] sm:$0xff]
      %v318 = vld [vmem:[%s247 + $0x158] sm:$0xff]
      %v319 = vld [vmem:[%s247 + $0x160] sm:$0xff]
      %v320 = vld [vmem:[%s247 + $0x168] sm:$0xff]
      %v321 = vld [vmem:[%s247 + $0x170] sm:$0xff]
      %v322 = vld [vmem:[%s247 + $0x178] sm:$0xff]
      %v323 = vld [vmem:[%s247 + $0x180] sm:$0xff]
      %v324 = vld [vmem:[%s247 + $0x188] sm:$0xff]
      %v325 = vld [vmem:[%s247 + $0x190] sm:$0xff]
      %v326 = vld [vmem:[%s247 + $0x198] sm:$0xff]
      %v327 = vld [vmem:[%s247 + $0x1a0] sm:$0xff]
      %v328 = vld [vmem:[%s247 + $0x1a8] sm:$0xff]
      %v329 = vld [vmem:[%s247 + $0x1b0] sm:$0xff]
      %v330 = vld [vmem:[%s247 + $0x1b8] sm:$0xff]
      %v331 = vld [vmem:[%s247 + $0x1c0] sm:$0xff]
      %v332 = vld [vmem:[%s247 + $0x1c8] sm:$0xff]
      %v333 = vld [vmem:[%s247 + $0x1d0] sm:$0xff]
      %v334 = vld [vmem:[%s247 + $0x1d8] sm:$0xff]
      %v335 = vld [vmem:[%s247 + $0x1e0] sm:$0xff]
      %v336 = vld [vmem:[%s247 + $0x1e8] sm:$0xff]
      %v337 = vld [vmem:[%s247 + $0x1f0] sm:$0xff]
      %v338 = vld [vmem:[%s247 + $0x1f8] sm:$0xff]
      %v339 = vld [vmem:[%s247 + $0x200] sm:$0xff]
      %v340 = vld [vmem:[%s247 + $0x208] sm:$0xff]
      %v341 = vld [vmem:[%s247 + $0x210] sm:$0xff]
      %v342 = vld [vmem:[%s247 + $0x218] sm:$0xff]
      %v343 = vld [vmem:[%s247 + $0x220] sm:$0xff]
      %v344 = vld [vmem:[%s247 + $0x228] sm:$0xff]
      %v345 = vld [vmem:[%s247 + $0x230] sm:$0xff]
      %v346 = vld [vmem:[%s247 + $0x238] sm:$0xff]
      %v347 = vld [vmem:[%s247 + $0x240] sm:$0xff]
      %v348 = vld [vmem:[%s247 + $0x248] sm:$0xff]
      %v349 = vld [vmem:[%s247 + $0x250] sm:$0xff]
      %v350 = vld [vmem:[%s247 + $0x258] sm:$0xff]
      %v351 = vld [vmem:[%s247 + $0x260] sm:$0xff]
      %v352 = vld [vmem:[%s247 + $0x268] sm:$0xff]
      %v353 = vld [vmem:[%s247 + $0x270] sm:$0xff]
      %v354 = vld [vmem:[%s247 + $0x278] sm:$0xff]
      %v355 = vld [vmem:[%s247 + $0x280] sm:$0xff]
      %v356 = vld [vmem:[%s247 + $0x288] sm:$0xff]
      %v357 = vld [vmem:[%s247 + $0x290] sm:$0xff]
      %v358 = vld [vmem:[%s247 + $0x298] sm:$0xff]
      %v359 = vld [vmem:[%s247 + $0x2a0] sm:$0xff]
      %v360 = vld [vmem:[%s247 + $0x2a8] sm:$0xff]
      %v361 = vld [vmem:[%s247 + $0x2b0] sm:$0xff]
      %v362 = vld [vmem:[%s247 + $0x2b8] sm:$0xff]
      %v363 = vld [vmem:[%s247 + $0x2c0] sm:$0xff]
      %v364 = vld [vmem:[%s247 + $0x2c8] sm:$0xff]
      %v365 = vld [vmem:[%s247 + $0x2d0] sm:$0xff]
      %v366 = vld [vmem:[%s247 + $0x2d8] sm:$0xff]
      %v367 = vld [vmem:[%s247 + $0x2e0] sm:$0xff]
      %v368 = vld [vmem:[%s247 + $0x2e8] sm:$0xff]
      %v369 = vld [vmem:[%s247 + $0x2f0] sm:$0xff]
      %v370 = vld [vmem:[%s247 + $0x2f8] sm:$0xff]
      %v371 = vld [vmem:[%s247 + $0x300] sm:$0xff]
      %v372 = vld [vmem:[%s247 + $0x308] sm:$0xff]
      %v373 = vld [vmem:[%s247 + $0x310] sm:$0xff]
      %v374 = vld [vmem:[%s247 + $0x318] sm:$0xff]
      %v375 = vld [vmem:[%s247 + $0x320] sm:$0xff]
      %v376 = vld [vmem:[%s247 + $0x328] sm:$0xff]
      %v377 = vld [vmem:[%s247 + $0x330] sm:$0xff]
      %v378 = vld [vmem:[%s247 + $0x338] sm:$0xff]
      %v379 = vld [vmem:[%s247 + $0x340] sm:$0xff]
      %v380 = vld [vmem:[%s247 + $0x348] sm:$0xff]
      %v381 = vld [vmem:[%s247 + $0x350] sm:$0xff]
      %v382 = vld [vmem:[%s247 + $0x358] sm:$0xff]
      %v383 = vld [vmem:[%s247 + $0x360] sm:$0xff]
      %v384 = vld [vmem:[%s247 + $0x368] sm:$0xff]
      %v385 = vld [vmem:[%s247 + $0x370] sm:$0xff]
      %v386 = vld [vmem:[%s247 + $0x378] sm:$0xff]
      %v387 = vld [vmem:[%s247 + $0x380] sm:$0xff]
      %v388 = vld [vmem:[%s247 + $0x388] sm:$0xff]
      %v389 = vld [vmem:[%s247 + $0x390] sm:$0xff]
      %v390 = vld [vmem:[%s247 + $0x398] sm:$0xff]
      %v391 = vld [vmem:[%s247 + $0x3a0] sm:$0xff]
      %v392 = vld [vmem:[%s247 + $0x3a8] sm:$0xff]
      %v393 = vld [vmem:[%s247 + $0x3b0] sm:$0xff]
      %v394 = vld [vmem:[%s247 + $0x3b8] sm:$0xff]
      %v395 = vld [vmem:[%s247 + $0x3c0] sm:$0xff]
      %v396 = vld [vmem:[%s247 + $0x3c8] sm:$0xff]
      %v397 = vld [vmem:[%s247 + $0x3d0] sm:$0xff]
      %v398 = vld [vmem:[%s247 + $0x3d8] sm:$0xff]
      %v399 = vld [vmem:[%s247 + $0x3e0] sm:$0xff]
      %v400 = vld [vmem:[%s247 + $0x3e8] sm:$0xff]
      %v401 = vld [vmem:[%s247 + $0x3f0] sm:$0xff]
      %v402 = vld [vmem:[%s247 + $0x3f8] sm:$0xff]
      %v403 = vld [vmem:[%s247 + $0x400] sm:$0xff]
      %v404 = vld [vmem:[%s247 + $0x408] sm:$0xff]
      %v405 = vld [vmem:[%s247 + $0x410] sm:$0xff]
      %v406 = vld [vmem:[%s247 + $0x418] sm:$0xff]
      %v407 = vld [vmem:[%s247 + $0x420] sm:$0xff]
      %v408 = vld [vmem:[%s247 + $0x428] sm:$0xff]
      %v409 = vld [vmem:[%s247 + $0x430] sm:$0xff]
      %v410 = vld [vmem:[%s247 + $0x438] sm:$0xff]
      %v411 = vld [vmem:[%s247 + $0x440] sm:$0xff]
      %v412 = vld [vmem:[%s247 + $0x448] sm:$0xff]
      %v413 = vld [vmem:[%s247 + $0x450] sm:$0xff]
      %v414 = vld [vmem:[%s247 + $0x458] sm:$0xff]
      %v415 = vld [vmem:[%s247 + $0x460] sm:$0xff]
      %v416 = vld [vmem:[%s247 + $0x468] sm:$0xff]
      %v417 = vld [vmem:[%s247 + $0x470] sm:$0xff]
      %v418 = vld [vmem:[%s247 + $0x478] sm:$0xff]
      %v419 = vld [vmem:[%s247 + $0x480] sm:$0xff]
      %v420 = vld [vmem:[%s247 + $0x488] sm:$0xff]
      %v421 = vld [vmem:[%s247 + $0x490] sm:$0xff]
      %v422 = vld [vmem:[%s247 + $0x498] sm:$0xff]
      %v423 = vld [vmem:[%s247 + $0x4a0] sm:$0xff]
      %v424 = vld [vmem:[%s247 + $0x4a8] sm:$0xff]
      %v425 = vld [vmem:[%s247 + $0x4b0] sm:$0xff]
      %v426 = vld [vmem:[%s247 + $0x4b8] sm:$0xff]
      %v427 = vld [vmem:[%s247 + $0x4c0] sm:$0xff]
      %v428 = vld [vmem:[%s247 + $0x4c8] sm:$0xff]
      %v429 = vld [vmem:[%s247 + $0x4d0] sm:$0xff]
      %v430 = vld [vmem:[%s247 + $0x4d8] sm:$0xff]
      %v431 = vld [vmem:[%s247 + $0x4e0] sm:$0xff]
      %v432 = vld [vmem:[%s247 + $0x4e8] sm:$0xff]
      %v433 = vld [vmem:[%s247 + $0x4f0] sm:$0xff]
      %v434 = vld [vmem:[%s247 + $0x4f8] sm:$0xff]
      %v435 = vld [vmem:[%s247 + $0x500] sm:$0xff]
      %v436 = vld [vmem:[%s247 + $0x508] sm:$0xff]
      %v437 = vld [vmem:[%s247 + $0x510] sm:$0xff]
      %v438 = vld [vmem:[%s247 + $0x518] sm:$0xff]
      %v439 = vld [vmem:[%s247 + $0x520] sm:$0xff]
      %v440 = vld [vmem:[%s247 + $0x528] sm:$0xff]
      %v441 = vld [vmem:[%s247 + $0x530] sm:$0xff]
      %v442 = vld [vmem:[%s247 + $0x538] sm:$0xff]
      %v443 = vld [vmem:[%s247 + $0x540] sm:$0xff]
      %v444 = vld [vmem:[%s247 + $0x548] sm:$0xff]
      %v445 = vld [vmem:[%s247 + $0x550] sm:$0xff]
      %v446 = vld [vmem:[%s247 + $0x558] sm:$0xff]
      %v447 = vld [vmem:[%s247 + $0x560] sm:$0xff]
      %v448 = vld [vmem:[%s247 + $0x568] sm:$0xff]
      %v449 = vld [vmem:[%s247 + $0x570] sm:$0xff]
      %v450 = vld [vmem:[%s247 + $0x578] sm:$0xff]
      %v451 = vld [vmem:[%s247 + $0x580] sm:$0xff]
      %v452 = vld [vmem:[%s247 + $0x588] sm:$0xff]
      %v453 = vld [vmem:[%s247 + $0x590] sm:$0xff]
      %v454 = vld [vmem:[%s247 + $0x598] sm:$0xff]
      %v455 = vld [vmem:[%s247 + $0x5a0] sm:$0xff]
      %v456 = vld [vmem:[%s247 + $0x5a8] sm:$0xff]
      %v457 = vld [vmem:[%s247 + $0x5b0] sm:$0xff]
      %v458 = vld [vmem:[%s247 + $0x5b8] sm:$0xff]
      %v459 = vld [vmem:[%s247 + $0x5c0] sm:$0xff]
      %v460 = vld [vmem:[%s247 + $0x5c8] sm:$0xff]
      %v461 = vld [vmem:[%s247 + $0x5d0] sm:$0xff]
      %v462 = vld [vmem:[%s247 + $0x5d8] sm:$0xff]
      %v463 = vld [vmem:[%s247 + $0x5e0] sm:$0xff]
      %v464 = vld [vmem:[%s247 + $0x5e8] sm:$0xff]
      %v465 = vld [vmem:[%s247 + $0x5f0] sm:$0xff]
      %v466 = vld [vmem:[%s247 + $0x5f8] sm:$0xff]
      %v467 = vld [vmem:[%s247 + $0x600] sm:$0xff]
      %v468 = vld [vmem:[%s247 + $0x608] sm:$0xff]
      %v469 = vld [vmem:[%s247 + $0x610] sm:$0xff]
      %v470 = vld [vmem:[%s247 + $0x618] sm:$0xff]
      %v471 = vld [vmem:[%s247 + $0x620] sm:$0xff]
      %v472 = vld [vmem:[%s247 + $0x628] sm:$0xff]
      %v473 = vld [vmem:[%s247 + $0x630] sm:$0xff]
      %v474 = vld [vmem:[%s247 + $0x638] sm:$0xff]
      %v475 = vld [vmem:[%s247 + $0x640] sm:$0xff]
      %v476 = vld [vmem:[%s247 + $0x648] sm:$0xff]
      %v477 = vld [vmem:[%s247 + $0x650] sm:$0xff]
      %v478 = vld [vmem:[%s247 + $0x658] sm:$0xff]
      %v479 = vld [vmem:[%s247 + $0x660] sm:$0xff]
      %v480 = vld [vmem:[%s247 + $0x668] sm:$0xff]
      %v481 = vld [vmem:[%s247 + $0x670] sm:$0xff]
      %v482 = vld [vmem:[%s247 + $0x678] sm:$0xff]
      %v483 = vld [vmem:[%s247 + $0x680] sm:$0xff]
      %v484 = vld [vmem:[%s247 + $0x688] sm:$0xff]
      %v485 = vld [vmem:[%s247 + $0x690] sm:$0xff]
      %v486 = vld [vmem:[%s247 + $0x698] sm:$0xff]
      %v487 = vld [vmem:[%s247 + $0x6a0] sm:$0xff]
      %v488 = vld [vmem:[%s247 + $0x6a8] sm:$0xff]
      %v489 = vld [vmem:[%s247 + $0x6b0] sm:$0xff]
      %v490 = vld [vmem:[%s247 + $0x6b8] sm:$0xff]
      %v491 = vld [vmem:[%s247 + $0x6c0] sm:$0xff]
      %v492 = vld [vmem:[%s247 + $0x6c8] sm:$0xff]
      %v493 = vld [vmem:[%s247 + $0x6d0] sm:$0xff]
      %v494 = vld [vmem:[%s247 + $0x6d8] sm:$0xff]
      %v495 = vld [vmem:[%s247 + $0x6e0] sm:$0xff]
      %v496 = vld [vmem:[%s247 + $0x6e8] sm:$0xff]
      %v497 = vld [vmem:[%s247 + $0x6f0] sm:$0xff]
      %v498 = vld [vmem:[%s247 + $0x6f8] sm:$0xff]
      %v499 = vadd.f32 %v275, %v276
      %v500 = vadd.f32 %v499, %v277
      %v501 = vadd.f32 %v500, %v278
      %v502 = vadd.f32 %v501, %v279
      %v503 = vadd.f32 %v502, %v280
      %vm504 = vcmask 130048
      %v505 = vsel %vm504, %v281, 0.0
      %v506 = vadd.f32 %v503, %v505
      %507 = vadd.xlane.f32.xlu0 %v506
      %v508 = vpop.xlane.xlu0 %507
      %v509 = vadd.f32 %v282, %v283
      %v510 = vadd.f32 %v509, %v284
      %v511 = vadd.f32 %v510, %v285
      %v512 = vadd.f32 %v511, %v286
      %v513 = vadd.f32 %v512, %v287
      %v514 = vsel %vm504, %v288, 0.0
      %v515 = vadd.f32 %v513, %v514
      %516 = vadd.xlane.f32.xlu0 %v515
      %v517 = vpop.xlane.xlu0 %516
      %v518 = vadd.f32 %v289, %v290
      %v519 = vadd.f32 %v518, %v291
      %v520 = vadd.f32 %v519, %v292
      %v521 = vadd.f32 %v520, %v293
      %v522 = vadd.f32 %v521, %v294
      %v523 = vsel %vm504, %v295, 0.0
      %v524 = vadd.f32 %v522, %v523
      %525 = vadd.xlane.f32.xlu0 %v524
      %v526 = vpop.xlane.xlu0 %525
      %v527 = vadd.f32 %v296, %v297
      %v528 = vadd.f32 %v527, %v298
      %v529 = vadd.f32 %v528, %v299
      %v530 = vadd.f32 %v529, %v300
      %v531 = vadd.f32 %v530, %v301
      %v532 = vsel %vm504, %v302, 0.0
      %v533 = vadd.f32 %v531, %v532
      %534 = vadd.xlane.f32.xlu0 %v533
      %v535 = vpop.xlane.xlu0 %534
      %v536 = vadd.f32 %v303, %v304
      %v537 = vadd.f32 %v536, %v305
      %v538 = vadd.f32 %v537, %v306
      %v539 = vadd.f32 %v538, %v307
      %v540 = vadd.f32 %v539, %v308
      %v541 = vsel %vm504, %v309, 0.0
      %v542 = vadd.f32 %v540, %v541
      %543 = vadd.xlane.f32.xlu0 %v542
      %v544 = vpop.xlane.xlu0 %543
      %v545 = vadd.f32 %v310, %v311
      %v546 = vadd.f32 %v545, %v312
      %v547 = vadd.f32 %v546, %v313
      %v548 = vadd.f32 %v547, %v314
      %v549 = vadd.f32 %v548, %v315
      %v550 = vsel %vm504, %v316, 0.0
      %v551 = vadd.f32 %v549, %v550
      %552 = vadd.xlane.f32.xlu0 %v551
      %v553 = vpop.xlane.xlu0 %552
      %v554 = vadd.f32 %v317, %v318
      %v555 = vadd.f32 %v554, %v319
      %v556 = vadd.f32 %v555, %v320
      %v557 = vadd.f32 %v556, %v321
      %v558 = vadd.f32 %v557, %v322
      %v559 = vsel %vm504, %v323, 0.0
      %v560 = vadd.f32 %v558, %v559
      %561 = vadd.xlane.f32.xlu0 %v560
      %v562 = vpop.xlane.xlu0 %561
      %v563 = vadd.f32 %v324, %v325
      %v564 = vadd.f32 %v563, %v326
      %v565 = vadd.f32 %v564, %v327
      %v566 = vadd.f32 %v565, %v328
      %v567 = vadd.f32 %v566, %v329
      %v568 = vsel %vm504, %v330, 0.0
      %v569 = vadd.f32 %v567, %v568
      %570 = vadd.xlane.f32.xlu0 %v569
      %v571 = vpop.xlane.xlu0 %570
      %v572 = vadd.f32 %v331, %v332
      %v573 = vadd.f32 %v572, %v333
      %v574 = vadd.f32 %v573, %v334
      %v575 = vadd.f32 %v574, %v335
      %v576 = vadd.f32 %v575, %v336
      %v577 = vsel %vm504, %v337, 0.0
      %v578 = vadd.f32 %v576, %v577
      %579 = vadd.xlane.f32.xlu0 %v578
      %v580 = vpop.xlane.xlu0 %579
      %v581 = vadd.f32 %v338, %v339
      %v582 = vadd.f32 %v581, %v340
      %v583 = vadd.f32 %v582, %v341
      %v584 = vadd.f32 %v583, %v342
      %v585 = vadd.f32 %v584, %v343
      %v586 = vsel %vm504, %v344, 0.0
      %v587 = vadd.f32 %v585, %v586
      %588 = vadd.xlane.f32.xlu0 %v587
      %v589 = vpop.xlane.xlu0 %588
      %v590 = vadd.f32 %v345, %v346
      %v591 = vadd.f32 %v590, %v347
      %v592 = vadd.f32 %v591, %v348
      %v593 = vadd.f32 %v592, %v349
      %v594 = vadd.f32 %v593, %v350
      %v595 = vsel %vm504, %v351, 0.0
      %v596 = vadd.f32 %v594, %v595
      %597 = vadd.xlane.f32.xlu0 %v596
      %v598 = vpop.xlane.xlu0 %597
      %v599 = vadd.f32 %v352, %v353
      %v600 = vadd.f32 %v599, %v354
      %v601 = vadd.f32 %v600, %v355
      %v602 = vadd.f32 %v601, %v356
      %v603 = vadd.f32 %v602, %v357
      %v604 = vsel %vm504, %v358, 0.0
      %v605 = vadd.f32 %v603, %v604
      %606 = vadd.xlane.f32.xlu0 %v605
      %v607 = vpop.xlane.xlu0 %606
      %v608 = vadd.f32 %v359, %v360
      %v609 = vadd.f32 %v608, %v361
      %v610 = vadd.f32 %v609, %v362
      %v611 = vadd.f32 %v610, %v363
      %v612 = vadd.f32 %v611, %v364
      %v613 = vsel %vm504, %v365, 0.0
      %v614 = vadd.f32 %v612, %v613
      %615 = vadd.xlane.f32.xlu0 %v614
      %v616 = vpop.xlane.xlu0 %615
      %v617 = vadd.f32 %v366, %v367
      %v618 = vadd.f32 %v617, %v368
      %v619 = vadd.f32 %v618, %v369
      %v620 = vadd.f32 %v619, %v370
      %v621 = vadd.f32 %v620, %v371
      %v622 = vsel %vm504, %v372, 0.0
      %v623 = vadd.f32 %v621, %v622
      %624 = vadd.xlane.f32.xlu0 %v623
      %v625 = vpop.xlane.xlu0 %624
      %v626 = vadd.f32 %v373, %v374
      %v627 = vadd.f32 %v626, %v375
      %v628 = vadd.f32 %v627, %v376
      %v629 = vadd.f32 %v628, %v377
      %v630 = vadd.f32 %v629, %v378
      %v631 = vsel %vm504, %v379, 0.0
      %v632 = vadd.f32 %v630, %v631
      %633 = vadd.xlane.f32.xlu0 %v632
      %v634 = vpop.xlane.xlu0 %633
      %v635 = vadd.f32 %v380, %v381
      %v636 = vadd.f32 %v635, %v382
      %v637 = vadd.f32 %v636, %v383
      %v638 = vadd.f32 %v637, %v384
      %v639 = vadd.f32 %v638, %v385
      %v640 = vsel %vm504, %v386, 0.0
      %v641 = vadd.f32 %v639, %v640
      %642 = vadd.xlane.f32.xlu0 %v641
      %v643 = vpop.xlane.xlu0 %642
      %v644 = vadd.f32 %v387, %v388
      %v645 = vadd.f32 %v644, %v389
      %v646 = vadd.f32 %v645, %v390
      %v647 = vadd.f32 %v646, %v391
      %v648 = vadd.f32 %v647, %v392
      %v649 = vsel %vm504, %v393, 0.0
      %v650 = vadd.f32 %v648, %v649
      %651 = vadd.xlane.f32.xlu0 %v650
      %v652 = vpop.xlane.xlu0 %651
      %v653 = vadd.f32 %v394, %v395
      %v654 = vadd.f32 %v653, %v396
      %v655 = vadd.f32 %v654, %v397
      %v656 = vadd.f32 %v655, %v398
      %v657 = vadd.f32 %v656, %v399
      %v658 = vsel %vm504, %v400, 0.0
      %v659 = vadd.f32 %v657, %v658
      %660 = vadd.xlane.f32.xlu0 %v659
      %v661 = vpop.xlane.xlu0 %660
      %v662 = vadd.f32 %v401, %v402
      %v663 = vadd.f32 %v662, %v403
      %v664 = vadd.f32 %v663, %v404
      %v665 = vadd.f32 %v664, %v405
      %v666 = vadd.f32 %v665, %v406
      %v667 = vsel %vm504, %v407, 0.0
      %v668 = vadd.f32 %v666, %v667
      %669 = vadd.xlane.f32.xlu0 %v668
      %v670 = vpop.xlane.xlu0 %669
      %v671 = vadd.f32 %v408, %v409
      %v672 = vadd.f32 %v671, %v410
      %v673 = vadd.f32 %v672, %v411
      %v674 = vadd.f32 %v673, %v412
      %v675 = vadd.f32 %v674, %v413
      %v676 = vsel %vm504, %v414, 0.0
      %v677 = vadd.f32 %v675, %v676
      %678 = vadd.xlane.f32.xlu0 %v677
      %v679 = vpop.xlane.xlu0 %678
      %v680 = vadd.f32 %v415, %v416
      %v681 = vadd.f32 %v680, %v417
      %v682 = vadd.f32 %v681, %v418
      %v683 = vadd.f32 %v682, %v419
      %v684 = vadd.f32 %v683, %v420
      %v685 = vsel %vm504, %v421, 0.0
      %v686 = vadd.f32 %v684, %v685
      %687 = vadd.xlane.f32.xlu0 %v686
      %v688 = vpop.xlane.xlu0 %687
      %v689 = vadd.f32 %v422, %v423
      %v690 = vadd.f32 %v689, %v424
      %v691 = vadd.f32 %v690, %v425
      %v692 = vadd.f32 %v691, %v426
      %v693 = vadd.f32 %v692, %v427
      %v694 = vsel %vm504, %v428, 0.0
      %v695 = vadd.f32 %v693, %v694
      %696 = vadd.xlane.f32.xlu0 %v695
      %v697 = vpop.xlane.xlu0 %696
      %v698 = vadd.f32 %v429, %v430
      %v699 = vadd.f32 %v698, %v431
      %v700 = vadd.f32 %v699, %v432
      %v701 = vadd.f32 %v700, %v433
      %v702 = vadd.f32 %v701, %v434
      %v703 = vsel %vm504, %v435, 0.0
      %v704 = vadd.f32 %v702, %v703
      %705 = vadd.xlane.f32.xlu0 %v704
      %v706 = vpop.xlane.xlu0 %705
      %v707 = vadd.f32 %v436, %v437
      %v708 = vadd.f32 %v707, %v438
      %v709 = vadd.f32 %v708, %v439
      %v710 = vadd.f32 %v709, %v440
      %v711 = vadd.f32 %v710, %v441
      %v712 = vsel %vm504, %v442, 0.0
      %v713 = vadd.f32 %v711, %v712
      %714 = vadd.xlane.f32.xlu0 %v713
      %v715 = vpop.xlane.xlu0 %714
      %v716 = vadd.f32 %v443, %v444
      %v717 = vadd.f32 %v716, %v445
      %v718 = vadd.f32 %v717, %v446
      %v719 = vadd.f32 %v718, %v447
      %v720 = vadd.f32 %v719, %v448
      %v721 = vsel %vm504, %v449, 0.0
      %v722 = vadd.f32 %v720, %v721
      %723 = vadd.xlane.f32.xlu0 %v722
      %v724 = vpop.xlane.xlu0 %723
      %v725 = vadd.f32 %v450, %v451
      %v726 = vadd.f32 %v725, %v452
      %v727 = vadd.f32 %v726, %v453
      %v728 = vadd.f32 %v727, %v454
      %v729 = vadd.f32 %v728, %v455
      %v730 = vsel %vm504, %v456, 0.0
      %v731 = vadd.f32 %v729, %v730
      %732 = vadd.xlane.f32.xlu0 %v731
      %v733 = vpop.xlane.xlu0 %732
      %v734 = vadd.f32 %v457, %v458
      %v735 = vadd.f32 %v734, %v459
      %v736 = vadd.f32 %v735, %v460
      %v737 = vadd.f32 %v736, %v461
      %v738 = vadd.f32 %v737, %v462
      %v739 = vsel %vm504, %v463, 0.0
      %v740 = vadd.f32 %v738, %v739
      %741 = vadd.xlane.f32.xlu0 %v740
      %v742 = vpop.xlane.xlu0 %741
      %v743 = vadd.f32 %v464, %v465
      %v744 = vadd.f32 %v743, %v466
      %v745 = vadd.f32 %v744, %v467
      %v746 = vadd.f32 %v745, %v468
      %v747 = vadd.f32 %v746, %v469
      %v748 = vsel %vm504, %v470, 0.0
      %v749 = vadd.f32 %v747, %v748
      %750 = vadd.xlane.f32.xlu0 %v749
      %v751 = vpop.xlane.xlu0 %750
      %v752 = vadd.f32 %v471, %v472
      %v753 = vadd.f32 %v752, %v473
      %v754 = vadd.f32 %v753, %v474
      %v755 = vadd.f32 %v754, %v475
      %v756 = vadd.f32 %v755, %v476
      %v757 = vsel %vm504, %v477, 0.0
      %v758 = vadd.f32 %v756, %v757
      %759 = vadd.xlane.f32.xlu0 %v758
      %v760 = vpop.xlane.xlu0 %759
      %v761 = vadd.f32 %v478, %v479
      %v762 = vadd.f32 %v761, %v480
      %v763 = vadd.f32 %v762, %v481
      %v764 = vadd.f32 %v763, %v482
      %v765 = vadd.f32 %v764, %v483
      %v766 = vsel %vm504, %v484, 0.0
      %v767 = vadd.f32 %v765, %v766
      %768 = vadd.xlane.f32.xlu0 %v767
      %v769 = vpop.xlane.xlu0 %768
      %v770 = vadd.f32 %v485, %v486
      %v771 = vadd.f32 %v770, %v487
      %v772 = vadd.f32 %v771, %v488
      %v773 = vadd.f32 %v772, %v489
      %v774 = vadd.f32 %v773, %v490
      %v775 = vsel %vm504, %v491, 0.0
      %v776 = vadd.f32 %v774, %v775
      %777 = vadd.xlane.f32.xlu0 %v776
      %v778 = vpop.xlane.xlu0 %777
      %v779 = vadd.f32 %v492, %v493
      %v780 = vadd.f32 %v779, %v494
      %v781 = vadd.f32 %v780, %v495
      %v782 = vadd.f32 %v781, %v496
      %v783 = vadd.f32 %v782, %v497
      %v784 = vsel %vm504, %v498, 0.0
      %v785 = vadd.f32 %v783, %v784
      %786 = vadd.xlane.f32.xlu0 %v785
      %v787 = vpop.xlane.xlu0 %786
      %v788 = vmul.f32 %v508, 0.0012755102
      %v789 = vmul.f32 %v517, 0.0012755102
      %v790 = vmul.f32 %v526, 0.0012755102
      %v791 = vmul.f32 %v535, 0.0012755102
      %v792 = vmul.f32 %v544, 0.0012755102
      %v793 = vmul.f32 %v553, 0.0012755102
      %v794 = vmul.f32 %v562, 0.0012755102
      %v795 = vmul.f32 %v571, 0.0012755102
      %v796 = vmul.f32 %v580, 0.0012755102
      %v797 = vmul.f32 %v589, 0.0012755102
      %v798 = vmul.f32 %v598, 0.0012755102
      %v799 = vmul.f32 %v607, 0.0012755102
      %v800 = vmul.f32 %v616, 0.0012755102
      %v801 = vmul.f32 %v625, 0.0012755102
      %v802 = vmul.f32 %v634, 0.0012755102
      %v803 = vmul.f32 %v643, 0.0012755102
      %v804 = vmul.f32 %v652, 0.0012755102
      %v805 = vmul.f32 %v661, 0.0012755102
      %v806 = vmul.f32 %v670, 0.0012755102
      %v807 = vmul.f32 %v679, 0.0012755102
      %v808 = vmul.f32 %v688, 0.0012755102
      %v809 = vmul.f32 %v697, 0.0012755102
      %v810 = vmul.f32 %v706, 0.0012755102
      %v811 = vmul.f32 %v715, 0.0012755102
      %v812 = vmul.f32 %v724, 0.0012755102
      %v813 = vmul.f32 %v733, 0.0012755102
      %v814 = vmul.f32 %v742, 0.0012755102
      %v815 = vmul.f32 %v751, 0.0012755102
      %v816 = vmul.f32 %v760, 0.0012755102
      %v817 = vmul.f32 %v769, 0.0012755102
      %v818 = vmul.f32 %v778, 0.0012755102
      %v819 = vmul.f32 %v787, 0.0012755102
      %v820 = vsub.f32 %v275, %v788
      %v821 = vsub.f32 %v276, %v788
      %v822 = vsub.f32 %v277, %v788
      %v823 = vsub.f32 %v278, %v788
      %v824 = vsub.f32 %v279, %v788
      %v825 = vsub.f32 %v280, %v788
      %v826 = vsub.f32 %v281, %v788
      %v827 = vsub.f32 %v282, %v789
      %v828 = vsub.f32 %v283, %v789
      %v829 = vsub.f32 %v284, %v789
      %v830 = vsub.f32 %v285, %v789
      %v831 = vsub.f32 %v286, %v789
      %v832 = vsub.f32 %v287, %v789
      %v833 = vsub.f32 %v288, %v789
      %v834 = vsub.f32 %v289, %v790
      %v835 = vsub.f32 %v290, %v790
      %v836 = vsub.f32 %v291, %v790
      %v837 = vsub.f32 %v292, %v790
      %v838 = vsub.f32 %v293, %v790
      %v839 = vsub.f32 %v294, %v790
      %v840 = vsub.f32 %v295, %v790
      %v841 = vsub.f32 %v296, %v791
      %v842 = vsub.f32 %v297, %v791
      %v843 = vsub.f32 %v298, %v791
      %v844 = vsub.f32 %v299, %v791
      %v845 = vsub.f32 %v300, %v791
      %v846 = vsub.f32 %v301, %v791
      %v847 = vsub.f32 %v302, %v791
      %v848 = vsub.f32 %v303, %v792
      %v849 = vsub.f32 %v304, %v792
      %v850 = vsub.f32 %v305, %v792
      %v851 = vsub.f32 %v306, %v792
      %v852 = vsub.f32 %v307, %v792
      %v853 = vsub.f32 %v308, %v792
      %v854 = vsub.f32 %v309, %v792
      %v855 = vsub.f32 %v310, %v793
      %v856 = vsub.f32 %v311, %v793
      %v857 = vsub.f32 %v312, %v793
      %v858 = vsub.f32 %v313, %v793
      %v859 = vsub.f32 %v314, %v793
      %v860 = vsub.f32 %v315, %v793
      %v861 = vsub.f32 %v316, %v793
      %v862 = vsub.f32 %v317, %v794
      %v863 = vsub.f32 %v318, %v794
      %v864 = vsub.f32 %v319, %v794
      %v865 = vsub.f32 %v320, %v794
      %v866 = vsub.f32 %v321, %v794
      %v867 = vsub.f32 %v322, %v794
      %v868 = vsub.f32 %v323, %v794
      %v869 = vsub.f32 %v324, %v795
      %v870 = vsub.f32 %v325, %v795
      %v871 = vsub.f32 %v326, %v795
      %v872 = vsub.f32 %v327, %v795
      %v873 = vsub.f32 %v328, %v795
      %v874 = vsub.f32 %v329, %v795
      %v875 = vsub.f32 %v330, %v795
      %v876 = vsub.f32 %v331, %v796
      %v877 = vsub.f32 %v332, %v796
      %v878 = vsub.f32 %v333, %v796
      %v879 = vsub.f32 %v334, %v796
      %v880 = vsub.f32 %v335, %v796
      %v881 = vsub.f32 %v336, %v796
      %v882 = vsub.f32 %v337, %v796
      %v883 = vsub.f32 %v338, %v797
      %v884 = vsub.f32 %v339, %v797
      %v885 = vsub.f32 %v340, %v797
      %v886 = vsub.f32 %v341, %v797
      %v887 = vsub.f32 %v342, %v797
      %v888 = vsub.f32 %v343, %v797
      %v889 = vsub.f32 %v344, %v797
      %v890 = vsub.f32 %v345, %v798
      %v891 = vsub.f32 %v346, %v798
      %v892 = vsub.f32 %v347, %v798
      %v893 = vsub.f32 %v348, %v798
      %v894 = vsub.f32 %v349, %v798
      %v895 = vsub.f32 %v350, %v798
      %v896 = vsub.f32 %v351, %v798
      %v897 = vsub.f32 %v352, %v799
      %v898 = vsub.f32 %v353, %v799
      %v899 = vsub.f32 %v354, %v799
      %v900 = vsub.f32 %v355, %v799
      %v901 = vsub.f32 %v356, %v799
      %v902 = vsub.f32 %v357, %v799
      %v903 = vsub.f32 %v358, %v799
      %v904 = vsub.f32 %v359, %v800
      %v905 = vsub.f32 %v360, %v800
      %v906 = vsub.f32 %v361, %v800
      %v907 = vsub.f32 %v362, %v800
      %v908 = vsub.f32 %v363, %v800
      %v909 = vsub.f32 %v364, %v800
      %v910 = vsub.f32 %v365, %v800
      %v911 = vsub.f32 %v366, %v801
      %v912 = vsub.f32 %v367, %v801
      %v913 = vsub.f32 %v368, %v801
      %v914 = vsub.f32 %v369, %v801
      %v915 = vsub.f32 %v370, %v801
      %v916 = vsub.f32 %v371, %v801
      %v917 = vsub.f32 %v372, %v801
      %v918 = vsub.f32 %v373, %v802
      %v919 = vsub.f32 %v374, %v802
      %v920 = vsub.f32 %v375, %v802
      %v921 = vsub.f32 %v376, %v802
      %v922 = vsub.f32 %v377, %v802
      %v923 = vsub.f32 %v378, %v802
      %v924 = vsub.f32 %v379, %v802
      %v925 = vsub.f32 %v380, %v803
      %v926 = vsub.f32 %v381, %v803
      %v927 = vsub.f32 %v382, %v803
      %v928 = vsub.f32 %v383, %v803
      %v929 = vsub.f32 %v384, %v803
      %v930 = vsub.f32 %v385, %v803
      %v931 = vsub.f32 %v386, %v803
      %v932 = vsub.f32 %v387, %v804
      %v933 = vsub.f32 %v388, %v804
      %v934 = vsub.f32 %v389, %v804
      %v935 = vsub.f32 %v390, %v804
      %v936 = vsub.f32 %v391, %v804
      %v937 = vsub.f32 %v392, %v804
      %v938 = vsub.f32 %v393, %v804
      %v939 = vsub.f32 %v394, %v805
      %v940 = vsub.f32 %v395, %v805
      %v941 = vsub.f32 %v396, %v805
      %v942 = vsub.f32 %v397, %v805
      %v943 = vsub.f32 %v398, %v805
      %v944 = vsub.f32 %v399, %v805
      %v945 = vsub.f32 %v400, %v805
      %v946 = vsub.f32 %v401, %v806
      %v947 = vsub.f32 %v402, %v806
      %v948 = vsub.f32 %v403, %v806
      %v949 = vsub.f32 %v404, %v806
      %v950 = vsub.f32 %v405, %v806
      %v951 = vsub.f32 %v406, %v806
      %v952 = vsub.f32 %v407, %v806
      %v953 = vsub.f32 %v408, %v807
      %v954 = vsub.f32 %v409, %v807
      %v955 = vsub.f32 %v410, %v807
      %v956 = vsub.f32 %v411, %v807
      %v957 = vsub.f32 %v412, %v807
      %v958 = vsub.f32 %v413, %v807
      %v959 = vsub.f32 %v414, %v807
      %v960 = vsub.f32 %v415, %v808
      %v961 = vsub.f32 %v416, %v808
      %v962 = vsub.f32 %v417, %v808
      %v963 = vsub.f32 %v418, %v808
      %v964 = vsub.f32 %v419, %v808
      %v965 = vsub.f32 %v420, %v808
      %v966 = vsub.f32 %v421, %v808
      %v967 = vsub.f32 %v422, %v809
      %v968 = vsub.f32 %v423, %v809
      %v969 = vsub.f32 %v424, %v809
      %v970 = vsub.f32 %v425, %v809
      %v971 = vsub.f32 %v426, %v809
      %v972 = vsub.f32 %v427, %v809
      %v973 = vsub.f32 %v428, %v809
      %v974 = vsub.f32 %v429, %v810
      %v975 = vsub.f32 %v430, %v810
      %v976 = vsub.f32 %v431, %v810
      %v977 = vsub.f32 %v432, %v810
      %v978 = vsub.f32 %v433, %v810
      %v979 = vsub.f32 %v434, %v810
      %v980 = vsub.f32 %v435, %v810
      %v981 = vsub.f32 %v436, %v811
      %v982 = vsub.f32 %v437, %v811
      %v983 = vsub.f32 %v438, %v811
      %v984 = vsub.f32 %v439, %v811
      %v985 = vsub.f32 %v440, %v811
      %v986 = vsub.f32 %v441, %v811
      %v987 = vsub.f32 %v442, %v811
      %v988 = vsub.f32 %v443, %v812
      %v989 = vsub.f32 %v444, %v812
      %v990 = vsub.f32 %v445, %v812
      %v991 = vsub.f32 %v446, %v812
      %v992 = vsub.f32 %v447, %v812
      %v993 = vsub.f32 %v448, %v812
      %v994 = vsub.f32 %v449, %v812
      %v995 = vsub.f32 %v450, %v813
      %v996 = vsub.f32 %v451, %v813
      %v997 = vsub.f32 %v452, %v813
      %v998 = vsub.f32 %v453, %v813
      %v999 = vsub.f32 %v454, %v813
      %v1000 = vsub.f32 %v455, %v813
      %v1001 = vsub.f32 %v456, %v813
      %v1002 = vsub.f32 %v457, %v814
      %v1003 = vsub.f32 %v458, %v814
      %v1004 = vsub.f32 %v459, %v814
      %v1005 = vsub.f32 %v460, %v814
      %v1006 = vsub.f32 %v461, %v814
      %v1007 = vsub.f32 %v462, %v814
      %v1008 = vsub.f32 %v463, %v814
      %v1009 = vsub.f32 %v464, %v815
      %v1010 = vsub.f32 %v465, %v815
      %v1011 = vsub.f32 %v466, %v815
      %v1012 = vsub.f32 %v467, %v815
      %v1013 = vsub.f32 %v468, %v815
      %v1014 = vsub.f32 %v469, %v815
      %v1015 = vsub.f32 %v470, %v815
      %v1016 = vsub.f32 %v471, %v816
      %v1017 = vsub.f32 %v472, %v816
      %v1018 = vsub.f32 %v473, %v816
      %v1019 = vsub.f32 %v474, %v816
      %v1020 = vsub.f32 %v475, %v816
      %v1021 = vsub.f32 %v476, %v816
      %v1022 = vsub.f32 %v477, %v816
      %v1023 = vsub.f32 %v478, %v817
      %v1024 = vsub.f32 %v479, %v817
      %v1025 = vsub.f32 %v480, %v817
      %v1026 = vsub.f32 %v481, %v817
      %v1027 = vsub.f32 %v482, %v817
      %v1028 = vsub.f32 %v483, %v817
      %v1029 = vsub.f32 %v484, %v817
      %v1030 = vsub.f32 %v485, %v818
      %v1031 = vsub.f32 %v486, %v818
      %v1032 = vsub.f32 %v487, %v818
      %v1033 = vsub.f32 %v488, %v818
      %v1034 = vsub.f32 %v489, %v818
      %v1035 = vsub.f32 %v490, %v818
      %v1036 = vsub.f32 %v491, %v818
      %v1037 = vsub.f32 %v492, %v819
      %v1038 = vsub.f32 %v493, %v819
      %v1039 = vsub.f32 %v494, %v819
      %v1040 = vsub.f32 %v495, %v819
      %v1041 = vsub.f32 %v496, %v819
      %v1042 = vsub.f32 %v497, %v819
      %v1043 = vsub.f32 %v498, %v819
      %v1044 = vmul.f32 %v820, %v820
      %v1045 = vmul.f32 %v821, %v821
      %v1046 = vmul.f32 %v822, %v822
      %v1047 = vmul.f32 %v823, %v823
      %v1048 = vmul.f32 %v824, %v824
      %v1049 = vmul.f32 %v825, %v825
      %v1050 = vmul.f32 %v826, %v826
      %v1051 = vmul.f32 %v827, %v827
      %v1052 = vmul.f32 %v828, %v828
      %v1053 = vmul.f32 %v829, %v829
      %v1054 = vmul.f32 %v830, %v830
      %v1055 = vmul.f32 %v831, %v831
      %v1056 = vmul.f32 %v832, %v832
      %v1057 = vmul.f32 %v833, %v833
      %v1058 = vmul.f32 %v834, %v834
      %v1059 = vmul.f32 %v835, %v835
      %v1060 = vmul.f32 %v836, %v836
      %v1061 = vmul.f32 %v837, %v837
      %v1062 = vmul.f32 %v838, %v838
      %v1063 = vmul.f32 %v839, %v839
      %v1064 = vmul.f32 %v840, %v840
      %v1065 = vmul.f32 %v841, %v841
      %v1066 = vmul.f32 %v842, %v842
      %v1067 = vmul.f32 %v843, %v843
      %v1068 = vmul.f32 %v844, %v844
      %v1069 = vmul.f32 %v845, %v845
      %v1070 = vmul.f32 %v846, %v846
      %v1071 = vmul.f32 %v847, %v847
      %v1072 = vmul.f32 %v848, %v848
      %v1073 = vmul.f32 %v849, %v849
      %v1074 = vmul.f32 %v850, %v850
      %v1075 = vmul.f32 %v851, %v851
      %v1076 = vmul.f32 %v852, %v852
      %v1077 = vmul.f32 %v853, %v853
      %v1078 = vmul.f32 %v854, %v854
      %v1079 = vmul.f32 %v855, %v855
      %v1080 = vmul.f32 %v856, %v856
      %v1081 = vmul.f32 %v857, %v857
      %v1082 = vmul.f32 %v858, %v858
      %v1083 = vmul.f32 %v859, %v859
      %v1084 = vmul.f32 %v860, %v860
      %v1085 = vmul.f32 %v861, %v861
      %v1086 = vmul.f32 %v862, %v862
      %v1087 = vmul.f32 %v863, %v863
      %v1088 = vmul.f32 %v864, %v864
      %v1089 = vmul.f32 %v865, %v865
      %v1090 = vmul.f32 %v866, %v866
      %v1091 = vmul.f32 %v867, %v867
      %v1092 = vmul.f32 %v868, %v868
      %v1093 = vmul.f32 %v869, %v869
      %v1094 = vmul.f32 %v870, %v870
      %v1095 = vmul.f32 %v871, %v871
      %v1096 = vmul.f32 %v872, %v872
      %v1097 = vmul.f32 %v873, %v873
      %v1098 = vmul.f32 %v874, %v874
      %v1099 = vmul.f32 %v875, %v875
      %v1100 = vmul.f32 %v876, %v876
      %v1101 = vmul.f32 %v877, %v877
      %v1102 = vmul.f32 %v878, %v878
      %v1103 = vmul.f32 %v879, %v879
      %v1104 = vmul.f32 %v880, %v880
      %v1105 = vmul.f32 %v881, %v881
      %v1106 = vmul.f32 %v882, %v882
      %v1107 = vmul.f32 %v883, %v883
      %v1108 = vmul.f32 %v884, %v884
      %v1109 = vmul.f32 %v885, %v885
      %v1110 = vmul.f32 %v886, %v886
      %v1111 = vmul.f32 %v887, %v887
      %v1112 = vmul.f32 %v888, %v888
      %v1113 = vmul.f32 %v889, %v889
      %v1114 = vmul.f32 %v890, %v890
      %v1115 = vmul.f32 %v891, %v891
      %v1116 = vmul.f32 %v892, %v892
      %v1117 = vmul.f32 %v893, %v893
      %v1118 = vmul.f32 %v894, %v894
      %v1119 = vmul.f32 %v895, %v895
      %v1120 = vmul.f32 %v896, %v896
      %v1121 = vmul.f32 %v897, %v897
      %v1122 = vmul.f32 %v898, %v898
      %v1123 = vmul.f32 %v899, %v899
      %v1124 = vmul.f32 %v900, %v900
      %v1125 = vmul.f32 %v901, %v901
      %v1126 = vmul.f32 %v902, %v902
      %v1127 = vmul.f32 %v903, %v903
      %v1128 = vmul.f32 %v904, %v904
      %v1129 = vmul.f32 %v905, %v905
      %v1130 = vmul.f32 %v906, %v906
      %v1131 = vmul.f32 %v907, %v907
      %v1132 = vmul.f32 %v908, %v908
      %v1133 = vmul.f32 %v909, %v909
      %v1134 = vmul.f32 %v910, %v910
      %v1135 = vmul.f32 %v911, %v911
      %v1136 = vmul.f32 %v912, %v912
      %v1137 = vmul.f32 %v913, %v913
      %v1138 = vmul.f32 %v914, %v914
      %v1139 = vmul.f32 %v915, %v915
      %v1140 = vmul.f32 %v916, %v916
      %v1141 = vmul.f32 %v917, %v917
      %v1142 = vmul.f32 %v918, %v918
      %v1143 = vmul.f32 %v919, %v919
      %v1144 = vmul.f32 %v920, %v920
      %v1145 = vmul.f32 %v921, %v921
      %v1146 = vmul.f32 %v922, %v922
      %v1147 = vmul.f32 %v923, %v923
      %v1148 = vmul.f32 %v924, %v924
      %v1149 = vmul.f32 %v925, %v925
      %v1150 = vmul.f32 %v926, %v926
      %v1151 = vmul.f32 %v927, %v927
      %v1152 = vmul.f32 %v928, %v928
      %v1153 = vmul.f32 %v929, %v929
      %v1154 = vmul.f32 %v930, %v930
      %v1155 = vmul.f32 %v931, %v931
      %v1156 = vmul.f32 %v932, %v932
      %v1157 = vmul.f32 %v933, %v933
      %v1158 = vmul.f32 %v934, %v934
      %v1159 = vmul.f32 %v935, %v935
      %v1160 = vmul.f32 %v936, %v936
      %v1161 = vmul.f32 %v937, %v937
      %v1162 = vmul.f32 %v938, %v938
      %v1163 = vmul.f32 %v939, %v939
      %v1164 = vmul.f32 %v940, %v940
      %v1165 = vmul.f32 %v941, %v941
      %v1166 = vmul.f32 %v942, %v942
      %v1167 = vmul.f32 %v943, %v943
      %v1168 = vmul.f32 %v944, %v944
      %v1169 = vmul.f32 %v945, %v945
      %v1170 = vmul.f32 %v946, %v946
      %v1171 = vmul.f32 %v947, %v947
      %v1172 = vmul.f32 %v948, %v948
      %v1173 = vmul.f32 %v949, %v949
      %v1174 = vmul.f32 %v950, %v950
      %v1175 = vmul.f32 %v951, %v951
      %v1176 = vmul.f32 %v952, %v952
      %v1177 = vmul.f32 %v953, %v953
      %v1178 = vmul.f32 %v954, %v954
      %v1179 = vmul.f32 %v955, %v955
      %v1180 = vmul.f32 %v956, %v956
      %v1181 = vmul.f32 %v957, %v957
      %v1182 = vmul.f32 %v958, %v958
      %v1183 = vmul.f32 %v959, %v959
      %v1184 = vmul.f32 %v960, %v960
      %v1185 = vmul.f32 %v961, %v961
      %v1186 = vmul.f32 %v962, %v962
      %v1187 = vmul.f32 %v963, %v963
      %v1188 = vmul.f32 %v964, %v964
      %v1189 = vmul.f32 %v965, %v965
      %v1190 = vmul.f32 %v966, %v966
      %v1191 = vmul.f32 %v967, %v967
      %v1192 = vmul.f32 %v968, %v968
      %v1193 = vmul.f32 %v969, %v969
      %v1194 = vmul.f32 %v970, %v970
      %v1195 = vmul.f32 %v971, %v971
      %v1196 = vmul.f32 %v972, %v972
      %v1197 = vmul.f32 %v973, %v973
      %v1198 = vmul.f32 %v974, %v974
      %v1199 = vmul.f32 %v975, %v975
      %v1200 = vmul.f32 %v976, %v976
      %v1201 = vmul.f32 %v977, %v977
      %v1202 = vmul.f32 %v978, %v978
      %v1203 = vmul.f32 %v979, %v979
      %v1204 = vmul.f32 %v980, %v980
      %v1205 = vmul.f32 %v981, %v981
      %v1206 = vmul.f32 %v982, %v982
      %v1207 = vmul.f32 %v983, %v983
      %v1208 = vmul.f32 %v984, %v984
      %v1209 = vmul.f32 %v985, %v985
      %v1210 = vmul.f32 %v986, %v986
      %v1211 = vmul.f32 %v987, %v987
      %v1212 = vmul.f32 %v988, %v988
      %v1213 = vmul.f32 %v989, %v989
      %v1214 = vmul.f32 %v990, %v990
      %v1215 = vmul.f32 %v991, %v991
      %v1216 = vmul.f32 %v992, %v992
      %v1217 = vmul.f32 %v993, %v993
      %v1218 = vmul.f32 %v994, %v994
      %v1219 = vmul.f32 %v995, %v995
      %v1220 = vmul.f32 %v996, %v996
      %v1221 = vmul.f32 %v997, %v997
      %v1222 = vmul.f32 %v998, %v998
      %v1223 = vmul.f32 %v999, %v999
      %v1224 = vmul.f32 %v1000, %v1000
      %v1225 = vmul.f32 %v1001, %v1001
      %v1226 = vmul.f32 %v1002, %v1002
      %v1227 = vmul.f32 %v1003, %v1003
      %v1228 = vmul.f32 %v1004, %v1004
      %v1229 = vmul.f32 %v1005, %v1005
      %v1230 = vmul.f32 %v1006, %v1006
      %v1231 = vmul.f32 %v1007, %v1007
      %v1232 = vmul.f32 %v1008, %v1008
      %v1233 = vmul.f32 %v1009, %v1009
      %v1234 = vmul.f32 %v1010, %v1010
      %v1235 = vmul.f32 %v1011, %v1011
      %v1236 = vmul.f32 %v1012, %v1012
      %v1237 = vmul.f32 %v1013, %v1013
      %v1238 = vmul.f32 %v1014, %v1014
      %v1239 = vmul.f32 %v1015, %v1015
      %v1240 = vmul.f32 %v1016, %v1016
      %v1241 = vmul.f32 %v1017, %v1017
      %v1242 = vmul.f32 %v1018, %v1018
      %v1243 = vmul.f32 %v1019, %v1019
      %v1244 = vmul.f32 %v1020, %v1020
      %v1245 = vmul.f32 %v1021, %v1021
      %v1246 = vmul.f32 %v1022, %v1022
      %v1247 = vmul.f32 %v1023, %v1023
      %v1248 = vmul.f32 %v1024, %v1024
      %v1249 = vmul.f32 %v1025, %v1025
      %v1250 = vmul.f32 %v1026, %v1026
      %v1251 = vmul.f32 %v1027, %v1027
      %v1252 = vmul.f32 %v1028, %v1028
      %v1253 = vmul.f32 %v1029, %v1029
      %v1254 = vmul.f32 %v1030, %v1030
      %v1255 = vmul.f32 %v1031, %v1031
      %v1256 = vmul.f32 %v1032, %v1032
      %v1257 = vmul.f32 %v1033, %v1033
      %v1258 = vmul.f32 %v1034, %v1034
      %v1259 = vmul.f32 %v1035, %v1035
      %v1260 = vmul.f32 %v1036, %v1036
      %v1261 = vmul.f32 %v1037, %v1037
      %v1262 = vmul.f32 %v1038, %v1038
      %v1263 = vmul.f32 %v1039, %v1039
      %v1264 = vmul.f32 %v1040, %v1040
      %v1265 = vmul.f32 %v1041, %v1041
      %v1266 = vmul.f32 %v1042, %v1042
      %v1267 = vmul.f32 %v1043, %v1043
      %v1268 = vadd.f32 %v1044, %v1045
      %v1269 = vadd.f32 %v1268, %v1046
      %v1270 = vadd.f32 %v1269, %v1047
      %v1271 = vadd.f32 %v1270, %v1048
      %v1272 = vadd.f32 %v1271, %v1049
      %v1273 = vsel %vm504, %v1050, 0.0
      %v1274 = vadd.f32 %v1272, %v1273
      %1275 = vadd.xlane.f32.xlu0 %v1274
      %v1276 = vpop.xlane.xlu0 %1275
      %v1277 = vadd.f32 %v1051, %v1052
      %v1278 = vadd.f32 %v1277, %v1053
      %v1279 = vadd.f32 %v1278, %v1054
      %v1280 = vadd.f32 %v1279, %v1055
      %v1281 = vadd.f32 %v1280, %v1056
      %v1282 = vsel %vm504, %v1057, 0.0
      %v1283 = vadd.f32 %v1281, %v1282
      %1284 = vadd.xlane.f32.xlu0 %v1283
      %v1285 = vpop.xlane.xlu0 %1284
      %v1286 = vadd.f32 %v1058, %v1059
      %v1287 = vadd.f32 %v1286, %v1060
      %v1288 = vadd.f32 %v1287, %v1061
      %v1289 = vadd.f32 %v1288, %v1062
      %v1290 = vadd.f32 %v1289, %v1063
      %v1291 = vsel %vm504, %v1064, 0.0
      %v1292 = vadd.f32 %v1290, %v1291
      %1293 = vadd.xlane.f32.xlu0 %v1292
      %v1294 = vpop.xlane.xlu0 %1293
      %v1295 = vadd.f32 %v1065, %v1066
      %v1296 = vadd.f32 %v1295, %v1067
      %v1297 = vadd.f32 %v1296, %v1068
      %v1298 = vadd.f32 %v1297, %v1069
      %v1299 = vadd.f32 %v1298, %v1070
      %v1300 = vsel %vm504, %v1071, 0.0
      %v1301 = vadd.f32 %v1299, %v1300
      %1302 = vadd.xlane.f32.xlu0 %v1301
      %v1303 = vpop.xlane.xlu0 %1302
      %v1304 = vadd.f32 %v1072, %v1073
      %v1305 = vadd.f32 %v1304, %v1074
      %v1306 = vadd.f32 %v1305, %v1075
      %v1307 = vadd.f32 %v1306, %v1076
      %v1308 = vadd.f32 %v1307, %v1077
      %v1309 = vsel %vm504, %v1078, 0.0
      %v1310 = vadd.f32 %v1308, %v1309
      %1311 = vadd.xlane.f32.xlu0 %v1310
      %v1312 = vpop.xlane.xlu0 %1311
      %v1313 = vadd.f32 %v1079, %v1080
      %v1314 = vadd.f32 %v1313, %v1081
      %v1315 = vadd.f32 %v1314, %v1082
      %v1316 = vadd.f32 %v1315, %v1083
      %v1317 = vadd.f32 %v1316, %v1084
      %v1318 = vsel %vm504, %v1085, 0.0
      %v1319 = vadd.f32 %v1317, %v1318
      %1320 = vadd.xlane.f32.xlu0 %v1319
      %v1321 = vpop.xlane.xlu0 %1320
      %v1322 = vadd.f32 %v1086, %v1087
      %v1323 = vadd.f32 %v1322, %v1088
      %v1324 = vadd.f32 %v1323, %v1089
      %v1325 = vadd.f32 %v1324, %v1090
      %v1326 = vadd.f32 %v1325, %v1091
      %v1327 = vsel %vm504, %v1092, 0.0
      %v1328 = vadd.f32 %v1326, %v1327
      %1329 = vadd.xlane.f32.xlu0 %v1328
      %v1330 = vpop.xlane.xlu0 %1329
      %v1331 = vadd.f32 %v1093, %v1094
      %v1332 = vadd.f32 %v1331, %v1095
      %v1333 = vadd.f32 %v1332, %v1096
      %v1334 = vadd.f32 %v1333, %v1097
      %v1335 = vadd.f32 %v1334, %v1098
      %v1336 = vsel %vm504, %v1099, 0.0
      %v1337 = vadd.f32 %v1335, %v1336
      %1338 = vadd.xlane.f32.xlu0 %v1337
      %v1339 = vpop.xlane.xlu0 %1338
      %v1340 = vadd.f32 %v1100, %v1101
      %v1341 = vadd.f32 %v1340, %v1102
      %v1342 = vadd.f32 %v1341, %v1103
      %v1343 = vadd.f32 %v1342, %v1104
      %v1344 = vadd.f32 %v1343, %v1105
      %v1345 = vsel %vm504, %v1106, 0.0
      %v1346 = vadd.f32 %v1344, %v1345
      %1347 = vadd.xlane.f32.xlu0 %v1346
      %v1348 = vpop.xlane.xlu0 %1347
      %v1349 = vadd.f32 %v1107, %v1108
      %v1350 = vadd.f32 %v1349, %v1109
      %v1351 = vadd.f32 %v1350, %v1110
      %v1352 = vadd.f32 %v1351, %v1111
      %v1353 = vadd.f32 %v1352, %v1112
      %v1354 = vsel %vm504, %v1113, 0.0
      %v1355 = vadd.f32 %v1353, %v1354
      %1356 = vadd.xlane.f32.xlu0 %v1355
      %v1357 = vpop.xlane.xlu0 %1356
      %v1358 = vadd.f32 %v1114, %v1115
      %v1359 = vadd.f32 %v1358, %v1116
      %v1360 = vadd.f32 %v1359, %v1117
      %v1361 = vadd.f32 %v1360, %v1118
      %v1362 = vadd.f32 %v1361, %v1119
      %v1363 = vsel %vm504, %v1120, 0.0
      %v1364 = vadd.f32 %v1362, %v1363
      %1365 = vadd.xlane.f32.xlu0 %v1364
      %v1366 = vpop.xlane.xlu0 %1365
      %v1367 = vadd.f32 %v1121, %v1122
      %v1368 = vadd.f32 %v1367, %v1123
      %v1369 = vadd.f32 %v1368, %v1124
      %v1370 = vadd.f32 %v1369, %v1125
      %v1371 = vadd.f32 %v1370, %v1126
      %v1372 = vsel %vm504, %v1127, 0.0
      %v1373 = vadd.f32 %v1371, %v1372
      %1374 = vadd.xlane.f32.xlu0 %v1373
      %v1375 = vpop.xlane.xlu0 %1374
      %v1376 = vadd.f32 %v1128, %v1129
      %v1377 = vadd.f32 %v1376, %v1130
      %v1378 = vadd.f32 %v1377, %v1131
      %v1379 = vadd.f32 %v1378, %v1132
      %v1380 = vadd.f32 %v1379, %v1133
      %v1381 = vsel %vm504, %v1134, 0.0
      %v1382 = vadd.f32 %v1380, %v1381
      %1383 = vadd.xlane.f32.xlu0 %v1382
      %v1384 = vpop.xlane.xlu0 %1383
      %v1385 = vadd.f32 %v1135, %v1136
      %v1386 = vadd.f32 %v1385, %v1137
      %v1387 = vadd.f32 %v1386, %v1138
      %v1388 = vadd.f32 %v1387, %v1139
      %v1389 = vadd.f32 %v1388, %v1140
      %v1390 = vsel %vm504, %v1141, 0.0
      %v1391 = vadd.f32 %v1389, %v1390
      %1392 = vadd.xlane.f32.xlu0 %v1391
      %v1393 = vpop.xlane.xlu0 %1392
      %v1394 = vadd.f32 %v1142, %v1143
      %v1395 = vadd.f32 %v1394, %v1144
      %v1396 = vadd.f32 %v1395, %v1145
      %v1397 = vadd.f32 %v1396, %v1146
      %v1398 = vadd.f32 %v1397, %v1147
      %v1399 = vsel %vm504, %v1148, 0.0
      %v1400 = vadd.f32 %v1398, %v1399
      %1401 = vadd.xlane.f32.xlu0 %v1400
      %v1402 = vpop.xlane.xlu0 %1401
      %v1403 = vadd.f32 %v1149, %v1150
      %v1404 = vadd.f32 %v1403, %v1151
      %v1405 = vadd.f32 %v1404, %v1152
      %v1406 = vadd.f32 %v1405, %v1153
      %v1407 = vadd.f32 %v1406, %v1154
      %v1408 = vsel %vm504, %v1155, 0.0
      %v1409 = vadd.f32 %v1407, %v1408
      %1410 = vadd.xlane.f32.xlu0 %v1409
      %v1411 = vpop.xlane.xlu0 %1410
      %v1412 = vadd.f32 %v1156, %v1157
      %v1413 = vadd.f32 %v1412, %v1158
      %v1414 = vadd.f32 %v1413, %v1159
      %v1415 = vadd.f32 %v1414, %v1160
      %v1416 = vadd.f32 %v1415, %v1161
      %v1417 = vsel %vm504, %v1162, 0.0
      %v1418 = vadd.f32 %v1416, %v1417
      %1419 = vadd.xlane.f32.xlu0 %v1418
      %v1420 = vpop.xlane.xlu0 %1419
      %v1421 = vadd.f32 %v1163, %v1164
      %v1422 = vadd.f32 %v1421, %v1165
      %v1423 = vadd.f32 %v1422, %v1166
      %v1424 = vadd.f32 %v1423, %v1167
      %v1425 = vadd.f32 %v1424, %v1168
      %v1426 = vsel %vm504, %v1169, 0.0
      %v1427 = vadd.f32 %v1425, %v1426
      %1428 = vadd.xlane.f32.xlu0 %v1427
      %v1429 = vpop.xlane.xlu0 %1428
      %v1430 = vadd.f32 %v1170, %v1171
      %v1431 = vadd.f32 %v1430, %v1172
      %v1432 = vadd.f32 %v1431, %v1173
      %v1433 = vadd.f32 %v1432, %v1174
      %v1434 = vadd.f32 %v1433, %v1175
      %v1435 = vsel %vm504, %v1176, 0.0
      %v1436 = vadd.f32 %v1434, %v1435
      %1437 = vadd.xlane.f32.xlu0 %v1436
      %v1438 = vpop.xlane.xlu0 %1437
      %v1439 = vadd.f32 %v1177, %v1178
      %v1440 = vadd.f32 %v1439, %v1179
      %v1441 = vadd.f32 %v1440, %v1180
      %v1442 = vadd.f32 %v1441, %v1181
      %v1443 = vadd.f32 %v1442, %v1182
      %v1444 = vsel %vm504, %v1183, 0.0
      %v1445 = vadd.f32 %v1443, %v1444
      %1446 = vadd.xlane.f32.xlu0 %v1445
      %v1447 = vpop.xlane.xlu0 %1446
      %v1448 = vadd.f32 %v1184, %v1185
      %v1449 = vadd.f32 %v1448, %v1186
      %v1450 = vadd.f32 %v1449, %v1187
      %v1451 = vadd.f32 %v1450, %v1188
      %v1452 = vadd.f32 %v1451, %v1189
      %v1453 = vsel %vm504, %v1190, 0.0
      %v1454 = vadd.f32 %v1452, %v1453
      %1455 = vadd.xlane.f32.xlu0 %v1454
      %v1456 = vpop.xlane.xlu0 %1455
      %v1457 = vadd.f32 %v1191, %v1192
      %v1458 = vadd.f32 %v1457, %v1193
      %v1459 = vadd.f32 %v1458, %v1194
      %v1460 = vadd.f32 %v1459, %v1195
      %v1461 = vadd.f32 %v1460, %v1196
      %v1462 = vsel %vm504, %v1197, 0.0
      %v1463 = vadd.f32 %v1461, %v1462
      %1464 = vadd.xlane.f32.xlu0 %v1463
      %v1465 = vpop.xlane.xlu0 %1464
      %v1466 = vadd.f32 %v1198, %v1199
      %v1467 = vadd.f32 %v1466, %v1200
      %v1468 = vadd.f32 %v1467, %v1201
      %v1469 = vadd.f32 %v1468, %v1202
      %v1470 = vadd.f32 %v1469, %v1203
      %v1471 = vsel %vm504, %v1204, 0.0
      %v1472 = vadd.f32 %v1470, %v1471
      %1473 = vadd.xlane.f32.xlu0 %v1472
      %v1474 = vpop.xlane.xlu0 %1473
      %v1475 = vadd.f32 %v1205, %v1206
      %v1476 = vadd.f32 %v1475, %v1207
      %v1477 = vadd.f32 %v1476, %v1208
      %v1478 = vadd.f32 %v1477, %v1209
      %v1479 = vadd.f32 %v1478, %v1210
      %v1480 = vsel %vm504, %v1211, 0.0
      %v1481 = vadd.f32 %v1479, %v1480
      %1482 = vadd.xlane.f32.xlu0 %v1481
      %v1483 = vpop.xlane.xlu0 %1482
      %v1484 = vadd.f32 %v1212, %v1213
      %v1485 = vadd.f32 %v1484, %v1214
      %v1486 = vadd.f32 %v1485, %v1215
      %v1487 = vadd.f32 %v1486, %v1216
      %v1488 = vadd.f32 %v1487, %v1217
      %v1489 = vsel %vm504, %v1218, 0.0
      %v1490 = vadd.f32 %v1488, %v1489
      %1491 = vadd.xlane.f32.xlu0 %v1490
      %v1492 = vpop.xlane.xlu0 %1491
      %v1493 = vadd.f32 %v1219, %v1220
      %v1494 = vadd.f32 %v1493, %v1221
      %v1495 = vadd.f32 %v1494, %v1222
      %v1496 = vadd.f32 %v1495, %v1223
      %v1497 = vadd.f32 %v1496, %v1224
      %v1498 = vsel %vm504, %v1225, 0.0
      %v1499 = vadd.f32 %v1497, %v1498
      %1500 = vadd.xlane.f32.xlu0 %v1499
      %v1501 = vpop.xlane.xlu0 %1500
      %v1502 = vadd.f32 %v1226, %v1227
      %v1503 = vadd.f32 %v1502, %v1228
      %v1504 = vadd.f32 %v1503, %v1229
      %v1505 = vadd.f32 %v1504, %v1230
      %v1506 = vadd.f32 %v1505, %v1231
      %v1507 = vsel %vm504, %v1232, 0.0
      %v1508 = vadd.f32 %v1506, %v1507
      %1509 = vadd.xlane.f32.xlu0 %v1508
      %v1510 = vpop.xlane.xlu0 %1509
      %v1511 = vadd.f32 %v1233, %v1234
      %v1512 = vadd.f32 %v1511, %v1235
      %v1513 = vadd.f32 %v1512, %v1236
      %v1514 = vadd.f32 %v1513, %v1237
      %v1515 = vadd.f32 %v1514, %v1238
      %v1516 = vsel %vm504, %v1239, 0.0
      %v1517 = vadd.f32 %v1515, %v1516
      %1518 = vadd.xlane.f32.xlu0 %v1517
      %v1519 = vpop.xlane.xlu0 %1518
      %v1520 = vadd.f32 %v1240, %v1241
      %v1521 = vadd.f32 %v1520, %v1242
      %v1522 = vadd.f32 %v1521, %v1243
      %v1523 = vadd.f32 %v1522, %v1244
      %v1524 = vadd.f32 %v1523, %v1245
      %v1525 = vsel %vm504, %v1246, 0.0
      %v1526 = vadd.f32 %v1524, %v1525
      %1527 = vadd.xlane.f32.xlu0 %v1526
      %v1528 = vpop.xlane.xlu0 %1527
      %v1529 = vadd.f32 %v1247, %v1248
      %v1530 = vadd.f32 %v1529, %v1249
      %v1531 = vadd.f32 %v1530, %v1250
      %v1532 = vadd.f32 %v1531, %v1251
      %v1533 = vadd.f32 %v1532, %v1252
      %v1534 = vsel %vm504, %v1253, 0.0
      %v1535 = vadd.f32 %v1533, %v1534
      %1536 = vadd.xlane.f32.xlu0 %v1535
      %v1537 = vpop.xlane.xlu0 %1536
      %v1538 = vadd.f32 %v1254, %v1255
      %v1539 = vadd.f32 %v1538, %v1256
      %v1540 = vadd.f32 %v1539, %v1257
      %v1541 = vadd.f32 %v1540, %v1258
      %v1542 = vadd.f32 %v1541, %v1259
      %v1543 = vsel %vm504, %v1260, 0.0
      %v1544 = vadd.f32 %v1542, %v1543
      %1545 = vadd.xlane.f32.xlu0 %v1544
      %v1546 = vpop.xlane.xlu0 %1545
      %v1547 = vadd.f32 %v1261, %v1262
      %v1548 = vadd.f32 %v1547, %v1263
      %v1549 = vadd.f32 %v1548, %v1264
      %v1550 = vadd.f32 %v1549, %v1265
      %v1551 = vadd.f32 %v1550, %v1266
      %v1552 = vsel %vm504, %v1267, 0.0
      %v1553 = vadd.f32 %v1551, %v1552
      %1554 = vadd.xlane.f32.xlu0 %v1553
      %v1555 = vpop.xlane.xlu0 %1554
      %v1556 = vmul.f32 %v1276, 0.0012755102
      %v1557 = vmul.f32 %v1285, 0.0012755102
      %v1558 = vmul.f32 %v1294, 0.0012755102
      %v1559 = vmul.f32 %v1303, 0.0012755102
      %v1560 = vmul.f32 %v1312, 0.0012755102
      %v1561 = vmul.f32 %v1321, 0.0012755102
      %v1562 = vmul.f32 %v1330, 0.0012755102
      %v1563 = vmul.f32 %v1339, 0.0012755102
      %v1564 = vmul.f32 %v1348, 0.0012755102
      %v1565 = vmul.f32 %v1357, 0.0012755102
      %v1566 = vmul.f32 %v1366, 0.0012755102
      %v1567 = vmul.f32 %v1375, 0.0012755102
      %v1568 = vmul.f32 %v1384, 0.0012755102
      %v1569 = vmul.f32 %v1393, 0.0012755102
      %v1570 = vmul.f32 %v1402, 0.0012755102
      %v1571 = vmul.f32 %v1411, 0.0012755102
      %v1572 = vmul.f32 %v1420, 0.0012755102
      %v1573 = vmul.f32 %v1429, 0.0012755102
      %v1574 = vmul.f32 %v1438, 0.0012755102
      %v1575 = vmul.f32 %v1447, 0.0012755102
      %v1576 = vmul.f32 %v1456, 0.0012755102
      %v1577 = vmul.f32 %v1465, 0.0012755102
      %v1578 = vmul.f32 %v1474, 0.0012755102
      %v1579 = vmul.f32 %v1483, 0.0012755102
      %v1580 = vmul.f32 %v1492, 0.0012755102
      %v1581 = vmul.f32 %v1501, 0.0012755102
      %v1582 = vmul.f32 %v1510, 0.0012755102
      %v1583 = vmul.f32 %v1519, 0.0012755102
      %v1584 = vmul.f32 %v1528, 0.0012755102
      %v1585 = vmul.f32 %v1537, 0.0012755102
      %v1586 = vmul.f32 %v1546, 0.0012755102
      %v1587 = vmul.f32 %v1555, 0.0012755102
      %v1588 = vld [vmem:[%s260] sm:$0xff]
      %v1589 = vld [vmem:[%s260 + $0x8] sm:$0xff]
      %v1590 = vld [vmem:[%s260 + $0x10] sm:$0xff]
      %v1591 = vld [vmem:[%s260 + $0x18] sm:$0xff]
      %v1592 = vld [vmem:[%s260 + $0x20] sm:$0xff]
      %v1593 = vld [vmem:[%s260 + $0x28] sm:$0xff]
      %v1594 = vld [vmem:[%s260 + $0x30] sm:$0xff]
      %v1595 = vld [vmem:[%s260 + $0x38] sm:$0xff]
      %v1596 = vld [vmem:[%s260 + $0x40] sm:$0xff]
      %v1597 = vld [vmem:[%s260 + $0x48] sm:$0xff]
      %v1598 = vld [vmem:[%s260 + $0x50] sm:$0xff]
      %v1599 = vld [vmem:[%s260 + $0x58] sm:$0xff]
      %v1600 = vld [vmem:[%s260 + $0x60] sm:$0xff]
      %v1601 = vld [vmem:[%s260 + $0x68] sm:$0xff]
      %v1602 = vld [vmem:[%s260 + $0x70] sm:$0xff]
      %v1603 = vld [vmem:[%s260 + $0x78] sm:$0xff]
      %v1604 = vld [vmem:[%s260 + $0x80] sm:$0xff]
      %v1605 = vld [vmem:[%s260 + $0x88] sm:$0xff]
      %v1606 = vld [vmem:[%s260 + $0x90] sm:$0xff]
      %v1607 = vld [vmem:[%s260 + $0x98] sm:$0xff]
      %v1608 = vld [vmem:[%s260 + $0xa0] sm:$0xff]
      %v1609 = vld [vmem:[%s260 + $0xa8] sm:$0xff]
      %v1610 = vld [vmem:[%s260 + $0xb0] sm:$0xff]
      %v1611 = vld [vmem:[%s260 + $0xb8] sm:$0xff]
      %v1612 = vld [vmem:[%s260 + $0xc0] sm:$0xff]
      %v1613 = vld [vmem:[%s260 + $0xc8] sm:$0xff]
      %v1614 = vld [vmem:[%s260 + $0xd0] sm:$0xff]
      %v1615 = vld [vmem:[%s260 + $0xd8] sm:$0xff]
      %v1616 = vld [vmem:[%s260 + $0xe0] sm:$0xff]
      %v1617 = vld [vmem:[%s260 + $0xe8] sm:$0xff]
      %v1618 = vld [vmem:[%s260 + $0xf0] sm:$0xff]
      %v1619 = vld [vmem:[%s260 + $0xf8] sm:$0xff]
      %v1620 = vadd.f32 %v1556, 1e-05
      %v1621 = vadd.f32 %v1557, 1e-05
      %v1622 = vadd.f32 %v1558, 1e-05
      %v1623 = vadd.f32 %v1559, 1e-05
      %v1624 = vadd.f32 %v1560, 1e-05
      %v1625 = vadd.f32 %v1561, 1e-05
      %v1626 = vadd.f32 %v1562, 1e-05
      %v1627 = vadd.f32 %v1563, 1e-05
      %v1628 = vadd.f32 %v1564, 1e-05
      %v1629 = vadd.f32 %v1565, 1e-05
      %v1630 = vadd.f32 %v1566, 1e-05
      %v1631 = vadd.f32 %v1567, 1e-05
      %v1632 = vadd.f32 %v1568, 1e-05
      %v1633 = vadd.f32 %v1569, 1e-05
      %v1634 = vadd.f32 %v1570, 1e-05
      %v1635 = vadd.f32 %v1571, 1e-05
      %v1636 = vadd.f32 %v1572, 1e-05
      %v1637 = vadd.f32 %v1573, 1e-05
      %v1638 = vadd.f32 %v1574, 1e-05
      %v1639 = vadd.f32 %v1575, 1e-05
      %v1640 = vadd.f32 %v1576, 1e-05
      %v1641 = vadd.f32 %v1577, 1e-05
      %v1642 = vadd.f32 %v1578, 1e-05
      %v1643 = vadd.f32 %v1579, 1e-05
      %v1644 = vadd.f32 %v1580, 1e-05
      %v1645 = vadd.f32 %v1581, 1e-05
      %v1646 = vadd.f32 %v1582, 1e-05
      %v1647 = vadd.f32 %v1583, 1e-05
      %v1648 = vadd.f32 %v1584, 1e-05
      %v1649 = vadd.f32 %v1585, 1e-05
      %v1650 = vadd.f32 %v1586, 1e-05
      %v1651 = vadd.f32 %v1587, 1e-05
      %v1652 = vrsqrt.pop %v1620
      %v1653 = vrsqrt.pop %v1621
      %v1654 = vrsqrt.pop %v1622
      %v1655 = vrsqrt.pop %v1623
      %v1656 = vrsqrt.pop %v1624
      %v1657 = vrsqrt.pop %v1625
      %v1658 = vrsqrt.pop %v1626
      %v1659 = vrsqrt.pop %v1627
      %v1660 = vrsqrt.pop %v1628
      %v1661 = vrsqrt.pop %v1629
      %v1662 = vrsqrt.pop %v1630
      %v1663 = vrsqrt.pop %v1631
      %v1664 = vrsqrt.pop %v1632
      %v1665 = vrsqrt.pop %v1633
      %v1666 = vrsqrt.pop %v1634
      %v1667 = vrsqrt.pop %v1635
      %v1668 = vrsqrt.pop %v1636
      %v1669 = vrsqrt.pop %v1637
      %v1670 = vrsqrt.pop %v1638
      %v1671 = vrsqrt.pop %v1639
      %v1672 = vrsqrt.pop %v1640
      %v1673 = vrsqrt.pop %v1641
      %v1674 = vrsqrt.pop %v1642
      %v1675 = vrsqrt.pop %v1643
      %v1676 = vrsqrt.pop %v1644
      %v1677 = vrsqrt.pop %v1645
      %v1678 = vrsqrt.pop %v1646
      %v1679 = vrsqrt.pop %v1647
      %v1680 = vrsqrt.pop %v1648
      %v1681 = vrsqrt.pop %v1649
      %v1682 = vrsqrt.pop %v1650
      %v1683 = vrsqrt.pop %v1651
      %v1684 = vmul.f32 %v1588, %v1652
      %v1685 = vmul.f32 %v1589, %v1653
      %v1686 = vmul.f32 %v1590, %v1654
      %v1687 = vmul.f32 %v1591, %v1655
      %v1688 = vmul.f32 %v1592, %v1656
      %v1689 = vmul.f32 %v1593, %v1657
      %v1690 = vmul.f32 %v1594, %v1658
      %v1691 = vmul.f32 %v1595, %v1659
      %v1692 = vmul.f32 %v1596, %v1660
      %v1693 = vmul.f32 %v1597, %v1661
      %v1694 = vmul.f32 %v1598, %v1662
      %v1695 = vmul.f32 %v1599, %v1663
      %v1696 = vmul.f32 %v1600, %v1664
      %v1697 = vmul.f32 %v1601, %v1665
      %v1698 = vmul.f32 %v1602, %v1666
      %v1699 = vmul.f32 %v1603, %v1667
      %v1700 = vmul.f32 %v1604, %v1668
      %v1701 = vmul.f32 %v1605, %v1669
      %v1702 = vmul.f32 %v1606, %v1670
      %v1703 = vmul.f32 %v1607, %v1671
      %v1704 = vmul.f32 %v1608, %v1672
      %v1705 = vmul.f32 %v1609, %v1673
      %v1706 = vmul.f32 %v1610, %v1674
      %v1707 = vmul.f32 %v1611, %v1675
      %v1708 = vmul.f32 %v1612, %v1676
      %v1709 = vmul.f32 %v1613, %v1677
      %v1710 = vmul.f32 %v1614, %v1678
      %v1711 = vmul.f32 %v1615, %v1679
      %v1712 = vmul.f32 %v1616, %v1680
      %v1713 = vmul.f32 %v1617, %v1681
      %v1714 = vmul.f32 %v1618, %v1682
      %v1715 = vmul.f32 %v1619, %v1683
      %v1716 = vld [vmem:[%s254] sm:$0xff]
      %v1717 = vld [vmem:[%s254 + $0x8] sm:$0xff]
      %v1718 = vld [vmem:[%s254 + $0x10] sm:$0xff]
      %v1719 = vld [vmem:[%s254 + $0x18] sm:$0xff]
      %v1720 = vld [vmem:[%s254 + $0x20] sm:$0xff]
      %v1721 = vld [vmem:[%s254 + $0x28] sm:$0xff]
      %v1722 = vld [vmem:[%s254 + $0x30] sm:$0xff]
      %v1723 = vld [vmem:[%s254 + $0x38] sm:$0xff]
      %v1724 = vld [vmem:[%s254 + $0x40] sm:$0xff]
      %v1725 = vld [vmem:[%s254 + $0x48] sm:$0xff]
      %v1726 = vld [vmem:[%s254 + $0x50] sm:$0xff]
      %v1727 = vld [vmem:[%s254 + $0x58] sm:$0xff]
      %v1728 = vld [vmem:[%s254 + $0x60] sm:$0xff]
      %v1729 = vld [vmem:[%s254 + $0x68] sm:$0xff]
      %v1730 = vld [vmem:[%s254 + $0x70] sm:$0xff]
      %v1731 = vld [vmem:[%s254 + $0x78] sm:$0xff]
      %v1732 = vld [vmem:[%s254 + $0x80] sm:$0xff]
      %v1733 = vld [vmem:[%s254 + $0x88] sm:$0xff]
      %v1734 = vld [vmem:[%s254 + $0x90] sm:$0xff]
      %v1735 = vld [vmem:[%s254 + $0x98] sm:$0xff]
      %v1736 = vld [vmem:[%s254 + $0xa0] sm:$0xff]
      %v1737 = vld [vmem:[%s254 + $0xa8] sm:$0xff]
      %v1738 = vld [vmem:[%s254 + $0xb0] sm:$0xff]
      %v1739 = vld [vmem:[%s254 + $0xb8] sm:$0xff]
      %v1740 = vld [vmem:[%s254 + $0xc0] sm:$0xff]
      %v1741 = vld [vmem:[%s254 + $0xc8] sm:$0xff]
      %v1742 = vld [vmem:[%s254 + $0xd0] sm:$0xff]
      %v1743 = vld [vmem:[%s254 + $0xd8] sm:$0xff]
      %v1744 = vld [vmem:[%s254 + $0xe0] sm:$0xff]
      %v1745 = vld [vmem:[%s254 + $0xe8] sm:$0xff]
      %v1746 = vld [vmem:[%s254 + $0xf0] sm:$0xff]
      %v1747 = vld [vmem:[%s254 + $0xf8] sm:$0xff]
      %v1748 = vld [vmem:[%s254 + $0x100] sm:$0xff]
      %v1749 = vld [vmem:[%s254 + $0x108] sm:$0xff]
      %v1750 = vld [vmem:[%s254 + $0x110] sm:$0xff]
      %v1751 = vld [vmem:[%s254 + $0x118] sm:$0xff]
      %v1752 = vld [vmem:[%s254 + $0x120] sm:$0xff]
      %v1753 = vld [vmem:[%s254 + $0x128] sm:$0xff]
      %v1754 = vld [vmem:[%s254 + $0x130] sm:$0xff]
      %v1755 = vld [vmem:[%s254 + $0x138] sm:$0xff]
      %v1756 = vld [vmem:[%s254 + $0x140] sm:$0xff]
      %v1757 = vld [vmem:[%s254 + $0x148] sm:$0xff]
      %v1758 = vld [vmem:[%s254 + $0x150] sm:$0xff]
      %v1759 = vld [vmem:[%s254 + $0x158] sm:$0xff]
      %v1760 = vld [vmem:[%s254 + $0x160] sm:$0xff]
      %v1761 = vld [vmem:[%s254 + $0x168] sm:$0xff]
      %v1762 = vld [vmem:[%s254 + $0x170] sm:$0xff]
      %v1763 = vld [vmem:[%s254 + $0x178] sm:$0xff]
      %v1764 = vld [vmem:[%s254 + $0x180] sm:$0xff]
      %v1765 = vld [vmem:[%s254 + $0x188] sm:$0xff]
      %v1766 = vld [vmem:[%s254 + $0x190] sm:$0xff]
      %v1767 = vld [vmem:[%s254 + $0x198] sm:$0xff]
      %v1768 = vld [vmem:[%s254 + $0x1a0] sm:$0xff]
      %v1769 = vld [vmem:[%s254 + $0x1a8] sm:$0xff]
      %v1770 = vld [vmem:[%s254 + $0x1b0] sm:$0xff]
      %v1771 = vld [vmem:[%s254 + $0x1b8] sm:$0xff]
      %v1772 = vld [vmem:[%s254 + $0x1c0] sm:$0xff]
      %v1773 = vld [vmem:[%s254 + $0x1c8] sm:$0xff]
      %v1774 = vld [vmem:[%s254 + $0x1d0] sm:$0xff]
      %v1775 = vld [vmem:[%s254 + $0x1d8] sm:$0xff]
      %v1776 = vld [vmem:[%s254 + $0x1e0] sm:$0xff]
      %v1777 = vld [vmem:[%s254 + $0x1e8] sm:$0xff]
      %v1778 = vld [vmem:[%s254 + $0x1f0] sm:$0xff]
      %v1779 = vld [vmem:[%s254 + $0x1f8] sm:$0xff]
      %v1780 = vld [vmem:[%s254 + $0x200] sm:$0xff]
      %v1781 = vld [vmem:[%s254 + $0x208] sm:$0xff]
      %v1782 = vld [vmem:[%s254 + $0x210] sm:$0xff]
      %v1783 = vld [vmem:[%s254 + $0x218] sm:$0xff]
      %v1784 = vld [vmem:[%s254 + $0x220] sm:$0xff]
      %v1785 = vld [vmem:[%s254 + $0x228] sm:$0xff]
      %v1786 = vld [vmem:[%s254 + $0x230] sm:$0xff]
      %v1787 = vld [vmem:[%s254 + $0x238] sm:$0xff]
      %v1788 = vld [vmem:[%s254 + $0x240] sm:$0xff]
      %v1789 = vld [vmem:[%s254 + $0x248] sm:$0xff]
      %v1790 = vld [vmem:[%s254 + $0x250] sm:$0xff]
      %v1791 = vld [vmem:[%s254 + $0x258] sm:$0xff]
      %v1792 = vld [vmem:[%s254 + $0x260] sm:$0xff]
      %v1793 = vld [vmem:[%s254 + $0x268] sm:$0xff]
      %v1794 = vld [vmem:[%s254 + $0x270] sm:$0xff]
      %v1795 = vld [vmem:[%s254 + $0x278] sm:$0xff]
      %v1796 = vld [vmem:[%s254 + $0x280] sm:$0xff]
      %v1797 = vld [vmem:[%s254 + $0x288] sm:$0xff]
      %v1798 = vld [vmem:[%s254 + $0x290] sm:$0xff]
      %v1799 = vld [vmem:[%s254 + $0x298] sm:$0xff]
      %v1800 = vld [vmem:[%s254 + $0x2a0] sm:$0xff]
      %v1801 = vld [vmem:[%s254 + $0x2a8] sm:$0xff]
      %v1802 = vld [vmem:[%s254 + $0x2b0] sm:$0xff]
      %v1803 = vld [vmem:[%s254 + $0x2b8] sm:$0xff]
      %v1804 = vld [vmem:[%s254 + $0x2c0] sm:$0xff]
      %v1805 = vld [vmem:[%s254 + $0x2c8] sm:$0xff]
      %v1806 = vld [vmem:[%s254 + $0x2d0] sm:$0xff]
      %v1807 = vld [vmem:[%s254 + $0x2d8] sm:$0xff]
      %v1808 = vld [vmem:[%s254 + $0x2e0] sm:$0xff]
      %v1809 = vld [vmem:[%s254 + $0x2e8] sm:$0xff]
      %v1810 = vld [vmem:[%s254 + $0x2f0] sm:$0xff]
      %v1811 = vld [vmem:[%s254 + $0x2f8] sm:$0xff]
      %v1812 = vld [vmem:[%s254 + $0x300] sm:$0xff]
      %v1813 = vld [vmem:[%s254 + $0x308] sm:$0xff]
      %v1814 = vld [vmem:[%s254 + $0x310] sm:$0xff]
      %v1815 = vld [vmem:[%s254 + $0x318] sm:$0xff]
      %v1816 = vld [vmem:[%s254 + $0x320] sm:$0xff]
      %v1817 = vld [vmem:[%s254 + $0x328] sm:$0xff]
      %v1818 = vld [vmem:[%s254 + $0x330] sm:$0xff]
      %v1819 = vld [vmem:[%s254 + $0x338] sm:$0xff]
      %v1820 = vld [vmem:[%s254 + $0x340] sm:$0xff]
      %v1821 = vld [vmem:[%s254 + $0x348] sm:$0xff]
      %v1822 = vld [vmem:[%s254 + $0x350] sm:$0xff]
      %v1823 = vld [vmem:[%s254 + $0x358] sm:$0xff]
      %v1824 = vld [vmem:[%s254 + $0x360] sm:$0xff]
      %v1825 = vld [vmem:[%s254 + $0x368] sm:$0xff]
      %v1826 = vld [vmem:[%s254 + $0x370] sm:$0xff]
      %v1827 = vld [vmem:[%s254 + $0x378] sm:$0xff]
      %v1828 = vld [vmem:[%s254 + $0x380] sm:$0xff]
      %v1829 = vld [vmem:[%s254 + $0x388] sm:$0xff]
      %v1830 = vld [vmem:[%s254 + $0x390] sm:$0xff]
      %v1831 = vld [vmem:[%s254 + $0x398] sm:$0xff]
      %v1832 = vld [vmem:[%s254 + $0x3a0] sm:$0xff]
      %v1833 = vld [vmem:[%s254 + $0x3a8] sm:$0xff]
      %v1834 = vld [vmem:[%s254 + $0x3b0] sm:$0xff]
      %v1835 = vld [vmem:[%s254 + $0x3b8] sm:$0xff]
      %v1836 = vld [vmem:[%s254 + $0x3c0] sm:$0xff]
      %v1837 = vld [vmem:[%s254 + $0x3c8] sm:$0xff]
      %v1838 = vld [vmem:[%s254 + $0x3d0] sm:$0xff]
      %v1839 = vld [vmem:[%s254 + $0x3d8] sm:$0xff]
      %v1840 = vld [vmem:[%s254 + $0x3e0] sm:$0xff]
      %v1841 = vld [vmem:[%s254 + $0x3e8] sm:$0xff]
      %v1842 = vld [vmem:[%s254 + $0x3f0] sm:$0xff]
      %v1843 = vld [vmem:[%s254 + $0x3f8] sm:$0xff]
      %v1844 = vld [vmem:[%s254 + $0x400] sm:$0xff]
      %v1845 = vld [vmem:[%s254 + $0x408] sm:$0xff]
      %v1846 = vld [vmem:[%s254 + $0x410] sm:$0xff]
      %v1847 = vld [vmem:[%s254 + $0x418] sm:$0xff]
      %v1848 = vld [vmem:[%s254 + $0x420] sm:$0xff]
      %v1849 = vld [vmem:[%s254 + $0x428] sm:$0xff]
      %v1850 = vld [vmem:[%s254 + $0x430] sm:$0xff]
      %v1851 = vld [vmem:[%s254 + $0x438] sm:$0xff]
      %v1852 = vld [vmem:[%s254 + $0x440] sm:$0xff]
      %v1853 = vld [vmem:[%s254 + $0x448] sm:$0xff]
      %v1854 = vld [vmem:[%s254 + $0x450] sm:$0xff]
      %v1855 = vld [vmem:[%s254 + $0x458] sm:$0xff]
      %v1856 = vld [vmem:[%s254 + $0x460] sm:$0xff]
      %v1857 = vld [vmem:[%s254 + $0x468] sm:$0xff]
      %v1858 = vld [vmem:[%s254 + $0x470] sm:$0xff]
      %v1859 = vld [vmem:[%s254 + $0x478] sm:$0xff]
      %v1860 = vld [vmem:[%s254 + $0x480] sm:$0xff]
      %v1861 = vld [vmem:[%s254 + $0x488] sm:$0xff]
      %v1862 = vld [vmem:[%s254 + $0x490] sm:$0xff]
      %v1863 = vld [vmem:[%s254 + $0x498] sm:$0xff]
      %v1864 = vld [vmem:[%s254 + $0x4a0] sm:$0xff]
      %v1865 = vld [vmem:[%s254 + $0x4a8] sm:$0xff]
      %v1866 = vld [vmem:[%s254 + $0x4b0] sm:$0xff]
      %v1867 = vld [vmem:[%s254 + $0x4b8] sm:$0xff]
      %v1868 = vld [vmem:[%s254 + $0x4c0] sm:$0xff]
      %v1869 = vld [vmem:[%s254 + $0x4c8] sm:$0xff]
      %v1870 = vld [vmem:[%s254 + $0x4d0] sm:$0xff]
      %v1871 = vld [vmem:[%s254 + $0x4d8] sm:$0xff]
      %v1872 = vld [vmem:[%s254 + $0x4e0] sm:$0xff]
      %v1873 = vld [vmem:[%s254 + $0x4e8] sm:$0xff]
      %v1874 = vld [vmem:[%s254 + $0x4f0] sm:$0xff]
      %v1875 = vld [vmem:[%s254 + $0x4f8] sm:$0xff]
      %v1876 = vld [vmem:[%s254 + $0x500] sm:$0xff]
      %v1877 = vld [vmem:[%s254 + $0x508] sm:$0xff]
      %v1878 = vld [vmem:[%s254 + $0x510] sm:$0xff]
      %v1879 = vld [vmem:[%s254 + $0x518] sm:$0xff]
      %v1880 = vld [vmem:[%s254 + $0x520] sm:$0xff]
      %v1881 = vld [vmem:[%s254 + $0x528] sm:$0xff]
      %v1882 = vld [vmem:[%s254 + $0x530] sm:$0xff]
      %v1883 = vld [vmem:[%s254 + $0x538] sm:$0xff]
      %v1884 = vld [vmem:[%s254 + $0x540] sm:$0xff]
      %v1885 = vld [vmem:[%s254 + $0x548] sm:$0xff]
      %v1886 = vld [vmem:[%s254 + $0x550] sm:$0xff]
      %v1887 = vld [vmem:[%s254 + $0x558] sm:$0xff]
      %v1888 = vld [vmem:[%s254 + $0x560] sm:$0xff]
      %v1889 = vld [vmem:[%s254 + $0x568] sm:$0xff]
      %v1890 = vld [vmem:[%s254 + $0x570] sm:$0xff]
      %v1891 = vld [vmem:[%s254 + $0x578] sm:$0xff]
      %v1892 = vld [vmem:[%s254 + $0x580] sm:$0xff]
      %v1893 = vld [vmem:[%s254 + $0x588] sm:$0xff]
      %v1894 = vld [vmem:[%s254 + $0x590] sm:$0xff]
      %v1895 = vld [vmem:[%s254 + $0x598] sm:$0xff]
      %v1896 = vld [vmem:[%s254 + $0x5a0] sm:$0xff]
      %v1897 = vld [vmem:[%s254 + $0x5a8] sm:$0xff]
      %v1898 = vld [vmem:[%s254 + $0x5b0] sm:$0xff]
      %v1899 = vld [vmem:[%s254 + $0x5b8] sm:$0xff]
      %v1900 = vld [vmem:[%s254 + $0x5c0] sm:$0xff]
      %v1901 = vld [vmem:[%s254 + $0x5c8] sm:$0xff]
      %v1902 = vld [vmem:[%s254 + $0x5d0] sm:$0xff]
      %v1903 = vld [vmem:[%s254 + $0x5d8] sm:$0xff]
      %v1904 = vld [vmem:[%s254 + $0x5e0] sm:$0xff]
      %v1905 = vld [vmem:[%s254 + $0x5e8] sm:$0xff]
      %v1906 = vld [vmem:[%s254 + $0x5f0] sm:$0xff]
      %v1907 = vld [vmem:[%s254 + $0x5f8] sm:$0xff]
      %v1908 = vld [vmem:[%s254 + $0x600] sm:$0xff]
      %v1909 = vld [vmem:[%s254 + $0x608] sm:$0xff]
      %v1910 = vld [vmem:[%s254 + $0x610] sm:$0xff]
      %v1911 = vld [vmem:[%s254 + $0x618] sm:$0xff]
      %v1912 = vld [vmem:[%s254 + $0x620] sm:$0xff]
      %v1913 = vld [vmem:[%s254 + $0x628] sm:$0xff]
      %v1914 = vld [vmem:[%s254 + $0x630] sm:$0xff]
      %v1915 = vld [vmem:[%s254 + $0x638] sm:$0xff]
      %v1916 = vld [vmem:[%s254 + $0x640] sm:$0xff]
      %v1917 = vld [vmem:[%s254 + $0x648] sm:$0xff]
      %v1918 = vld [vmem:[%s254 + $0x650] sm:$0xff]
      %v1919 = vld [vmem:[%s254 + $0x658] sm:$0xff]
      %v1920 = vld [vmem:[%s254 + $0x660] sm:$0xff]
      %v1921 = vld [vmem:[%s254 + $0x668] sm:$0xff]
      %v1922 = vld [vmem:[%s254 + $0x670] sm:$0xff]
      %v1923 = vld [vmem:[%s254 + $0x678] sm:$0xff]
      %v1924 = vld [vmem:[%s254 + $0x680] sm:$0xff]
      %v1925 = vld [vmem:[%s254 + $0x688] sm:$0xff]
      %v1926 = vld [vmem:[%s254 + $0x690] sm:$0xff]
      %v1927 = vld [vmem:[%s254 + $0x698] sm:$0xff]
      %v1928 = vld [vmem:[%s254 + $0x6a0] sm:$0xff]
      %v1929 = vld [vmem:[%s254 + $0x6a8] sm:$0xff]
      %v1930 = vld [vmem:[%s254 + $0x6b0] sm:$0xff]
      %v1931 = vld [vmem:[%s254 + $0x6b8] sm:$0xff]
      %v1932 = vld [vmem:[%s254 + $0x6c0] sm:$0xff]
      %v1933 = vld [vmem:[%s254 + $0x6c8] sm:$0xff]
      %v1934 = vld [vmem:[%s254 + $0x6d0] sm:$0xff]
      %v1935 = vld [vmem:[%s254 + $0x6d8] sm:$0xff]
      %v1936 = vld [vmem:[%s254 + $0x6e0] sm:$0xff]
      %v1937 = vld [vmem:[%s254 + $0x6e8] sm:$0xff]
      %v1938 = vld [vmem:[%s254 + $0x6f0] sm:$0xff]
      %v1939 = vld [vmem:[%s254 + $0x6f8] sm:$0xff]
      %1941 = vset.pattern.permute.xlu0 0
      %1942 = vperm.xlu0 %1941, %v1684
      %v1943 = vpop.permute.xlu0 %1942
      %1946 = vset.pattern.permute.xlu0 0
      %1947 = vperm.xlu0 %1946, %v1685
      %v1948 = vpop.permute.xlu0 %1947
      %1951 = vset.pattern.permute.xlu0 0
      %1952 = vperm.xlu0 %1951, %v1686
      %v1953 = vpop.permute.xlu0 %1952
      %1956 = vset.pattern.permute.xlu0 0
      %1957 = vperm.xlu0 %1956, %v1687
      %v1958 = vpop.permute.xlu0 %1957
      %1961 = vset.pattern.permute.xlu0 0
      %1962 = vperm.xlu0 %1961, %v1688
      %v1963 = vpop.permute.xlu0 %1962
      %1966 = vset.pattern.permute.xlu0 0
      %1967 = vperm.xlu0 %1966, %v1689
      %v1968 = vpop.permute.xlu0 %1967
      %1971 = vset.pattern.permute.xlu0 0
      %1972 = vperm.xlu0 %1971, %v1690
      %v1973 = vpop.permute.xlu0 %1972
      %1976 = vset.pattern.permute.xlu0 0
      %1977 = vperm.xlu0 %1976, %v1691
      %v1978 = vpop.permute.xlu0 %1977
      %1981 = vset.pattern.permute.xlu0 0
      %1982 = vperm.xlu0 %1981, %v1692
      %v1983 = vpop.permute.xlu0 %1982
      %1986 = vset.pattern.permute.xlu0 0
      %1987 = vperm.xlu0 %1986, %v1693
      %v1988 = vpop.permute.xlu0 %1987
      %1991 = vset.pattern.permute.xlu0 0
      %1992 = vperm.xlu0 %1991, %v1694
      %v1993 = vpop.permute.xlu0 %1992
      %1996 = vset.pattern.permute.xlu0 0
      %1997 = vperm.xlu0 %1996, %v1695
      %v1998 = vpop.permute.xlu0 %1997
      %2001 = vset.pattern.permute.xlu0 0
      %2002 = vperm.xlu0 %2001, %v1696
      %v2003 = vpop.permute.xlu0 %2002
      %2006 = vset.pattern.permute.xlu0 0
      %2007 = vperm.xlu0 %2006, %v1697
      %v2008 = vpop.permute.xlu0 %2007
      %2011 = vset.pattern.permute.xlu0 0
      %2012 = vperm.xlu0 %2011, %v1698
      %v2013 = vpop.permute.xlu0 %2012
      %2016 = vset.pattern.permute.xlu0 0
      %2017 = vperm.xlu0 %2016, %v1699
      %v2018 = vpop.permute.xlu0 %2017
      %2021 = vset.pattern.permute.xlu0 0
      %2022 = vperm.xlu0 %2021, %v1700
      %v2023 = vpop.permute.xlu0 %2022
      %2026 = vset.pattern.permute.xlu0 0
      %2027 = vperm.xlu0 %2026, %v1701
      %v2028 = vpop.permute.xlu0 %2027
      %2031 = vset.pattern.permute.xlu0 0
      %2032 = vperm.xlu0 %2031, %v1702
      %v2033 = vpop.permute.xlu0 %2032
      %2036 = vset.pattern.permute.xlu0 0
      %2037 = vperm.xlu0 %2036, %v1703
      %v2038 = vpop.permute.xlu0 %2037
      %2041 = vset.pattern.permute.xlu0 0
      %2042 = vperm.xlu0 %2041, %v1704
      %v2043 = vpop.permute.xlu0 %2042
      %2046 = vset.pattern.permute.xlu0 0
      %2047 = vperm.xlu0 %2046, %v1705
      %v2048 = vpop.permute.xlu0 %2047
      %2051 = vset.pattern.permute.xlu0 0
      %2052 = vperm.xlu0 %2051, %v1706
      %v2053 = vpop.permute.xlu0 %2052
      %2056 = vset.pattern.permute.xlu0 0
      %2057 = vperm.xlu0 %2056, %v1707
      %v2058 = vpop.permute.xlu0 %2057
      %2061 = vset.pattern.permute.xlu0 0
      %2062 = vperm.xlu0 %2061, %v1708
      %v2063 = vpop.permute.xlu0 %2062
      %2066 = vset.pattern.permute.xlu0 0
      %2067 = vperm.xlu0 %2066, %v1709
      %v2068 = vpop.permute.xlu0 %2067
      %2071 = vset.pattern.permute.xlu0 0
      %2072 = vperm.xlu0 %2071, %v1710
      %v2073 = vpop.permute.xlu0 %2072
      %2076 = vset.pattern.permute.xlu0 0
      %2077 = vperm.xlu0 %2076, %v1711
      %v2078 = vpop.permute.xlu0 %2077
      %2081 = vset.pattern.permute.xlu0 0
      %2082 = vperm.xlu0 %2081, %v1712
      %v2083 = vpop.permute.xlu0 %2082
      %2086 = vset.pattern.permute.xlu0 0
      %2087 = vperm.xlu0 %2086, %v1713
      %v2088 = vpop.permute.xlu0 %2087
      %2091 = vset.pattern.permute.xlu0 0
      %2092 = vperm.xlu0 %2091, %v1714
      %v2093 = vpop.permute.xlu0 %2092
      %2096 = vset.pattern.permute.xlu0 0
      %2097 = vperm.xlu0 %2096, %v1715
      %v2098 = vpop.permute.xlu0 %2097
      %v2100 = vmul.f32 %v820, %v1943
      %v2101 = vmul.f32 %v821, %v1943
      %v2102 = vmul.f32 %v822, %v1943
      %v2103 = vmul.f32 %v823, %v1943
      %v2104 = vmul.f32 %v824, %v1943
      %v2105 = vmul.f32 %v825, %v1943
      %v2106 = vmul.f32 %v826, %v1943
      %v2107 = vmul.f32 %v827, %v1948
      %v2108 = vmul.f32 %v828, %v1948
      %v2109 = vmul.f32 %v829, %v1948
      %v2110 = vmul.f32 %v830, %v1948
      %v2111 = vmul.f32 %v831, %v1948
      %v2112 = vmul.f32 %v832, %v1948
      %v2113 = vmul.f32 %v833, %v1948
      %v2114 = vmul.f32 %v834, %v1953
      %v2115 = vmul.f32 %v835, %v1953
      %v2116 = vmul.f32 %v836, %v1953
      %v2117 = vmul.f32 %v837, %v1953
      %v2118 = vmul.f32 %v838, %v1953
      %v2119 = vmul.f32 %v839, %v1953
      %v2120 = vmul.f32 %v840, %v1953
      %v2121 = vmul.f32 %v841, %v1958
      %v2122 = vmul.f32 %v842, %v1958
      %v2123 = vmul.f32 %v843, %v1958
      %v2124 = vmul.f32 %v844, %v1958
      %v2125 = vmul.f32 %v845, %v1958
      %v2126 = vmul.f32 %v846, %v1958
      %v2127 = vmul.f32 %v847, %v1958
      %v2128 = vmul.f32 %v848, %v1963
      %v2129 = vmul.f32 %v849, %v1963
      %v2130 = vmul.f32 %v850, %v1963
      %v2131 = vmul.f32 %v851, %v1963
      %v2132 = vmul.f32 %v852, %v1963
      %v2133 = vmul.f32 %v853, %v1963
      %v2134 = vmul.f32 %v854, %v1963
      %v2135 = vmul.f32 %v855, %v1968
      %v2136 = vmul.f32 %v856, %v1968
      %v2137 = vmul.f32 %v857, %v1968
      %v2138 = vmul.f32 %v858, %v1968
      %v2139 = vmul.f32 %v859, %v1968
      %v2140 = vmul.f32 %v860, %v1968
      %v2141 = vmul.f32 %v861, %v1968
      %v2142 = vmul.f32 %v862, %v1973
      %v2143 = vmul.f32 %v863, %v1973
      %v2144 = vmul.f32 %v864, %v1973
      %v2145 = vmul.f32 %v865, %v1973
      %v2146 = vmul.f32 %v866, %v1973
      %v2147 = vmul.f32 %v867, %v1973
      %v2148 = vmul.f32 %v868, %v1973
      %v2149 = vmul.f32 %v869, %v1978
      %v2150 = vmul.f32 %v870, %v1978
      %v2151 = vmul.f32 %v871, %v1978
      %v2152 = vmul.f32 %v872, %v1978
      %v2153 = vmul.f32 %v873, %v1978
      %v2154 = vmul.f32 %v874, %v1978
      %v2155 = vmul.f32 %v875, %v1978
      %v2156 = vmul.f32 %v876, %v1983
      %v2157 = vmul.f32 %v877, %v1983
      %v2158 = vmul.f32 %v878, %v1983
      %v2159 = vmul.f32 %v879, %v1983
      %v2160 = vmul.f32 %v880, %v1983
      %v2161 = vmul.f32 %v881, %v1983
      %v2162 = vmul.f32 %v882, %v1983
      %v2163 = vmul.f32 %v883, %v1988
      %v2164 = vmul.f32 %v884, %v1988
      %v2165 = vmul.f32 %v885, %v1988
      %v2166 = vmul.f32 %v886, %v1988
      %v2167 = vmul.f32 %v887, %v1988
      %v2168 = vmul.f32 %v888, %v1988
      %v2169 = vmul.f32 %v889, %v1988
      %v2170 = vmul.f32 %v890, %v1993
      %v2171 = vmul.f32 %v891, %v1993
      %v2172 = vmul.f32 %v892, %v1993
      %v2173 = vmul.f32 %v893, %v1993
      %v2174 = vmul.f32 %v894, %v1993
      %v2175 = vmul.f32 %v895, %v1993
      %v2176 = vmul.f32 %v896, %v1993
      %v2177 = vmul.f32 %v897, %v1998
      %v2178 = vmul.f32 %v898, %v1998
      %v2179 = vmul.f32 %v899, %v1998
      %v2180 = vmul.f32 %v900, %v1998
      %v2181 = vmul.f32 %v901, %v1998
      %v2182 = vmul.f32 %v902, %v1998
      %v2183 = vmul.f32 %v903, %v1998
      %v2184 = vmul.f32 %v904, %v2003
      %v2185 = vmul.f32 %v905, %v2003
      %v2186 = vmul.f32 %v906, %v2003
      %v2187 = vmul.f32 %v907, %v2003
      %v2188 = vmul.f32 %v908, %v2003
      %v2189 = vmul.f32 %v909, %v2003
      %v2190 = vmul.f32 %v910, %v2003
      %v2191 = vmul.f32 %v911, %v2008
      %v2192 = vmul.f32 %v912, %v2008
      %v2193 = vmul.f32 %v913, %v2008
      %v2194 = vmul.f32 %v914, %v2008
      %v2195 = vmul.f32 %v915, %v2008
      %v2196 = vmul.f32 %v916, %v2008
      %v2197 = vmul.f32 %v917, %v2008
      %v2198 = vmul.f32 %v918, %v2013
      %v2199 = vmul.f32 %v919, %v2013
      %v2200 = vmul.f32 %v920, %v2013
      %v2201 = vmul.f32 %v921, %v2013
      %v2202 = vmul.f32 %v922, %v2013
      %v2203 = vmul.f32 %v923, %v2013
      %v2204 = vmul.f32 %v924, %v2013
      %v2205 = vmul.f32 %v925, %v2018
      %v2206 = vmul.f32 %v926, %v2018
      %v2207 = vmul.f32 %v927, %v2018
      %v2208 = vmul.f32 %v928, %v2018
      %v2209 = vmul.f32 %v929, %v2018
      %v2210 = vmul.f32 %v930, %v2018
      %v2211 = vmul.f32 %v931, %v2018
      %v2212 = vmul.f32 %v932, %v2023
      %v2213 = vmul.f32 %v933, %v2023
      %v2214 = vmul.f32 %v934, %v2023
      %v2215 = vmul.f32 %v935, %v2023
      %v2216 = vmul.f32 %v936, %v2023
      %v2217 = vmul.f32 %v937, %v2023
      %v2218 = vmul.f32 %v938, %v2023
      %v2219 = vmul.f32 %v939, %v2028
      %v2220 = vmul.f32 %v940, %v2028
      %v2221 = vmul.f32 %v941, %v2028
      %v2222 = vmul.f32 %v942, %v2028
      %v2223 = vmul.f32 %v943, %v2028
      %v2224 = vmul.f32 %v944, %v2028
      %v2225 = vmul.f32 %v945, %v2028
      %v2226 = vmul.f32 %v946, %v2033
      %v2227 = vmul.f32 %v947, %v2033
      %v2228 = vmul.f32 %v948, %v2033
      %v2229 = vmul.f32 %v949, %v2033
      %v2230 = vmul.f32 %v950, %v2033
      %v2231 = vmul.f32 %v951, %v2033
      %v2232 = vmul.f32 %v952, %v2033
      %v2233 = vmul.f32 %v953, %v2038
      %v2234 = vmul.f32 %v954, %v2038
      %v2235 = vmul.f32 %v955, %v2038
      %v2236 = vmul.f32 %v956, %v2038
      %v2237 = vmul.f32 %v957, %v2038
      %v2238 = vmul.f32 %v958, %v2038
      %v2239 = vmul.f32 %v959, %v2038
      %v2240 = vmul.f32 %v960, %v2043
      %v2241 = vmul.f32 %v961, %v2043
      %v2242 = vmul.f32 %v962, %v2043
      %v2243 = vmul.f32 %v963, %v2043
      %v2244 = vmul.f32 %v964, %v2043
      %v2245 = vmul.f32 %v965, %v2043
      %v2246 = vmul.f32 %v966, %v2043
      %v2247 = vmul.f32 %v967, %v2048
      %v2248 = vmul.f32 %v968, %v2048
      %v2249 = vmul.f32 %v969, %v2048
      %v2250 = vmul.f32 %v970, %v2048
      %v2251 = vmul.f32 %v971, %v2048
      %v2252 = vmul.f32 %v972, %v2048
      %v2253 = vmul.f32 %v973, %v2048
      %v2254 = vmul.f32 %v974, %v2053
      %v2255 = vmul.f32 %v975, %v2053
      %v2256 = vmul.f32 %v976, %v2053
      %v2257 = vmul.f32 %v977, %v2053
      %v2258 = vmul.f32 %v978, %v2053
      %v2259 = vmul.f32 %v979, %v2053
      %v2260 = vmul.f32 %v980, %v2053
      %v2261 = vmul.f32 %v981, %v2058
      %v2262 = vmul.f32 %v982, %v2058
      %v2263 = vmul.f32 %v983, %v2058
      %v2264 = vmul.f32 %v984, %v2058
      %v2265 = vmul.f32 %v985, %v2058
      %v2266 = vmul.f32 %v986, %v2058
      %v2267 = vmul.f32 %v987, %v2058
      %v2268 = vmul.f32 %v988, %v2063
      %v2269 = vmul.f32 %v989, %v2063
      %v2270 = vmul.f32 %v990, %v2063
      %v2271 = vmul.f32 %v991, %v2063
      %v2272 = vmul.f32 %v992, %v2063
      %v2273 = vmul.f32 %v993, %v2063
      %v2274 = vmul.f32 %v994, %v2063
      %v2275 = vmul.f32 %v995, %v2068
      %v2276 = vmul.f32 %v996, %v2068
      %v2277 = vmul.f32 %v997, %v2068
      %v2278 = vmul.f32 %v998, %v2068
      %v2279 = vmul.f32 %v999, %v2068
      %v2280 = vmul.f32 %v1000, %v2068
      %v2281 = vmul.f32 %v1001, %v2068
      %v2282 = vmul.f32 %v1002, %v2073
      %v2283 = vmul.f32 %v1003, %v2073
      %v2284 = vmul.f32 %v1004, %v2073
      %v2285 = vmul.f32 %v1005, %v2073
      %v2286 = vmul.f32 %v1006, %v2073
      %v2287 = vmul.f32 %v1007, %v2073
      %v2288 = vmul.f32 %v1008, %v2073
      %v2289 = vmul.f32 %v1009, %v2078
      %v2290 = vmul.f32 %v1010, %v2078
      %v2291 = vmul.f32 %v1011, %v2078
      %v2292 = vmul.f32 %v1012, %v2078
      %v2293 = vmul.f32 %v1013, %v2078
      %v2294 = vmul.f32 %v1014, %v2078
      %v2295 = vmul.f32 %v1015, %v2078
      %v2296 = vmul.f32 %v1016, %v2083
      %v2297 = vmul.f32 %v1017, %v2083
      %v2298 = vmul.f32 %v1018, %v2083
      %v2299 = vmul.f32 %v1019, %v2083
      %v2300 = vmul.f32 %v1020, %v2083
      %v2301 = vmul.f32 %v1021, %v2083
      %v2302 = vmul.f32 %v1022, %v2083
      %v2303 = vmul.f32 %v1023, %v2088
      %v2304 = vmul.f32 %v1024, %v2088
      %v2305 = vmul.f32 %v1025, %v2088
      %v2306 = vmul.f32 %v1026, %v2088
      %v2307 = vmul.f32 %v1027, %v2088
      %v2308 = vmul.f32 %v1028, %v2088
      %v2309 = vmul.f32 %v1029, %v2088
      %v2310 = vmul.f32 %v1030, %v2093
      %v2311 = vmul.f32 %v1031, %v2093
      %v2312 = vmul.f32 %v1032, %v2093
      %v2313 = vmul.f32 %v1033, %v2093
      %v2314 = vmul.f32 %v1034, %v2093
      %v2315 = vmul.f32 %v1035, %v2093
      %v2316 = vmul.f32 %v1036, %v2093
      %v2317 = vmul.f32 %v1037, %v2098
      %v2318 = vmul.f32 %v1038, %v2098
      %v2319 = vmul.f32 %v1039, %v2098
      %v2320 = vmul.f32 %v1040, %v2098
      %v2321 = vmul.f32 %v1041, %v2098
      %v2322 = vmul.f32 %v1042, %v2098
      %v2323 = vmul.f32 %v1043, %v2098
      %v2324 = vld [vmem:[%s266] sm:$0xff]
      %v2325 = vld [vmem:[%s266 + $0x8] sm:$0xff]
      %v2326 = vld [vmem:[%s266 + $0x10] sm:$0xff]
      %v2327 = vld [vmem:[%s266 + $0x18] sm:$0xff]
      %v2328 = vld [vmem:[%s266 + $0x20] sm:$0xff]
      %v2329 = vld [vmem:[%s266 + $0x28] sm:$0xff]
      %v2330 = vld [vmem:[%s266 + $0x30] sm:$0xff]
      %v2331 = vld [vmem:[%s266 + $0x38] sm:$0xff]
      %v2332 = vld [vmem:[%s266 + $0x40] sm:$0xff]
      %v2333 = vld [vmem:[%s266 + $0x48] sm:$0xff]
      %v2334 = vld [vmem:[%s266 + $0x50] sm:$0xff]
      %v2335 = vld [vmem:[%s266 + $0x58] sm:$0xff]
      %v2336 = vld [vmem:[%s266 + $0x60] sm:$0xff]
      %v2337 = vld [vmem:[%s266 + $0x68] sm:$0xff]
      %v2338 = vld [vmem:[%s266 + $0x70] sm:$0xff]
      %v2339 = vld [vmem:[%s266 + $0x78] sm:$0xff]
      %v2340 = vld [vmem:[%s266 + $0x80] sm:$0xff]
      %v2341 = vld [vmem:[%s266 + $0x88] sm:$0xff]
      %v2342 = vld [vmem:[%s266 + $0x90] sm:$0xff]
      %v2343 = vld [vmem:[%s266 + $0x98] sm:$0xff]
      %v2344 = vld [vmem:[%s266 + $0xa0] sm:$0xff]
      %v2345 = vld [vmem:[%s266 + $0xa8] sm:$0xff]
      %v2346 = vld [vmem:[%s266 + $0xb0] sm:$0xff]
      %v2347 = vld [vmem:[%s266 + $0xb8] sm:$0xff]
      %v2348 = vld [vmem:[%s266 + $0xc0] sm:$0xff]
      %v2349 = vld [vmem:[%s266 + $0xc8] sm:$0xff]
      %v2350 = vld [vmem:[%s266 + $0xd0] sm:$0xff]
      %v2351 = vld [vmem:[%s266 + $0xd8] sm:$0xff]
      %v2352 = vld [vmem:[%s266 + $0xe0] sm:$0xff]
      %v2353 = vld [vmem:[%s266 + $0xe8] sm:$0xff]
      %v2354 = vld [vmem:[%s266 + $0xf0] sm:$0xff]
      %v2355 = vld [vmem:[%s266 + $0xf8] sm:$0xff]
      %2357 = vset.pattern.permute.xlu0 0
      %2358 = vperm.xlu0 %2357, %v2324
      %v2359 = vpop.permute.xlu0 %2358
      %2362 = vset.pattern.permute.xlu0 0
      %2363 = vperm.xlu0 %2362, %v2325
      %v2364 = vpop.permute.xlu0 %2363
      %2367 = vset.pattern.permute.xlu0 0
      %2368 = vperm.xlu0 %2367, %v2326
      %v2369 = vpop.permute.xlu0 %2368
      %2372 = vset.pattern.permute.xlu0 0
      %2373 = vperm.xlu0 %2372, %v2327
      %v2374 = vpop.permute.xlu0 %2373
      %2377 = vset.pattern.permute.xlu0 0
      %2378 = vperm.xlu0 %2377, %v2328
      %v2379 = vpop.permute.xlu0 %2378
      %2382 = vset.pattern.permute.xlu0 0
      %2383 = vperm.xlu0 %2382, %v2329
      %v2384 = vpop.permute.xlu0 %2383
      %2387 = vset.pattern.permute.xlu0 0
      %2388 = vperm.xlu0 %2387, %v2330
      %v2389 = vpop.permute.xlu0 %2388
      %2392 = vset.pattern.permute.xlu0 0
      %2393 = vperm.xlu0 %2392, %v2331
      %v2394 = vpop.permute.xlu0 %2393
      %2397 = vset.pattern.permute.xlu0 0
      %2398 = vperm.xlu0 %2397, %v2332
      %v2399 = vpop.permute.xlu0 %2398
      %2402 = vset.pattern.permute.xlu0 0
      %2403 = vperm.xlu0 %2402, %v2333
      %v2404 = vpop.permute.xlu0 %2403
      %2407 = vset.pattern.permute.xlu0 0
      %2408 = vperm.xlu0 %2407, %v2334
      %v2409 = vpop.permute.xlu0 %2408
      %2412 = vset.pattern.permute.xlu0 0
      %2413 = vperm.xlu0 %2412, %v2335
      %v2414 = vpop.permute.xlu0 %2413
      %2417 = vset.pattern.permute.xlu0 0
      %2418 = vperm.xlu0 %2417, %v2336
      %v2419 = vpop.permute.xlu0 %2418
      %2422 = vset.pattern.permute.xlu0 0
      %2423 = vperm.xlu0 %2422, %v2337
      %v2424 = vpop.permute.xlu0 %2423
      %2427 = vset.pattern.permute.xlu0 0
      %2428 = vperm.xlu0 %2427, %v2338
      %v2429 = vpop.permute.xlu0 %2428
      %2432 = vset.pattern.permute.xlu0 0
      %2433 = vperm.xlu0 %2432, %v2339
      %v2434 = vpop.permute.xlu0 %2433
      %2437 = vset.pattern.permute.xlu0 0
      %2438 = vperm.xlu0 %2437, %v2340
      %v2439 = vpop.permute.xlu0 %2438
      %2442 = vset.pattern.permute.xlu0 0
      %2443 = vperm.xlu0 %2442, %v2341
      %v2444 = vpop.permute.xlu0 %2443
      %2447 = vset.pattern.permute.xlu0 0
      %2448 = vperm.xlu0 %2447, %v2342
      %v2449 = vpop.permute.xlu0 %2448
      %2452 = vset.pattern.permute.xlu0 0
      %2453 = vperm.xlu0 %2452, %v2343
      %v2454 = vpop.permute.xlu0 %2453
      %2457 = vset.pattern.permute.xlu0 0
      %2458 = vperm.xlu0 %2457, %v2344
      %v2459 = vpop.permute.xlu0 %2458
      %2462 = vset.pattern.permute.xlu0 0
      %2463 = vperm.xlu0 %2462, %v2345
      %v2464 = vpop.permute.xlu0 %2463
      %2467 = vset.pattern.permute.xlu0 0
      %2468 = vperm.xlu0 %2467, %v2346
      %v2469 = vpop.permute.xlu0 %2468
      %2472 = vset.pattern.permute.xlu0 0
      %2473 = vperm.xlu0 %2472, %v2347
      %v2474 = vpop.permute.xlu0 %2473
      %2477 = vset.pattern.permute.xlu0 0
      %2478 = vperm.xlu0 %2477, %v2348
      %v2479 = vpop.permute.xlu0 %2478
      %2482 = vset.pattern.permute.xlu0 0
      %2483 = vperm.xlu0 %2482, %v2349
      %v2484 = vpop.permute.xlu0 %2483
      %2487 = vset.pattern.permute.xlu0 0
      %2488 = vperm.xlu0 %2487, %v2350
      %v2489 = vpop.permute.xlu0 %2488
      %2492 = vset.pattern.permute.xlu0 0
      %2493 = vperm.xlu0 %2492, %v2351
      %v2494 = vpop.permute.xlu0 %2493
      %2497 = vset.pattern.permute.xlu0 0
      %2498 = vperm.xlu0 %2497, %v2352
      %v2499 = vpop.permute.xlu0 %2498
      %2502 = vset.pattern.permute.xlu0 0
      %2503 = vperm.xlu0 %2502, %v2353
      %v2504 = vpop.permute.xlu0 %2503
      %2507 = vset.pattern.permute.xlu0 0
      %2508 = vperm.xlu0 %2507, %v2354
      %v2509 = vpop.permute.xlu0 %2508
      %2512 = vset.pattern.permute.xlu0 0
      %2513 = vperm.xlu0 %2512, %v2355
      %v2514 = vpop.permute.xlu0 %2513
      %v2516 = vadd.f32 %v2359, %v1716
      %v2517 = vadd.f32 %v2359, %v1717
      %v2518 = vadd.f32 %v2359, %v1718
      %v2519 = vadd.f32 %v2359, %v1719
      %v2520 = vadd.f32 %v2359, %v1720
      %v2521 = vadd.f32 %v2359, %v1721
      %v2522 = vadd.f32 %v2359, %v1722
      %v2523 = vadd.f32 %v2364, %v1723
      %v2524 = vadd.f32 %v2364, %v1724
      %v2525 = vadd.f32 %v2364, %v1725
      %v2526 = vadd.f32 %v2364, %v1726
      %v2527 = vadd.f32 %v2364, %v1727
      %v2528 = vadd.f32 %v2364, %v1728
      %v2529 = vadd.f32 %v2364, %v1729
      %v2530 = vadd.f32 %v2369, %v1730
      %v2531 = vadd.f32 %v2369, %v1731
      %v2532 = vadd.f32 %v2369, %v1732
      %v2533 = vadd.f32 %v2369, %v1733
      %v2534 = vadd.f32 %v2369, %v1734
      %v2535 = vadd.f32 %v2369, %v1735
      %v2536 = vadd.f32 %v2369, %v1736
      %v2537 = vadd.f32 %v2374, %v1737
      %v2538 = vadd.f32 %v2374, %v1738
      %v2539 = vadd.f32 %v2374, %v1739
      %v2540 = vadd.f32 %v2374, %v1740
      %v2541 = vadd.f32 %v2374, %v1741
      %v2542 = vadd.f32 %v2374, %v1742
      %v2543 = vadd.f32 %v2374, %v1743
      %v2544 = vadd.f32 %v2379, %v1744
      %v2545 = vadd.f32 %v2379, %v1745
      %v2546 = vadd.f32 %v2379, %v1746
      %v2547 = vadd.f32 %v2379, %v1747
      %v2548 = vadd.f32 %v2379, %v1748
      %v2549 = vadd.f32 %v2379, %v1749
      %v2550 = vadd.f32 %v2379, %v1750
      %v2551 = vadd.f32 %v2384, %v1751
      %v2552 = vadd.f32 %v2384, %v1752
      %v2553 = vadd.f32 %v2384, %v1753
      %v2554 = vadd.f32 %v2384, %v1754
      %v2555 = vadd.f32 %v2384, %v1755
      %v2556 = vadd.f32 %v2384, %v1756
      %v2557 = vadd.f32 %v2384, %v1757
      %v2558 = vadd.f32 %v2389, %v1758
      %v2559 = vadd.f32 %v2389, %v1759
      %v2560 = vadd.f32 %v2389, %v1760
      %v2561 = vadd.f32 %v2389, %v1761
      %v2562 = vadd.f32 %v2389, %v1762
      %v2563 = vadd.f32 %v2389, %v1763
      %v2564 = vadd.f32 %v2389, %v1764
      %v2565 = vadd.f32 %v2394, %v1765
      %v2566 = vadd.f32 %v2394, %v1766
      %v2567 = vadd.f32 %v2394, %v1767
      %v2568 = vadd.f32 %v2394, %v1768
      %v2569 = vadd.f32 %v2394, %v1769
      %v2570 = vadd.f32 %v2394, %v1770
      %v2571 = vadd.f32 %v2394, %v1771
      %v2572 = vadd.f32 %v2399, %v1772
      %v2573 = vadd.f32 %v2399, %v1773
      %v2574 = vadd.f32 %v2399, %v1774
      %v2575 = vadd.f32 %v2399, %v1775
      %v2576 = vadd.f32 %v2399, %v1776
      %v2577 = vadd.f32 %v2399, %v1777
      %v2578 = vadd.f32 %v2399, %v1778
      %v2579 = vadd.f32 %v2404, %v1779
      %v2580 = vadd.f32 %v2404, %v1780
      %v2581 = vadd.f32 %v2404, %v1781
      %v2582 = vadd.f32 %v2404, %v1782
      %v2583 = vadd.f32 %v2404, %v1783
      %v2584 = vadd.f32 %v2404, %v1784
      %v2585 = vadd.f32 %v2404, %v1785
      %v2586 = vadd.f32 %v2409, %v1786
      %v2587 = vadd.f32 %v2409, %v1787
      %v2588 = vadd.f32 %v2409, %v1788
      %v2589 = vadd.f32 %v2409, %v1789
      %v2590 = vadd.f32 %v2409, %v1790
      %v2591 = vadd.f32 %v2409, %v1791
      %v2592 = vadd.f32 %v2409, %v1792
      %v2593 = vadd.f32 %v2414, %v1793
      %v2594 = vadd.f32 %v2414, %v1794
      %v2595 = vadd.f32 %v2414, %v1795
      %v2596 = vadd.f32 %v2414, %v1796
      %v2597 = vadd.f32 %v2414, %v1797
      %v2598 = vadd.f32 %v2414, %v1798
      %v2599 = vadd.f32 %v2414, %v1799
      %v2600 = vadd.f32 %v2419, %v1800
      %v2601 = vadd.f32 %v2419, %v1801
      %v2602 = vadd.f32 %v2419, %v1802
      %v2603 = vadd.f32 %v2419, %v1803
      %v2604 = vadd.f32 %v2419, %v1804
      %v2605 = vadd.f32 %v2419, %v1805
      %v2606 = vadd.f32 %v2419, %v1806
      %v2607 = vadd.f32 %v2424, %v1807
      %v2608 = vadd.f32 %v2424, %v1808
      %v2609 = vadd.f32 %v2424, %v1809
      %v2610 = vadd.f32 %v2424, %v1810
      %v2611 = vadd.f32 %v2424, %v1811
      %v2612 = vadd.f32 %v2424, %v1812
      %v2613 = vadd.f32 %v2424, %v1813
      %v2614 = vadd.f32 %v2429, %v1814
      %v2615 = vadd.f32 %v2429, %v1815
      %v2616 = vadd.f32 %v2429, %v1816
      %v2617 = vadd.f32 %v2429, %v1817
      %v2618 = vadd.f32 %v2429, %v1818
      %v2619 = vadd.f32 %v2429, %v1819
      %v2620 = vadd.f32 %v2429, %v1820
      %v2621 = vadd.f32 %v2434, %v1821
      %v2622 = vadd.f32 %v2434, %v1822
      %v2623 = vadd.f32 %v2434, %v1823
      %v2624 = vadd.f32 %v2434, %v1824
      %v2625 = vadd.f32 %v2434, %v1825
      %v2626 = vadd.f32 %v2434, %v1826
      %v2627 = vadd.f32 %v2434, %v1827
      %v2628 = vadd.f32 %v2439, %v1828
      %v2629 = vadd.f32 %v2439, %v1829
      %v2630 = vadd.f32 %v2439, %v1830
      %v2631 = vadd.f32 %v2439, %v1831
      %v2632 = vadd.f32 %v2439, %v1832
      %v2633 = vadd.f32 %v2439, %v1833
      %v2634 = vadd.f32 %v2439, %v1834
      %v2635 = vadd.f32 %v2444, %v1835
      %v2636 = vadd.f32 %v2444, %v1836
      %v2637 = vadd.f32 %v2444, %v1837
      %v2638 = vadd.f32 %v2444, %v1838
      %v2639 = vadd.f32 %v2444, %v1839
      %v2640 = vadd.f32 %v2444, %v1840
      %v2641 = vadd.f32 %v2444, %v1841
      %v2642 = vadd.f32 %v2449, %v1842
      %v2643 = vadd.f32 %v2449, %v1843
      %v2644 = vadd.f32 %v2449, %v1844
      %v2645 = vadd.f32 %v2449, %v1845
      %v2646 = vadd.f32 %v2449, %v1846
      %v2647 = vadd.f32 %v2449, %v1847
      %v2648 = vadd.f32 %v2449, %v1848
      %v2649 = vadd.f32 %v2454, %v1849
      %v2650 = vadd.f32 %v2454, %v1850
      %v2651 = vadd.f32 %v2454, %v1851
      %v2652 = vadd.f32 %v2454, %v1852
      %v2653 = vadd.f32 %v2454, %v1853
      %v2654 = vadd.f32 %v2454, %v1854
      %v2655 = vadd.f32 %v2454, %v1855
      %v2656 = vadd.f32 %v2459, %v1856
      %v2657 = vadd.f32 %v2459, %v1857
      %v2658 = vadd.f32 %v2459, %v1858
      %v2659 = vadd.f32 %v2459, %v1859
      %v2660 = vadd.f32 %v2459, %v1860
      %v2661 = vadd.f32 %v2459, %v1861
      %v2662 = vadd.f32 %v2459, %v1862
      %v2663 = vadd.f32 %v2464, %v1863
      %v2664 = vadd.f32 %v2464, %v1864
      %v2665 = vadd.f32 %v2464, %v1865
      %v2666 = vadd.f32 %v2464, %v1866
      %v2667 = vadd.f32 %v2464, %v1867
      %v2668 = vadd.f32 %v2464, %v1868
      %v2669 = vadd.f32 %v2464, %v1869
      %v2670 = vadd.f32 %v2469, %v1870
      %v2671 = vadd.f32 %v2469, %v1871
      %v2672 = vadd.f32 %v2469, %v1872
      %v2673 = vadd.f32 %v2469, %v1873
      %v2674 = vadd.f32 %v2469, %v1874
      %v2675 = vadd.f32 %v2469, %v1875
      %v2676 = vadd.f32 %v2469, %v1876
      %v2677 = vadd.f32 %v2474, %v1877
      %v2678 = vadd.f32 %v2474, %v1878
      %v2679 = vadd.f32 %v2474, %v1879
      %v2680 = vadd.f32 %v2474, %v1880
      %v2681 = vadd.f32 %v2474, %v1881
      %v2682 = vadd.f32 %v2474, %v1882
      %v2683 = vadd.f32 %v2474, %v1883
      %v2684 = vadd.f32 %v2479, %v1884
      %v2685 = vadd.f32 %v2479, %v1885
      %v2686 = vadd.f32 %v2479, %v1886
      %v2687 = vadd.f32 %v2479, %v1887
      %v2688 = vadd.f32 %v2479, %v1888
      %v2689 = vadd.f32 %v2479, %v1889
      %v2690 = vadd.f32 %v2479, %v1890
      %v2691 = vadd.f32 %v2484, %v1891
      %v2692 = vadd.f32 %v2484, %v1892
      %v2693 = vadd.f32 %v2484, %v1893
      %v2694 = vadd.f32 %v2484, %v1894
      %v2695 = vadd.f32 %v2484, %v1895
      %v2696 = vadd.f32 %v2484, %v1896
      %v2697 = vadd.f32 %v2484, %v1897
      %v2698 = vadd.f32 %v2489, %v1898
      %v2699 = vadd.f32 %v2489, %v1899
      %v2700 = vadd.f32 %v2489, %v1900
      %v2701 = vadd.f32 %v2489, %v1901
      %v2702 = vadd.f32 %v2489, %v1902
      %v2703 = vadd.f32 %v2489, %v1903
      %v2704 = vadd.f32 %v2489, %v1904
      %v2705 = vadd.f32 %v2494, %v1905
      %v2706 = vadd.f32 %v2494, %v1906
      %v2707 = vadd.f32 %v2494, %v1907
      %v2708 = vadd.f32 %v2494, %v1908
      %v2709 = vadd.f32 %v2494, %v1909
      %v2710 = vadd.f32 %v2494, %v1910
      %v2711 = vadd.f32 %v2494, %v1911
      %v2712 = vadd.f32 %v2499, %v1912
      %v2713 = vadd.f32 %v2499, %v1913
      %v2714 = vadd.f32 %v2499, %v1914
      %v2715 = vadd.f32 %v2499, %v1915
      %v2716 = vadd.f32 %v2499, %v1916
      %v2717 = vadd.f32 %v2499, %v1917
      %v2718 = vadd.f32 %v2499, %v1918
      %v2719 = vadd.f32 %v2504, %v1919
      %v2720 = vadd.f32 %v2504, %v1920
      %v2721 = vadd.f32 %v2504, %v1921
      %v2722 = vadd.f32 %v2504, %v1922
      %v2723 = vadd.f32 %v2504, %v1923
      %v2724 = vadd.f32 %v2504, %v1924
      %v2725 = vadd.f32 %v2504, %v1925
      %v2726 = vadd.f32 %v2509, %v1926
      %v2727 = vadd.f32 %v2509, %v1927
      %v2728 = vadd.f32 %v2509, %v1928
      %v2729 = vadd.f32 %v2509, %v1929
      %v2730 = vadd.f32 %v2509, %v1930
      %v2731 = vadd.f32 %v2509, %v1931
      %v2732 = vadd.f32 %v2509, %v1932
      %v2733 = vadd.f32 %v2514, %v1933
      %v2734 = vadd.f32 %v2514, %v1934
      %v2735 = vadd.f32 %v2514, %v1935
      %v2736 = vadd.f32 %v2514, %v1936
      %v2737 = vadd.f32 %v2514, %v1937
      %v2738 = vadd.f32 %v2514, %v1938
      %v2739 = vadd.f32 %v2514, %v1939
      %v2740 = vadd.f32 %v2100, %v2516
      %v2741 = vadd.f32 %v2101, %v2517
      %v2742 = vadd.f32 %v2102, %v2518
      %v2743 = vadd.f32 %v2103, %v2519
      %v2744 = vadd.f32 %v2104, %v2520
      %v2745 = vadd.f32 %v2105, %v2521
      %v2746 = vadd.f32 %v2106, %v2522
      %v2747 = vadd.f32 %v2107, %v2523
      %v2748 = vadd.f32 %v2108, %v2524
      %v2749 = vadd.f32 %v2109, %v2525
      %v2750 = vadd.f32 %v2110, %v2526
      %v2751 = vadd.f32 %v2111, %v2527
      %v2752 = vadd.f32 %v2112, %v2528
      %v2753 = vadd.f32 %v2113, %v2529
      %v2754 = vadd.f32 %v2114, %v2530
      %v2755 = vadd.f32 %v2115, %v2531
      %v2756 = vadd.f32 %v2116, %v2532
      %v2757 = vadd.f32 %v2117, %v2533
      %v2758 = vadd.f32 %v2118, %v2534
      %v2759 = vadd.f32 %v2119, %v2535
      %v2760 = vadd.f32 %v2120, %v2536
      %v2761 = vadd.f32 %v2121, %v2537
      %v2762 = vadd.f32 %v2122, %v2538
      %v2763 = vadd.f32 %v2123, %v2539
      %v2764 = vadd.f32 %v2124, %v2540
      %v2765 = vadd.f32 %v2125, %v2541
      %v2766 = vadd.f32 %v2126, %v2542
      %v2767 = vadd.f32 %v2127, %v2543
      %v2768 = vadd.f32 %v2128, %v2544
      %v2769 = vadd.f32 %v2129, %v2545
      %v2770 = vadd.f32 %v2130, %v2546
      %v2771 = vadd.f32 %v2131, %v2547
      %v2772 = vadd.f32 %v2132, %v2548
      %v2773 = vadd.f32 %v2133, %v2549
      %v2774 = vadd.f32 %v2134, %v2550
      %v2775 = vadd.f32 %v2135, %v2551
      %v2776 = vadd.f32 %v2136, %v2552
      %v2777 = vadd.f32 %v2137, %v2553
      %v2778 = vadd.f32 %v2138, %v2554
      %v2779 = vadd.f32 %v2139, %v2555
      %v2780 = vadd.f32 %v2140, %v2556
      %v2781 = vadd.f32 %v2141, %v2557
      %v2782 = vadd.f32 %v2142, %v2558
      %v2783 = vadd.f32 %v2143, %v2559
      %v2784 = vadd.f32 %v2144, %v2560
      %v2785 = vadd.f32 %v2145, %v2561
      %v2786 = vadd.f32 %v2146, %v2562
      %v2787 = vadd.f32 %v2147, %v2563
      %v2788 = vadd.f32 %v2148, %v2564
      %v2789 = vadd.f32 %v2149, %v2565
      %v2790 = vadd.f32 %v2150, %v2566
      %v2791 = vadd.f32 %v2151, %v2567
      %v2792 = vadd.f32 %v2152, %v2568
      %v2793 = vadd.f32 %v2153, %v2569
      %v2794 = vadd.f32 %v2154, %v2570
      %v2795 = vadd.f32 %v2155, %v2571
      %v2796 = vadd.f32 %v2156, %v2572
      %v2797 = vadd.f32 %v2157, %v2573
      %v2798 = vadd.f32 %v2158, %v2574
      %v2799 = vadd.f32 %v2159, %v2575
      %v2800 = vadd.f32 %v2160, %v2576
      %v2801 = vadd.f32 %v2161, %v2577
      %v2802 = vadd.f32 %v2162, %v2578
      %v2803 = vadd.f32 %v2163, %v2579
      %v2804 = vadd.f32 %v2164, %v2580
      %v2805 = vadd.f32 %v2165, %v2581
      %v2806 = vadd.f32 %v2166, %v2582
      %v2807 = vadd.f32 %v2167, %v2583
      %v2808 = vadd.f32 %v2168, %v2584
      %v2809 = vadd.f32 %v2169, %v2585
      %v2810 = vadd.f32 %v2170, %v2586
      %v2811 = vadd.f32 %v2171, %v2587
      %v2812 = vadd.f32 %v2172, %v2588
      %v2813 = vadd.f32 %v2173, %v2589
      %v2814 = vadd.f32 %v2174, %v2590
      %v2815 = vadd.f32 %v2175, %v2591
      %v2816 = vadd.f32 %v2176, %v2592
      %v2817 = vadd.f32 %v2177, %v2593
      %v2818 = vadd.f32 %v2178, %v2594
      %v2819 = vadd.f32 %v2179, %v2595
      %v2820 = vadd.f32 %v2180, %v2596
      %v2821 = vadd.f32 %v2181, %v2597
      %v2822 = vadd.f32 %v2182, %v2598
      %v2823 = vadd.f32 %v2183, %v2599
      %v2824 = vadd.f32 %v2184, %v2600
      %v2825 = vadd.f32 %v2185, %v2601
      %v2826 = vadd.f32 %v2186, %v2602
      %v2827 = vadd.f32 %v2187, %v2603
      %v2828 = vadd.f32 %v2188, %v2604
      %v2829 = vadd.f32 %v2189, %v2605
      %v2830 = vadd.f32 %v2190, %v2606
      %v2831 = vadd.f32 %v2191, %v2607
      %v2832 = vadd.f32 %v2192, %v2608
      %v2833 = vadd.f32 %v2193, %v2609
      %v2834 = vadd.f32 %v2194, %v2610
      %v2835 = vadd.f32 %v2195, %v2611
      %v2836 = vadd.f32 %v2196, %v2612
      %v2837 = vadd.f32 %v2197, %v2613
      %v2838 = vadd.f32 %v2198, %v2614
      %v2839 = vadd.f32 %v2199, %v2615
      %v2840 = vadd.f32 %v2200, %v2616
      %v2841 = vadd.f32 %v2201, %v2617
      %v2842 = vadd.f32 %v2202, %v2618
      %v2843 = vadd.f32 %v2203, %v2619
      %v2844 = vadd.f32 %v2204, %v2620
      %v2845 = vadd.f32 %v2205, %v2621
      %v2846 = vadd.f32 %v2206, %v2622
      %v2847 = vadd.f32 %v2207, %v2623
      %v2848 = vadd.f32 %v2208, %v2624
      %v2849 = vadd.f32 %v2209, %v2625
      %v2850 = vadd.f32 %v2210, %v2626
      %v2851 = vadd.f32 %v2211, %v2627
      %v2852 = vadd.f32 %v2212, %v2628
      %v2853 = vadd.f32 %v2213, %v2629
      %v2854 = vadd.f32 %v2214, %v2630
      %v2855 = vadd.f32 %v2215, %v2631
      %v2856 = vadd.f32 %v2216, %v2632
      %v2857 = vadd.f32 %v2217, %v2633
      %v2858 = vadd.f32 %v2218, %v2634
      %v2859 = vadd.f32 %v2219, %v2635
      %v2860 = vadd.f32 %v2220, %v2636
      %v2861 = vadd.f32 %v2221, %v2637
      %v2862 = vadd.f32 %v2222, %v2638
      %v2863 = vadd.f32 %v2223, %v2639
      %v2864 = vadd.f32 %v2224, %v2640
      %v2865 = vadd.f32 %v2225, %v2641
      %v2866 = vadd.f32 %v2226, %v2642
      %v2867 = vadd.f32 %v2227, %v2643
      %v2868 = vadd.f32 %v2228, %v2644
      %v2869 = vadd.f32 %v2229, %v2645
      %v2870 = vadd.f32 %v2230, %v2646
      %v2871 = vadd.f32 %v2231, %v2647
      %v2872 = vadd.f32 %v2232, %v2648
      %v2873 = vadd.f32 %v2233, %v2649
      %v2874 = vadd.f32 %v2234, %v2650
      %v2875 = vadd.f32 %v2235, %v2651
      %v2876 = vadd.f32 %v2236, %v2652
      %v2877 = vadd.f32 %v2237, %v2653
      %v2878 = vadd.f32 %v2238, %v2654
      %v2879 = vadd.f32 %v2239, %v2655
      %v2880 = vadd.f32 %v2240, %v2656
      %v2881 = vadd.f32 %v2241, %v2657
      %v2882 = vadd.f32 %v2242, %v2658
      %v2883 = vadd.f32 %v2243, %v2659
      %v2884 = vadd.f32 %v2244, %v2660
      %v2885 = vadd.f32 %v2245, %v2661
      %v2886 = vadd.f32 %v2246, %v2662
      %v2887 = vadd.f32 %v2247, %v2663
      %v2888 = vadd.f32 %v2248, %v2664
      %v2889 = vadd.f32 %v2249, %v2665
      %v2890 = vadd.f32 %v2250, %v2666
      %v2891 = vadd.f32 %v2251, %v2667
      %v2892 = vadd.f32 %v2252, %v2668
      %v2893 = vadd.f32 %v2253, %v2669
      %v2894 = vadd.f32 %v2254, %v2670
      %v2895 = vadd.f32 %v2255, %v2671
      %v2896 = vadd.f32 %v2256, %v2672
      %v2897 = vadd.f32 %v2257, %v2673
      %v2898 = vadd.f32 %v2258, %v2674
      %v2899 = vadd.f32 %v2259, %v2675
      %v2900 = vadd.f32 %v2260, %v2676
      %v2901 = vadd.f32 %v2261, %v2677
      %v2902 = vadd.f32 %v2262, %v2678
      %v2903 = vadd.f32 %v2263, %v2679
      %v2904 = vadd.f32 %v2264, %v2680
      %v2905 = vadd.f32 %v2265, %v2681
      %v2906 = vadd.f32 %v2266, %v2682
      %v2907 = vadd.f32 %v2267, %v2683
      %v2908 = vadd.f32 %v2268, %v2684
      %v2909 = vadd.f32 %v2269, %v2685
      %v2910 = vadd.f32 %v2270, %v2686
      %v2911 = vadd.f32 %v2271, %v2687
      %v2912 = vadd.f32 %v2272, %v2688
      %v2913 = vadd.f32 %v2273, %v2689
      %v2914 = vadd.f32 %v2274, %v2690
      %v2915 = vadd.f32 %v2275, %v2691
      %v2916 = vadd.f32 %v2276, %v2692
      %v2917 = vadd.f32 %v2277, %v2693
      %v2918 = vadd.f32 %v2278, %v2694
      %v2919 = vadd.f32 %v2279, %v2695
      %v2920 = vadd.f32 %v2280, %v2696
      %v2921 = vadd.f32 %v2281, %v2697
      %v2922 = vadd.f32 %v2282, %v2698
      %v2923 = vadd.f32 %v2283, %v2699
      %v2924 = vadd.f32 %v2284, %v2700
      %v2925 = vadd.f32 %v2285, %v2701
      %v2926 = vadd.f32 %v2286, %v2702
      %v2927 = vadd.f32 %v2287, %v2703
      %v2928 = vadd.f32 %v2288, %v2704
      %v2929 = vadd.f32 %v2289, %v2705
      %v2930 = vadd.f32 %v2290, %v2706
      %v2931 = vadd.f32 %v2291, %v2707
      %v2932 = vadd.f32 %v2292, %v2708
      %v2933 = vadd.f32 %v2293, %v2709
      %v2934 = vadd.f32 %v2294, %v2710
      %v2935 = vadd.f32 %v2295, %v2711
      %v2936 = vadd.f32 %v2296, %v2712
      %v2937 = vadd.f32 %v2297, %v2713
      %v2938 = vadd.f32 %v2298, %v2714
      %v2939 = vadd.f32 %v2299, %v2715
      %v2940 = vadd.f32 %v2300, %v2716
      %v2941 = vadd.f32 %v2301, %v2717
      %v2942 = vadd.f32 %v2302, %v2718
      %v2943 = vadd.f32 %v2303, %v2719
      %v2944 = vadd.f32 %v2304, %v2720
      %v2945 = vadd.f32 %v2305, %v2721
      %v2946 = vadd.f32 %v2306, %v2722
      %v2947 = vadd.f32 %v2307, %v2723
      %v2948 = vadd.f32 %v2308, %v2724
      %v2949 = vadd.f32 %v2309, %v2725
      %v2950 = vadd.f32 %v2310, %v2726
      %v2951 = vadd.f32 %v2311, %v2727
      %v2952 = vadd.f32 %v2312, %v2728
      %v2953 = vadd.f32 %v2313, %v2729
      %v2954 = vadd.f32 %v2314, %v2730
      %v2955 = vadd.f32 %v2315, %v2731
      %v2956 = vadd.f32 %v2316, %v2732
      %v2957 = vadd.f32 %v2317, %v2733
      %v2958 = vadd.f32 %v2318, %v2734
      %v2959 = vadd.f32 %v2319, %v2735
      %v2960 = vadd.f32 %v2320, %v2736
      %v2961 = vadd.f32 %v2321, %v2737
      %v2962 = vadd.f32 %v2322, %v2738
      %v2963 = vadd.f32 %v2323, %v2739
      %2964 = vst [vmem:[%s273] sm:$0xff] %v2740
      %2965 = vst [vmem:[%s273 + $0x8] sm:$0xff] %v2741
      %2966 = vst [vmem:[%s273 + $0x10] sm:$0xff] %v2742
      %2967 = vst [vmem:[%s273 + $0x18] sm:$0xff] %v2743
      %2968 = vst [vmem:[%s273 + $0x20] sm:$0xff] %v2744
      %2969 = vst [vmem:[%s273 + $0x28] sm:$0xff] %v2745
      %2970 = vst.msk [vmem:[%s273 + $0x30] sm:$0xff] %vm504, %v2746
      %2971 = vst [vmem:[%s273 + $0x38] sm:$0xff] %v2747
      %2972 = vst [vmem:[%s273 + $0x40] sm:$0xff] %v2748
      %2973 = vst [vmem:[%s273 + $0x48] sm:$0xff] %v2749
      %2974 = vst [vmem:[%s273 + $0x50] sm:$0xff] %v2750
      %2975 = vst [vmem:[%s273 + $0x58] sm:$0xff] %v2751
      %2976 = vst [vmem:[%s273 + $0x60] sm:$0xff] %v2752
      %2977 = vst.msk [vmem:[%s273 + $0x68] sm:$0xff] %vm504, %v2753
      %2978 = vst [vmem:[%s273 + $0x70] sm:$0xff] %v2754
      %2979 = vst [vmem:[%s273 + $0x78] sm:$0xff] %v2755
      %2980 = vst [vmem:[%s273 + $0x80] sm:$0xff] %v2756
      %2981 = vst [vmem:[%s273 + $0x88] sm:$0xff] %v2757
      %2982 = vst [vmem:[%s273 + $0x90] sm:$0xff] %v2758
      %2983 = vst [vmem:[%s273 + $0x98] sm:$0xff] %v2759
      %2984 = vst.msk [vmem:[%s273 + $0xa0] sm:$0xff] %vm504, %v2760
      %2985 = vst [vmem:[%s273 + $0xa8] sm:$0xff] %v2761
      %2986 = vst [vmem:[%s273 + $0xb0] sm:$0xff] %v2762
      %2987 = vst [vmem:[%s273 + $0xb8] sm:$0xff] %v2763
      %2988 = vst [vmem:[%s273 + $0xc0] sm:$0xff] %v2764
      %2989 = vst [vmem:[%s273 + $0xc8] sm:$0xff] %v2765
      %2990 = vst [vmem:[%s273 + $0xd0] sm:$0xff] %v2766
      %2991 = vst.msk [vmem:[%s273 + $0xd8] sm:$0xff] %vm504, %v2767
      %2992 = vst [vmem:[%s273 + $0xe0] sm:$0xff] %v2768
      %2993 = vst [vmem:[%s273 + $0xe8] sm:$0xff] %v2769
      %2994 = vst [vmem:[%s273 + $0xf0] sm:$0xff] %v2770
      %2995 = vst [vmem:[%s273 + $0xf8] sm:$0xff] %v2771
      %2996 = vst [vmem:[%s273 + $0x100] sm:$0xff] %v2772
      %2997 = vst [vmem:[%s273 + $0x108] sm:$0xff] %v2773
      %2998 = vst.msk [vmem:[%s273 + $0x110] sm:$0xff] %vm504, %v2774
      %2999 = vst [vmem:[%s273 + $0x118] sm:$0xff] %v2775
      %3000 = vst [vmem:[%s273 + $0x120] sm:$0xff] %v2776
      %3001 = vst [vmem:[%s273 + $0x128] sm:$0xff] %v2777
      %3002 = vst [vmem:[%s273 + $0x130] sm:$0xff] %v2778
      %3003 = vst [vmem:[%s273 + $0x138] sm:$0xff] %v2779
      %3004 = vst [vmem:[%s273 + $0x140] sm:$0xff] %v2780
      %3005 = vst.msk [vmem:[%s273 + $0x148] sm:$0xff] %vm504, %v2781
      %3006 = vst [vmem:[%s273 + $0x150] sm:$0xff] %v2782
      %3007 = vst [vmem:[%s273 + $0x158] sm:$0xff] %v2783
      %3008 = vst [vmem:[%s273 + $0x160] sm:$0xff] %v2784
      %3009 = vst [vmem:[%s273 + $0x168] sm:$0xff] %v2785
      %3010 = vst [vmem:[%s273 + $0x170] sm:$0xff] %v2786
      %3011 = vst [vmem:[%s273 + $0x178] sm:$0xff] %v2787
      %3012 = vst.msk [vmem:[%s273 + $0x180] sm:$0xff] %vm504, %v2788
      %3013 = vst [vmem:[%s273 + $0x188] sm:$0xff] %v2789
      %3014 = vst [vmem:[%s273 + $0x190] sm:$0xff] %v2790
      %3015 = vst [vmem:[%s273 + $0x198] sm:$0xff] %v2791
      %3016 = vst [vmem:[%s273 + $0x1a0] sm:$0xff] %v2792
      %3017 = vst [vmem:[%s273 + $0x1a8] sm:$0xff] %v2793
      %3018 = vst [vmem:[%s273 + $0x1b0] sm:$0xff] %v2794
      %3019 = vst.msk [vmem:[%s273 + $0x1b8] sm:$0xff] %vm504, %v2795
      %3020 = vst [vmem:[%s273 + $0x1c0] sm:$0xff] %v2796
      %3021 = vst [vmem:[%s273 + $0x1c8] sm:$0xff] %v2797
      %3022 = vst [vmem:[%s273 + $0x1d0] sm:$0xff] %v2798
      %3023 = vst [vmem:[%s273 + $0x1d8] sm:$0xff] %v2799
      %3024 = vst [vmem:[%s273 + $0x1e0] sm:$0xff] %v2800
      %3025 = vst [vmem:[%s273 + $0x1e8] sm:$0xff] %v2801
      %3026 = vst.msk [vmem:[%s273 + $0x1f0] sm:$0xff] %vm504, %v2802
      %3027 = vst [vmem:[%s273 + $0x1f8] sm:$0xff] %v2803
      %3028 = vst [vmem:[%s273 + $0x200] sm:$0xff] %v2804
      %3029 = vst [vmem:[%s273 + $0x208] sm:$0xff] %v2805
      %3030 = vst [vmem:[%s273 + $0x210] sm:$0xff] %v2806
      %3031 = vst [vmem:[%s273 + $0x218] sm:$0xff] %v2807
      %3032 = vst [vmem:[%s273 + $0x220] sm:$0xff] %v2808
      %3033 = vst.msk [vmem:[%s273 + $0x228] sm:$0xff] %vm504, %v2809
      %3034 = vst [vmem:[%s273 + $0x230] sm:$0xff] %v2810
      %3035 = vst [vmem:[%s273 + $0x238] sm:$0xff] %v2811
      %3036 = vst [vmem:[%s273 + $0x240] sm:$0xff] %v2812
      %3037 = vst [vmem:[%s273 + $0x248] sm:$0xff] %v2813
      %3038 = vst [vmem:[%s273 + $0x250] sm:$0xff] %v2814
      %3039 = vst [vmem:[%s273 + $0x258] sm:$0xff] %v2815
      %3040 = vst.msk [vmem:[%s273 + $0x260] sm:$0xff] %vm504, %v2816
      %3041 = vst [vmem:[%s273 + $0x268] sm:$0xff] %v2817
      %3042 = vst [vmem:[%s273 + $0x270] sm:$0xff] %v2818
      %3043 = vst [vmem:[%s273 + $0x278] sm:$0xff] %v2819
      %3044 = vst [vmem:[%s273 + $0x280] sm:$0xff] %v2820
      %3045 = vst [vmem:[%s273 + $0x288] sm:$0xff] %v2821
      %3046 = vst [vmem:[%s273 + $0x290] sm:$0xff] %v2822
      %3047 = vst.msk [vmem:[%s273 + $0x298] sm:$0xff] %vm504, %v2823
      %3048 = vst [vmem:[%s273 + $0x2a0] sm:$0xff] %v2824
      %3049 = vst [vmem:[%s273 + $0x2a8] sm:$0xff] %v2825
      %3050 = vst [vmem:[%s273 + $0x2b0] sm:$0xff] %v2826
      %3051 = vst [vmem:[%s273 + $0x2b8] sm:$0xff] %v2827
      %3052 = vst [vmem:[%s273 + $0x2c0] sm:$0xff] %v2828
      %3053 = vst [vmem:[%s273 + $0x2c8] sm:$0xff] %v2829
      %3054 = vst.msk [vmem:[%s273 + $0x2d0] sm:$0xff] %vm504, %v2830
      %3055 = vst [vmem:[%s273 + $0x2d8] sm:$0xff] %v2831
      %3056 = vst [vmem:[%s273 + $0x2e0] sm:$0xff] %v2832
      %3057 = vst [vmem:[%s273 + $0x2e8] sm:$0xff] %v2833
      %3058 = vst [vmem:[%s273 + $0x2f0] sm:$0xff] %v2834
      %3059 = vst [vmem:[%s273 + $0x2f8] sm:$0xff] %v2835
      %3060 = vst [vmem:[%s273 + $0x300] sm:$0xff] %v2836
      %3061 = vst.msk [vmem:[%s273 + $0x308] sm:$0xff] %vm504, %v2837
      %3062 = vst [vmem:[%s273 + $0x310] sm:$0xff] %v2838
      %3063 = vst [vmem:[%s273 + $0x318] sm:$0xff] %v2839
      %3064 = vst [vmem:[%s273 + $0x320] sm:$0xff] %v2840
      %3065 = vst [vmem:[%s273 + $0x328] sm:$0xff] %v2841
      %3066 = vst [vmem:[%s273 + $0x330] sm:$0xff] %v2842
      %3067 = vst [vmem:[%s273 + $0x338] sm:$0xff] %v2843
      %3068 = vst.msk [vmem:[%s273 + $0x340] sm:$0xff] %vm504, %v2844
      %3069 = vst [vmem:[%s273 + $0x348] sm:$0xff] %v2845
      %3070 = vst [vmem:[%s273 + $0x350] sm:$0xff] %v2846
      %3071 = vst [vmem:[%s273 + $0x358] sm:$0xff] %v2847
      %3072 = vst [vmem:[%s273 + $0x360] sm:$0xff] %v2848
      %3073 = vst [vmem:[%s273 + $0x368] sm:$0xff] %v2849
      %3074 = vst [vmem:[%s273 + $0x370] sm:$0xff] %v2850
      %3075 = vst.msk [vmem:[%s273 + $0x378] sm:$0xff] %vm504, %v2851
      %3076 = vst [vmem:[%s273 + $0x380] sm:$0xff] %v2852
      %3077 = vst [vmem:[%s273 + $0x388] sm:$0xff] %v2853
      %3078 = vst [vmem:[%s273 + $0x390] sm:$0xff] %v2854
      %3079 = vst [vmem:[%s273 + $0x398] sm:$0xff] %v2855
      %3080 = vst [vmem:[%s273 + $0x3a0] sm:$0xff] %v2856
      %3081 = vst [vmem:[%s273 + $0x3a8] sm:$0xff] %v2857
      %3082 = vst.msk [vmem:[%s273 + $0x3b0] sm:$0xff] %vm504, %v2858
      %3083 = vst [vmem:[%s273 + $0x3b8] sm:$0xff] %v2859
      %3084 = vst [vmem:[%s273 + $0x3c0] sm:$0xff] %v2860
      %3085 = vst [vmem:[%s273 + $0x3c8] sm:$0xff] %v2861
      %3086 = vst [vmem:[%s273 + $0x3d0] sm:$0xff] %v2862
      %3087 = vst [vmem:[%s273 + $0x3d8] sm:$0xff] %v2863
      %3088 = vst [vmem:[%s273 + $0x3e0] sm:$0xff] %v2864
      %3089 = vst.msk [vmem:[%s273 + $0x3e8] sm:$0xff] %vm504, %v2865
      %3090 = vst [vmem:[%s273 + $0x3f0] sm:$0xff] %v2866
      %3091 = vst [vmem:[%s273 + $0x3f8] sm:$0xff] %v2867
      %3092 = vst [vmem:[%s273 + $0x400] sm:$0xff] %v2868
      %3093 = vst [vmem:[%s273 + $0x408] sm:$0xff] %v2869
      %3094 = vst [vmem:[%s273 + $0x410] sm:$0xff] %v2870
      %3095 = vst [vmem:[%s273 + $0x418] sm:$0xff] %v2871
      %3096 = vst.msk [vmem:[%s273 + $0x420] sm:$0xff] %vm504, %v2872
      %3097 = vst [vmem:[%s273 + $0x428] sm:$0xff] %v2873
      %3098 = vst [vmem:[%s273 + $0x430] sm:$0xff] %v2874
      %3099 = vst [vmem:[%s273 + $0x438] sm:$0xff] %v2875
      %3100 = vst [vmem:[%s273 + $0x440] sm:$0xff] %v2876
      %3101 = vst [vmem:[%s273 + $0x448] sm:$0xff] %v2877
      %3102 = vst [vmem:[%s273 + $0x450] sm:$0xff] %v2878
      %3103 = vst.msk [vmem:[%s273 + $0x458] sm:$0xff] %vm504, %v2879
      %3104 = vst [vmem:[%s273 + $0x460] sm:$0xff] %v2880
      %3105 = vst [vmem:[%s273 + $0x468] sm:$0xff] %v2881
      %3106 = vst [vmem:[%s273 + $0x470] sm:$0xff] %v2882
      %3107 = vst [vmem:[%s273 + $0x478] sm:$0xff] %v2883
      %3108 = vst [vmem:[%s273 + $0x480] sm:$0xff] %v2884
      %3109 = vst [vmem:[%s273 + $0x488] sm:$0xff] %v2885
      %3110 = vst.msk [vmem:[%s273 + $0x490] sm:$0xff] %vm504, %v2886
      %3111 = vst [vmem:[%s273 + $0x498] sm:$0xff] %v2887
      %3112 = vst [vmem:[%s273 + $0x4a0] sm:$0xff] %v2888
      %3113 = vst [vmem:[%s273 + $0x4a8] sm:$0xff] %v2889
      %3114 = vst [vmem:[%s273 + $0x4b0] sm:$0xff] %v2890
      %3115 = vst [vmem:[%s273 + $0x4b8] sm:$0xff] %v2891
      %3116 = vst [vmem:[%s273 + $0x4c0] sm:$0xff] %v2892
      %3117 = vst.msk [vmem:[%s273 + $0x4c8] sm:$0xff] %vm504, %v2893
      %3118 = vst [vmem:[%s273 + $0x4d0] sm:$0xff] %v2894
      %3119 = vst [vmem:[%s273 + $0x4d8] sm:$0xff] %v2895
      %3120 = vst [vmem:[%s273 + $0x4e0] sm:$0xff] %v2896
      %3121 = vst [vmem:[%s273 + $0x4e8] sm:$0xff] %v2897
      %3122 = vst [vmem:[%s273 + $0x4f0] sm:$0xff] %v2898
      %3123 = vst [vmem:[%s273 + $0x4f8] sm:$0xff] %v2899
      %3124 = vst.msk [vmem:[%s273 + $0x500] sm:$0xff] %vm504, %v2900
      %3125 = vst [vmem:[%s273 + $0x508] sm:$0xff] %v2901
      %3126 = vst [vmem:[%s273 + $0x510] sm:$0xff] %v2902
      %3127 = vst [vmem:[%s273 + $0x518] sm:$0xff] %v2903
      %3128 = vst [vmem:[%s273 + $0x520] sm:$0xff] %v2904
      %3129 = vst [vmem:[%s273 + $0x528] sm:$0xff] %v2905
      %3130 = vst [vmem:[%s273 + $0x530] sm:$0xff] %v2906
      %3131 = vst.msk [vmem:[%s273 + $0x538] sm:$0xff] %vm504, %v2907
      %3132 = vst [vmem:[%s273 + $0x540] sm:$0xff] %v2908
      %3133 = vst [vmem:[%s273 + $0x548] sm:$0xff] %v2909
      %3134 = vst [vmem:[%s273 + $0x550] sm:$0xff] %v2910
      %3135 = vst [vmem:[%s273 + $0x558] sm:$0xff] %v2911
      %3136 = vst [vmem:[%s273 + $0x560] sm:$0xff] %v2912
      %3137 = vst [vmem:[%s273 + $0x568] sm:$0xff] %v2913
      %3138 = vst.msk [vmem:[%s273 + $0x570] sm:$0xff] %vm504, %v2914
      %3139 = vst [vmem:[%s273 + $0x578] sm:$0xff] %v2915
      %3140 = vst [vmem:[%s273 + $0x580] sm:$0xff] %v2916
      %3141 = vst [vmem:[%s273 + $0x588] sm:$0xff] %v2917
      %3142 = vst [vmem:[%s273 + $0x590] sm:$0xff] %v2918
      %3143 = vst [vmem:[%s273 + $0x598] sm:$0xff] %v2919
      %3144 = vst [vmem:[%s273 + $0x5a0] sm:$0xff] %v2920
      %3145 = vst.msk [vmem:[%s273 + $0x5a8] sm:$0xff] %vm504, %v2921
      %3146 = vst [vmem:[%s273 + $0x5b0] sm:$0xff] %v2922
      %3147 = vst [vmem:[%s273 + $0x5b8] sm:$0xff] %v2923
      %3148 = vst [vmem:[%s273 + $0x5c0] sm:$0xff] %v2924
      %3149 = vst [vmem:[%s273 + $0x5c8] sm:$0xff] %v2925
      %3150 = vst [vmem:[%s273 + $0x5d0] sm:$0xff] %v2926
      %3151 = vst [vmem:[%s273 + $0x5d8] sm:$0xff] %v2927
      %3152 = vst.msk [vmem:[%s273 + $0x5e0] sm:$0xff] %vm504, %v2928
      %3153 = vst [vmem:[%s273 + $0x5e8] sm:$0xff] %v2929
      %3154 = vst [vmem:[%s273 + $0x5f0] sm:$0xff] %v2930
      %3155 = vst [vmem:[%s273 + $0x5f8] sm:$0xff] %v2931
      %3156 = vst [vmem:[%s273 + $0x600] sm:$0xff] %v2932
      %3157 = vst [vmem:[%s273 + $0x608] sm:$0xff] %v2933
      %3158 = vst [vmem:[%s273 + $0x610] sm:$0xff] %v2934
      %3159 = vst.msk [vmem:[%s273 + $0x618] sm:$0xff] %vm504, %v2935
      %3160 = vst [vmem:[%s273 + $0x620] sm:$0xff] %v2936
      %3161 = vst [vmem:[%s273 + $0x628] sm:$0xff] %v2937
      %3162 = vst [vmem:[%s273 + $0x630] sm:$0xff] %v2938
      %3163 = vst [vmem:[%s273 + $0x638] sm:$0xff] %v2939
      %3164 = vst [vmem:[%s273 + $0x640] sm:$0xff] %v2940
      %3165 = vst [vmem:[%s273 + $0x648] sm:$0xff] %v2941
      %3166 = vst.msk [vmem:[%s273 + $0x650] sm:$0xff] %vm504, %v2942
      %3167 = vst [vmem:[%s273 + $0x658] sm:$0xff] %v2943
      %3168 = vst [vmem:[%s273 + $0x660] sm:$0xff] %v2944
      %3169 = vst [vmem:[%s273 + $0x668] sm:$0xff] %v2945
      %3170 = vst [vmem:[%s273 + $0x670] sm:$0xff] %v2946
      %3171 = vst [vmem:[%s273 + $0x678] sm:$0xff] %v2947
      %3172 = vst [vmem:[%s273 + $0x680] sm:$0xff] %v2948
      %3173 = vst.msk [vmem:[%s273 + $0x688] sm:$0xff] %vm504, %v2949
      %3174 = vst [vmem:[%s273 + $0x690] sm:$0xff] %v2950
      %3175 = vst [vmem:[%s273 + $0x698] sm:$0xff] %v2951
      %3176 = vst [vmem:[%s273 + $0x6a0] sm:$0xff] %v2952
      %3177 = vst [vmem:[%s273 + $0x6a8] sm:$0xff] %v2953
      %3178 = vst [vmem:[%s273 + $0x6b0] sm:$0xff] %v2954
      %3179 = vst [vmem:[%s273 + $0x6b8] sm:$0xff] %v2955
      %3180 = vst.msk [vmem:[%s273 + $0x6c0] sm:$0xff] %vm504, %v2956
      %3181 = vst [vmem:[%s273 + $0x6c8] sm:$0xff] %v2957
      %3182 = vst [vmem:[%s273 + $0x6d0] sm:$0xff] %v2958
      %3183 = vst [vmem:[%s273 + $0x6d8] sm:$0xff] %v2959
      %3184 = vst [vmem:[%s273 + $0x6e0] sm:$0xff] %v2960
      %3185 = vst [vmem:[%s273 + $0x6e8] sm:$0xff] %v2961
      %3186 = vst [vmem:[%s273 + $0x6f0] sm:$0xff] %v2962
      %3187 = vst.msk [vmem:[%s273 + $0x6f8] sm:$0xff] %vm504, %v2963
      %s3188 = smul.u32 32, %s15
      %p3189 = scmp.lt.s32.totalorder %s3188, 127
      %s3190 = scalar_select %p3189, %s3188, 127
      %s3191 = smul.addr %s3190, 7
      %s3192 = smul.addr %s3191, 8
      %s3193 = scalar_lea.vmem %s4, %s3192
      // Predicated region
      $region37: #{batchnorm_add.1} parent=35 // pred_check
        %p3194 = pneg %p137
      $region38: #{batchnorm_add.1} parent=35 // pred_check_branch
        %3196 = sbr.rel (%p3194) target = $region40
      $region39: #{batchnorm_add.1} parent=35 // pred_region
        %s3197 = smul.u32 32, %s15
      $region40: #{batchnorm_add.1} parent=35 // pred_fallthru
        _
    $region36: #{batchnorm_add.1} parent=5 // pred_fallthru
      _
    %p3198 = scmp.le.s32.totalorder 2, %s10
    // Predicated region
    $region41: #{batchnorm_add.1} parent=5 // pred_check
      %p3199 = pneg %p3198
    $region42: #{batchnorm_add.1} parent=5 // pred_check_branch
      %3201 = sbr.rel (%p3199) target = $region44
    $region43: #{batchnorm_add.1} parent=5 // pred_region
      %s3202 = ssub.s32 %s10, 2
      // Predicated region
      $region45: #{batchnorm_add.1} parent=43 // pred_check
        %p3203 = pneg %p143
      $region46: #{batchnorm_add.1} parent=43 // pred_check_branch
        %3205 = sbr.rel (%p3203) target = $region48
      $region47: #{batchnorm_add.1} parent=43 // pred_region
        %s3206 = smul.u32 32, %s16
        %p3207 = scmp.lt.s32.totalorder %s3206, 127
        %s3208 = scalar_select %p3207, %s3206, 127
        %s3209 = smul.addr %s3208, 7
        %s3210 = smul.addr %s3209, 8
        %s3211 = scalar_lea.vmem %s4, %s3210
      $region48: #{batchnorm_add.1} parent=43 // pred_fallthru
        _
    $region44: #{batchnorm_add.1} parent=5 // pred_fallthru
      _
  $region6: #{batchnorm_add.1} parent=0 // loop_footer
    %s14 = sadd.s32 1, %s10
  $region7: #{batchnorm_add.1} parent=0 // loop_footer_branch
    %9 = sbr.rel target = $region3
  $region8: #{batchnorm_add.1} parent=0 // loop_exit
    _

</llo_original>
